<compile_context>
chip_gen: v7x
topology: tpu7x:2x2x1
jax: 0.10.0
libtpu: 0.0.40
codegen_flags: <defaults>
</compile_context>

<pallas_src>
import math

import jax
import jax.numpy as jnp
from jax.experimental import pallas as pl
from jax.experimental.pallas import tpu as pltpu


def _cbam_kernel(B, H, W, C, Cr, K):
    P = K // 2
    HP, WP = H + 2 * P, W + 2 * P
    inv_hw = 1.0 / (H * W)
    inv_c = 1.0 / C

    def kernel(x_ref, w1t_ref, w2t_ref, wsp_ref, y_ref, mpad_ref, apad_ref):
        # Zero the padded scratch once per grid step; only the interior is
        # rewritten per image, so the zero border is reused across images.
        mpad_ref[...] = jnp.zeros((HP, WP), jnp.float32)
        apad_ref[...] = jnp.zeros((HP, WP), jnp.float32)

        # Preload all 2*K*K spatial-conv weights from SMEM before the loops.
        w_max = [wsp_ref[i] for i in range(K * K)]
        w_avg = [wsp_ref[K * K + i] for i in range(K * K)]

        w1t = w1t_ref[...]                                       # (C, Cr)
        w2t = w2t_ref[...]                                       # (Cr, C)

        # ---- Channel attention: pool every image, then run the shared MLP
        #      ONCE on the stacked (2B, C) matrix (better MXU fill). ----
        rows_avg, rows_max = [], []
        for b in range(B):
            xb = x_ref[b].astype(jnp.float32)                    # (H, W, C)
            s = jnp.sum(jnp.sum(xb, axis=0), axis=0, keepdims=True)
            rows_avg.append(s * inv_hw)                          # (1, C)
            rows_max.append(jnp.max(jnp.max(xb, axis=0), axis=0, keepdims=True))
        pooled = jnp.concatenate(rows_avg + rows_max, axis=0)    # (2B, C)
        h = jnp.maximum(
            jnp.dot(pooled, w1t, preferred_element_type=jnp.float32), 0.0)
        mlp = jnp.dot(h, w2t, preferred_element_type=jnp.float32)   # (2B, C)
        chan = jax.nn.sigmoid(mlp[:B] + mlp[B:])                 # (B, C)

        # ---- Per-image: channel-scale, channel max/mean maps, unrolled 7x7
        #      SAME conv, spatial scale.  Everything stays in VMEM. ----
        for b in range(B):
            xb = x_ref[b].astype(jnp.float32)                    # (H, W, C)
            cb = chan[b:b + 1, :].reshape(1, 1, C)               # (1, 1, C)
            xc = xb * cb                                         # (H, W, C)

            maxm = jnp.max(xc, axis=2)                           # (H, W)
            avgm = jnp.sum(xc, axis=2) * inv_c                   # (H, W)

            # In-kernel SAME padding via the zero-bordered VMEM scratch.
            mpad_ref[P:P + H, P:P + W] = maxm
            apad_ref[P:P + H, P:P + W] = avgm
            mpad = mpad_ref[...]                                 # (HP, WP)
            apad = apad_ref[...]

            # Hoist the lane-axis (dx) shifts out of the 7x7 double loop:
            # K lane-shifted copies, inner loop only takes sublane slices.
            mp_cols = [mpad[:, dx:dx + W] for dx in range(K)]    # each (HP, W)
            ap_cols = [apad[:, dx:dx + W] for dx in range(K)]

            acc = jnp.zeros((H, W), jnp.float32)
            for dy in range(K):
                base = dy * K
                for dx in range(K):
                    acc = acc + w_max[base + dx] * mp_cols[dx][dy:dy + H, :]
                    acc = acc + w_avg[base + dx] * ap_cols[dx][dy:dy + H, :]

            sp = jax.nn.sigmoid(acc)                             # (H, W)
            y_ref[b] = (xc * sp.reshape(H, W, 1)).astype(y_ref.dtype)

    return kernel


def cbam_pallas(x, w1, w2, wsp, *, ratio=1, kernel_size=7, block_n=1):
    """x: (N, H, W, C) f32; w1: (C//ratio, C); w2: (C, C//ratio); wsp: (2, K, K)."""
    N, H, W, C = x.shape
    Cr = C // ratio
    K = kernel_size
    P = K // 2
    assert N % block_n == 0, "block_n must divide the batch size"

    w1t = jnp.transpose(w1).astype(jnp.float32)                  # (C, Cr)
    w2t = jnp.transpose(w2).astype(jnp.float32)                  # (Cr, C)
    wsp_flat = wsp.reshape(-1).astype(jnp.float32)               # (2*K*K,)

    return pl.pallas_call(
        _cbam_kernel(block_n, H, W, C, Cr, K),
        out_shape=jax.ShapeDtypeStruct((N, H, W, C), jnp.float32),
        grid=(N // block_n,),
        in_specs=[
            pl.BlockSpec((block_n, H, W, C), lambda n: (n, 0, 0, 0)),
            pl.BlockSpec((C, Cr), lambda n: (0, 0)),
            pl.BlockSpec((Cr, C), lambda n: (0, 0)),
            pl.BlockSpec(memory_space=pltpu.MemorySpace.SMEM),
        ],
        out_specs=pl.BlockSpec((block_n, H, W, C), lambda n: (n, 0, 0, 0)),
        scratch_shapes=[
            pltpu.VMEM((H + 2 * P, W + 2 * P), jnp.float32),
            pltpu.VMEM((H + 2 * P, W + 2 * P), jnp.float32),
        ],
        # Batch images are independent: "parallel" lets v7x shard the batch
        # axis across its two TensorCores (neutral on v5e/v6e).
        compiler_params=pltpu.CompilerParams(dimension_semantics=("parallel",)),
    )(x, w1t, w2t, wsp_flat)


def cbam_reference(x, w1, w2, wsp):
    """Pure-JAX reference mirroring the PyTorch CBAM forward (NHWC)."""
    avg = jnp.mean(x, axis=(1, 2))                               # (N, C)
    mx = jnp.max(x, axis=(1, 2))                                 # (N, C)

    def fc(v):
        return jnp.maximum(v @ w1.T, 0.0) @ w2.T

    chan = jax.nn.sigmoid(fc(avg) + fc(mx))                      # (N, C)
    xc = x * chan[:, None, None, :]

    maxm = jnp.max(xc, axis=3)
    avgm = jnp.mean(xc, axis=3)
    stacked = jnp.stack([maxm, avgm], axis=-1)                   # (N, H, W, 2)
    w_hwio = jnp.transpose(wsp, (1, 2, 0))[:, :, :, None]        # (K, K, 2, 1)
    conv = jax.lax.conv_general_dilated(
        stacked, w_hwio, window_strides=(1, 1), padding="SAME",
        dimension_numbers=("NHWC", "HWIO", "NHWC"))
    sp = jax.nn.sigmoid(conv)                                    # (N, H, W, 1)
    return xc * sp


if __name__ == "__main__":
    N, C, H, W = 2, 4, 16, 16
    ratio = 1
    Cr = C // ratio
    K = 7

    key = jax.random.PRNGKey(0)
    kx, k1, k2, k3 = jax.random.split(key, 4)

    x = jax.random.normal(kx, (N, H, W, C), dtype=jnp.float32)

    # Xavier-uniform init (matches init_cfg: Xavier / uniform for Conv2d).
    b1 = math.sqrt(6.0 / (C + Cr))
    w1 = jax.random.uniform(k1, (Cr, C), jnp.float32, -b1, b1)     # Conv2d(C, Cr, 1)
    b2 = math.sqrt(6.0 / (Cr + C))
    w2 = jax.random.uniform(k2, (C, Cr), jnp.float32, -b2, b2)     # Conv2d(Cr, C, 1)
    b3 = math.sqrt(6.0 / (2 * K * K + 1 * K * K))
    wsp = jax.random.uniform(k3, (2, K, K), jnp.float32, -b3, b3)  # Conv2d(2, 1, 7)
    # TODO(synk): wsp channel 0 multiplies the max map and channel 1 the avg map,
    # matching torch.cat([max_out, avg_out]) in the original Spatial_Channel.

    y_ref = cbam_reference(x, w1, w2, wsp)

    # block_n=1: one image per grid step, batch axis "parallel" (2 TCs on v7x).
    y1 = jax.block_until_ready(
        cbam_pallas(x, w1, w2, wsp, ratio=ratio, kernel_size=K, block_n=1))
    assert y1.shape == (N, H, W, C)
    assert bool(jnp.allclose(y1, y_ref, atol=2e-3, rtol=2e-3)), "mismatch (block_n=1)"

    # block_n=2: multiple images per grid step (amortizes per-step overhead,
    # channel MLP runs once with M = 2*B rows).
    y2 = jax.block_until_ready(
        cbam_pallas(x, w1, w2, wsp, ratio=ratio, kernel_size=K, block_n=2))
    assert bool(jnp.allclose(y2, y_ref, atol=2e-3, rtol=2e-3)), "mismatch (block_n=2)"

    print("KERNEL_OK")
</pallas_src>

<mosaic_0001>
module attributes {stable_mosaic.version = 11 : i64} {
  func.func @kernel(%arg0: i32, %arg1: memref<1x16x16x4xf32, #tpu.memory_space<vmem>>, %arg2: memref<4x4xf32, #tpu.memory_space<vmem>>, %arg3: memref<4x4xf32, #tpu.memory_space<vmem>>, %arg4: memref<98xf32, #tpu.memory_space<smem>>, %arg5: memref<1x16x16x4xf32, #tpu.memory_space<vmem>>, %arg6: memref<22x22xf32, #tpu.memory_space<vmem>>, %arg7: memref<22x22xf32, #tpu.memory_space<vmem>>) attributes {dimension_semantics = [#tpu.dimension_semantics<parallel>], iteration_bounds = array<i64: 2>, scalar_prefetch = 0 : i64, scratch_operands = 2 : i64, tpu.core_type = #tpu.core_type<tc>, window_params = [{transform_indices = @transform_0, window_bounds = array<i64: 1, 16, 16, 4>}, {pipeline_mode = #tpu.pipeline_mode<synchronous>, transform_indices = @transform_1, window_bounds = array<i64: 4, 4>}, {pipeline_mode = #tpu.pipeline_mode<synchronous>, transform_indices = @transform_2, window_bounds = array<i64: 4, 4>}, {transform_indices = @transform_3, window_bounds = array<i64: 98>}, {transform_indices = @transform_4, window_bounds = array<i64: 1, 16, 16, 4>}]} {
    %cst = arith.constant 0.000000e+00 : f32
    %0 = vector.broadcast %cst : f32 to vector<22x22xf32>
    %c0 = arith.constant 0 : index
    %c0_0 = arith.constant 0 : index
    %1 = vector.load %arg6[%c0, %c0_0] : memref<22x22xf32, #tpu.memory_space<vmem>>, vector<22x22xf32>
    tpu.vector_store %arg6[%c0, %c0_0], %0 {strides = array<i32>} : memref<22x22xf32, #tpu.memory_space<vmem>>, vector<22x22xf32>,
    %cst_1 = arith.constant 0.000000e+00 : f32
    %2 = vector.broadcast %cst_1 : f32 to vector<22x22xf32>
    %c0_2 = arith.constant 0 : index
    %c0_3 = arith.constant 0 : index
    %3 = vector.load %arg7[%c0_2, %c0_3] : memref<22x22xf32, #tpu.memory_space<vmem>>, vector<22x22xf32>
    tpu.vector_store %arg7[%c0_2, %c0_3], %2 {strides = array<i32>} : memref<22x22xf32, #tpu.memory_space<vmem>>, vector<22x22xf32>,
    %c0_4 = arith.constant 0 : index
    %4 = memref.load %arg4[%c0_4] : memref<98xf32, #tpu.memory_space<smem>>
    %c1 = arith.constant 1 : index
    %5 = memref.load %arg4[%c1] : memref<98xf32, #tpu.memory_space<smem>>
    %c2 = arith.constant 2 : index
    %6 = memref.load %arg4[%c2] : memref<98xf32, #tpu.memory_space<smem>>
    %c3 = arith.constant 3 : index
    %7 = memref.load %arg4[%c3] : memref<98xf32, #tpu.memory_space<smem>>
    %c4 = arith.constant 4 : index
    %8 = memref.load %arg4[%c4] : memref<98xf32, #tpu.memory_space<smem>>
    %c5 = arith.constant 5 : index
    %9 = memref.load %arg4[%c5] : memref<98xf32, #tpu.memory_space<smem>>
    %c6 = arith.constant 6 : index
    %10 = memref.load %arg4[%c6] : memref<98xf32, #tpu.memory_space<smem>>
    %c7 = arith.constant 7 : index
    %11 = memref.load %arg4[%c7] : memref<98xf32, #tpu.memory_space<smem>>
    %c8 = arith.constant 8 : index
    %12 = memref.load %arg4[%c8] : memref<98xf32, #tpu.memory_space<smem>>
    %c9 = arith.constant 9 : index
    %13 = memref.load %arg4[%c9] : memref<98xf32, #tpu.memory_space<smem>>
    %c10 = arith.constant 10 : index
    %14 = memref.load %arg4[%c10] : memref<98xf32, #tpu.memory_space<smem>>
    %c11 = arith.constant 11 : index
    %15 = memref.load %arg4[%c11] : memref<98xf32, #tpu.memory_space<smem>>
    %c12 = arith.constant 12 : index
    %16 = memref.load %arg4[%c12] : memref<98xf32, #tpu.memory_space<smem>>
    %c13 = arith.constant 13 : index
    %17 = memref.load %arg4[%c13] : memref<98xf32, #tpu.memory_space<smem>>
    %c14 = arith.constant 14 : index
    %18 = memref.load %arg4[%c14] : memref<98xf32, #tpu.memory_space<smem>>
    %c15 = arith.constant 15 : index
    %19 = memref.load %arg4[%c15] : memref<98xf32, #tpu.memory_space<smem>>
    %c16 = arith.constant 16 : index
    %20 = memref.load %arg4[%c16] : memref<98xf32, #tpu.memory_space<smem>>
    %c17 = arith.constant 17 : index
    %21 = memref.load %arg4[%c17] : memref<98xf32, #tpu.memory_space<smem>>
    %c18 = arith.constant 18 : index
    %22 = memref.load %arg4[%c18] : memref<98xf32, #tpu.memory_space<smem>>
    %c19 = arith.constant 19 : index
    %23 = memref.load %arg4[%c19] : memref<98xf32, #tpu.memory_space<smem>>
    %c20 = arith.constant 20 : index
    %24 = memref.load %arg4[%c20] : memref<98xf32, #tpu.memory_space<smem>>
    %c21 = arith.constant 21 : index
    %25 = memref.load %arg4[%c21] : memref<98xf32, #tpu.memory_space<smem>>
    %c22 = arith.constant 22 : index
    %26 = memref.load %arg4[%c22] : memref<98xf32, #tpu.memory_space<smem>>
    %c23 = arith.constant 23 : index
    %27 = memref.load %arg4[%c23] : memref<98xf32, #tpu.memory_space<smem>>
    %c24 = arith.constant 24 : index
    %28 = memref.load %arg4[%c24] : memref<98xf32, #tpu.memory_space<smem>>
    %c25 = arith.constant 25 : index
    %29 = memref.load %arg4[%c25] : memref<98xf32, #tpu.memory_space<smem>>
    %c26 = arith.constant 26 : index
    %30 = memref.load %arg4[%c26] : memref<98xf32, #tpu.memory_space<smem>>
    %c27 = arith.constant 27 : index
    %31 = memref.load %arg4[%c27] : memref<98xf32, #tpu.memory_space<smem>>
    %c28 = arith.constant 28 : index
    %32 = memref.load %arg4[%c28] : memref<98xf32, #tpu.memory_space<smem>>
    %c29 = arith.constant 29 : index
    %33 = memref.load %arg4[%c29] : memref<98xf32, #tpu.memory_space<smem>>
    %c30 = arith.constant 30 : index
    %34 = memref.load %arg4[%c30] : memref<98xf32, #tpu.memory_space<smem>>
    %c31 = arith.constant 31 : index
    %35 = memref.load %arg4[%c31] : memref<98xf32, #tpu.memory_space<smem>>
    %c32 = arith.constant 32 : index
    %36 = memref.load %arg4[%c32] : memref<98xf32, #tpu.memory_space<smem>>
    %c33 = arith.constant 33 : index
    %37 = memref.load %arg4[%c33] : memref<98xf32, #tpu.memory_space<smem>>
    %c34 = arith.constant 34 : index
    %38 = memref.load %arg4[%c34] : memref<98xf32, #tpu.memory_space<smem>>
    %c35 = arith.constant 35 : index
    %39 = memref.load %arg4[%c35] : memref<98xf32, #tpu.memory_space<smem>>
    %c36 = arith.constant 36 : index
    %40 = memref.load %arg4[%c36] : memref<98xf32, #tpu.memory_space<smem>>
    %c37 = arith.constant 37 : index
    %41 = memref.load %arg4[%c37] : memref<98xf32, #tpu.memory_space<smem>>
    %c38 = arith.constant 38 : index
    %42 = memref.load %arg4[%c38] : memref<98xf32, #tpu.memory_space<smem>>
    %c39 = arith.constant 39 : index
    %43 = memref.load %arg4[%c39] : memref<98xf32, #tpu.memory_space<smem>>
    %c40 = arith.constant 40 : index
    %44 = memref.load %arg4[%c40] : memref<98xf32, #tpu.memory_space<smem>>
    %c41 = arith.constant 41 : index
    %45 = memref.load %arg4[%c41] : memref<98xf32, #tpu.memory_space<smem>>
    %c42 = arith.constant 42 : index
    %46 = memref.load %arg4[%c42] : memref<98xf32, #tpu.memory_space<smem>>
    %c43 = arith.constant 43 : index
    %47 = memref.load %arg4[%c43] : memref<98xf32, #tpu.memory_space<smem>>
    %c44 = arith.constant 44 : index
    %48 = memref.load %arg4[%c44] : memref<98xf32, #tpu.memory_space<smem>>
    %c45 = arith.constant 45 : index
    %49 = memref.load %arg4[%c45] : memref<98xf32, #tpu.memory_space<smem>>
    %c46 = arith.constant 46 : index
    %50 = memref.load %arg4[%c46] : memref<98xf32, #tpu.memory_space<smem>>
    %c47 = arith.constant 47 : index
    %51 = memref.load %arg4[%c47] : memref<98xf32, #tpu.memory_space<smem>>
    %c48 = arith.constant 48 : index
    %52 = memref.load %arg4[%c48] : memref<98xf32, #tpu.memory_space<smem>>
    %c49 = arith.constant 49 : index
    %53 = memref.load %arg4[%c49] : memref<98xf32, #tpu.memory_space<smem>>
    %c50 = arith.constant 50 : index
    %54 = memref.load %arg4[%c50] : memref<98xf32, #tpu.memory_space<smem>>
    %c51 = arith.constant 51 : index
    %55 = memref.load %arg4[%c51] : memref<98xf32, #tpu.memory_space<smem>>
    %c52 = arith.constant 52 : index
    %56 = memref.load %arg4[%c52] : memref<98xf32, #tpu.memory_space<smem>>
    %c53 = arith.constant 53 : index
    %57 = memref.load %arg4[%c53] : memref<98xf32, #tpu.memory_space<smem>>
    %c54 = arith.constant 54 : index
    %58 = memref.load %arg4[%c54] : memref<98xf32, #tpu.memory_space<smem>>
    %c55 = arith.constant 55 : index
    %59 = memref.load %arg4[%c55] : memref<98xf32, #tpu.memory_space<smem>>
    %c56 = arith.constant 56 : index
    %60 = memref.load %arg4[%c56] : memref<98xf32, #tpu.memory_space<smem>>
    %c57 = arith.constant 57 : index
    %61 = memref.load %arg4[%c57] : memref<98xf32, #tpu.memory_space<smem>>
    %c58 = arith.constant 58 : index
    %62 = memref.load %arg4[%c58] : memref<98xf32, #tpu.memory_space<smem>>
    %c59 = arith.constant 59 : index
    %63 = memref.load %arg4[%c59] : memref<98xf32, #tpu.memory_space<smem>>
    %c60 = arith.constant 60 : index
    %64 = memref.load %arg4[%c60] : memref<98xf32, #tpu.memory_space<smem>>
    %c61 = arith.constant 61 : index
    %65 = memref.load %arg4[%c61] : memref<98xf32, #tpu.memory_space<smem>>
    %c62 = arith.constant 62 : index
    %66 = memref.load %arg4[%c62] : memref<98xf32, #tpu.memory_space<smem>>
    %c63 = arith.constant 63 : index
    %67 = memref.load %arg4[%c63] : memref<98xf32, #tpu.memory_space<smem>>
    %c64 = arith.constant 64 : index
    %68 = memref.load %arg4[%c64] : memref<98xf32, #tpu.memory_space<smem>>
    %c65 = arith.constant 65 : index
    %69 = memref.load %arg4[%c65] : memref<98xf32, #tpu.memory_space<smem>>
    %c66 = arith.constant 66 : index
    %70 = memref.load %arg4[%c66] : memref<98xf32, #tpu.memory_space<smem>>
    %c67 = arith.constant 67 : index
    %71 = memref.load %arg4[%c67] : memref<98xf32, #tpu.memory_space<smem>>
    %c68 = arith.constant 68 : index
    %72 = memref.load %arg4[%c68] : memref<98xf32, #tpu.memory_space<smem>>
    %c69 = arith.constant 69 : index
    %73 = memref.load %arg4[%c69] : memref<98xf32, #tpu.memory_space<smem>>
    %c70 = arith.constant 70 : index
    %74 = memref.load %arg4[%c70] : memref<98xf32, #tpu.memory_space<smem>>
    %c71 = arith.constant 71 : index
    %75 = memref.load %arg4[%c71] : memref<98xf32, #tpu.memory_space<smem>>
    %c72 = arith.constant 72 : index
    %76 = memref.load %arg4[%c72] : memref<98xf32, #tpu.memory_space<smem>>
    %c73 = arith.constant 73 : index
    %77 = memref.load %arg4[%c73] : memref<98xf32, #tpu.memory_space<smem>>
    %c74 = arith.constant 74 : index
    %78 = memref.load %arg4[%c74] : memref<98xf32, #tpu.memory_space<smem>>
    %c75 = arith.constant 75 : index
    %79 = memref.load %arg4[%c75] : memref<98xf32, #tpu.memory_space<smem>>
    %c76 = arith.constant 76 : index
    %80 = memref.load %arg4[%c76] : memref<98xf32, #tpu.memory_space<smem>>
    %c77 = arith.constant 77 : index
    %81 = memref.load %arg4[%c77] : memref<98xf32, #tpu.memory_space<smem>>
    %c78 = arith.constant 78 : index
    %82 = memref.load %arg4[%c78] : memref<98xf32, #tpu.memory_space<smem>>
    %c79 = arith.constant 79 : index
    %83 = memref.load %arg4[%c79] : memref<98xf32, #tpu.memory_space<smem>>
    %c80 = arith.constant 80 : index
    %84 = memref.load %arg4[%c80] : memref<98xf32, #tpu.memory_space<smem>>
    %c81 = arith.constant 81 : index
    %85 = memref.load %arg4[%c81] : memref<98xf32, #tpu.memory_space<smem>>
    %c82 = arith.constant 82 : index
    %86 = memref.load %arg4[%c82] : memref<98xf32, #tpu.memory_space<smem>>
    %c83 = arith.constant 83 : index
    %87 = memref.load %arg4[%c83] : memref<98xf32, #tpu.memory_space<smem>>
    %c84 = arith.constant 84 : index
    %88 = memref.load %arg4[%c84] : memref<98xf32, #tpu.memory_space<smem>>
    %c85 = arith.constant 85 : index
    %89 = memref.load %arg4[%c85] : memref<98xf32, #tpu.memory_space<smem>>
    %c86 = arith.constant 86 : index
    %90 = memref.load %arg4[%c86] : memref<98xf32, #tpu.memory_space<smem>>
    %c87 = arith.constant 87 : index
    %91 = memref.load %arg4[%c87] : memref<98xf32, #tpu.memory_space<smem>>
    %c88 = arith.constant 88 : index
    %92 = memref.load %arg4[%c88] : memref<98xf32, #tpu.memory_space<smem>>
    %c89 = arith.constant 89 : index
    %93 = memref.load %arg4[%c89] : memref<98xf32, #tpu.memory_space<smem>>
    %c90 = arith.constant 90 : index
    %94 = memref.load %arg4[%c90] : memref<98xf32, #tpu.memory_space<smem>>
    %c91 = arith.constant 91 : index
    %95 = memref.load %arg4[%c91] : memref<98xf32, #tpu.memory_space<smem>>
    %c92 = arith.constant 92 : index
    %96 = memref.load %arg4[%c92] : memref<98xf32, #tpu.memory_space<smem>>
    %c93 = arith.constant 93 : index
    %97 = memref.load %arg4[%c93] : memref<98xf32, #tpu.memory_space<smem>>
    %c94 = arith.constant 94 : index
    %98 = memref.load %arg4[%c94] : memref<98xf32, #tpu.memory_space<smem>>
    %c95 = arith.constant 95 : index
    %99 = memref.load %arg4[%c95] : memref<98xf32, #tpu.memory_space<smem>>
    %c96 = arith.constant 96 : index
    %100 = memref.load %arg4[%c96] : memref<98xf32, #tpu.memory_space<smem>>
    %c97 = arith.constant 97 : index
    %101 = memref.load %arg4[%c97] : memref<98xf32, #tpu.memory_space<smem>>
    %c0_5 = arith.constant 0 : index
    %c0_6 = arith.constant 0 : index
    %102 = vector.load %arg2[%c0_5, %c0_6] : memref<4x4xf32, #tpu.memory_space<vmem>>, vector<4x4xf32>
    %c0_7 = arith.constant 0 : index
    %c0_8 = arith.constant 0 : index
    %103 = vector.load %arg3[%c0_7, %c0_8] : memref<4x4xf32, #tpu.memory_space<vmem>>, vector<4x4xf32>
    %c0_9 = arith.constant 0 : index
    %c0_10 = arith.constant 0 : index
    %c0_11 = arith.constant 0 : index
    %c0_12 = arith.constant 0 : index
    %104 = vector.load %arg1[%c0_9, %c0_10, %c0_11, %c0_12] : memref<1x16x16x4xf32, #tpu.memory_space<vmem>>, vector<1x16x16x4xf32>
    %105 = vector.shape_cast %104 : vector<1x16x16x4xf32> to vector<16x16x4xf32>
    %cst_13 = arith.constant dense<0.000000e+00> : vector<16x4xf32>
    %106 = vector.multi_reduction <add>, %105, %cst_13 [0] : vector<16x16x4xf32> to vector<16x4xf32>
    %cst_14 = arith.constant dense<0.000000e+00> : vector<4xf32>
    %107 = vector.multi_reduction <add>, %106, %cst_14 [0] : vector<16x4xf32> to vector<4xf32>
    %108 = vector.shape_cast %107 : vector<4xf32> to vector<1x4xf32>
    %cst_15 = arith.constant 3.906250e-03 : f32
    %109 = vector.broadcast %cst_15 : f32 to vector<1x4xf32>
    %110 = arith.mulf %108, %109 : vector<1x4xf32>
    %cst_16 = arith.constant dense<0xFF800000> : vector<16x4xf32>
    %111 = vector.multi_reduction <maximumf>, %105, %cst_16 [0] : vector<16x16x4xf32> to vector<16x4xf32>
    %cst_17 = arith.constant dense<0xFF800000> : vector<4xf32>
    %112 = vector.multi_reduction <maximumf>, %111, %cst_17 [0] : vector<16x4xf32> to vector<4xf32>
    %113 = vector.shape_cast %112 : vector<4xf32> to vector<1x4xf32>
    %114 = tpu.concatenate %110, %113 in 0 : vector<1x4xf32>, vector<1x4xf32> -> vector<2x4xf32>
    %cst_18 = arith.constant dense<0.000000e+00> : vector<2x4xf32>
    %115 = tpu.matmul %114, %102, %cst_18 {dimension_numbers = #tpu.dot_dimension_numbers<[1], [0], [0], [1], [0, 0, 1, 1], [], []>} : vector<2x4xf32>, vector<4x4xf32>, vector<2x4xf32> -> vector<2x4xf32>
    %cst_19 = arith.constant 0.000000e+00 : f32
    %116 = vector.broadcast %cst_19 : f32 to vector<2x4xf32>
    %117 = arith.maximumf %115, %116 : vector<2x4xf32>
    %cst_20 = arith.constant dense<0.000000e+00> : vector<2x4xf32>
    %118 = tpu.matmul %117, %103, %cst_20 {dimension_numbers = #tpu.dot_dimension_numbers<[1], [0], [0], [1], [0, 0, 1, 1], [], []>} : vector<2x4xf32>, vector<4x4xf32>, vector<2x4xf32> -> vector<2x4xf32>
    %119 = vector.extract_strided_slice %118 {offsets = [0, 0], sizes = [1, 4], strides = [1, 1]} : vector<2x4xf32> to vector<1x4xf32>
    %120 = vector.extract_strided_slice %118 {offsets = [1, 0], sizes = [1, 4], strides = [1, 1]} : vector<2x4xf32> to vector<1x4xf32>
    %121 = arith.addf %119, %120 : vector<1x4xf32>
    %122 = arith.negf %121 : vector<1x4xf32>
    %123 = math.exp %122 : vector<1x4xf32>
    %cst_21 = arith.constant 1.000000e+00 : f32
    %124 = vector.broadcast %cst_21 : f32 to vector<1x4xf32>
    %125 = arith.addf %124, %123 : vector<1x4xf32>
    %126 = arith.divf %124, %125 : vector<1x4xf32>
    %c0_22 = arith.constant 0 : index
    %c0_23 = arith.constant 0 : index
    %c0_24 = arith.constant 0 : index
    %c0_25 = arith.constant 0 : index
    %127 = vector.load %arg1[%c0_22, %c0_23, %c0_24, %c0_25] : memref<1x16x16x4xf32, #tpu.memory_space<vmem>>, vector<1x16x16x4xf32>
    %128 = vector.shape_cast %127 : vector<1x16x16x4xf32> to vector<16x16x4xf32>
    %129 = vector.shape_cast %126 : vector<1x4xf32> to vector<1x1x4xf32>
    %130 = vector.broadcast %129 : vector<1x1x4xf32> to vector<16x16x4xf32>
    %131 = arith.mulf %128, %130 : vector<16x16x4xf32>
    %cst_26 = arith.constant dense<0xFF800000> : vector<16x16xf32>
    %132 = vector.multi_reduction <maximumf>, %131, %cst_26 [2] : vector<16x16x4xf32> to vector<16x16xf32>
    %cst_27 = arith.constant dense<0.000000e+00> : vector<16x16xf32>
    %133 = vector.multi_reduction <add>, %131, %cst_27 [2] : vector<16x16x4xf32> to vector<16x16xf32>
    %cst_28 = arith.constant 2.500000e-01 : f32
    %134 = vector.broadcast %cst_28 : f32 to vector<16x16xf32>
    %135 = arith.mulf %133, %134 : vector<16x16xf32>
    %c3_29 = arith.constant 3 : index
    %c3_30 = arith.constant 3 : index
    %136 = vector.load %arg6[%c3_29, %c3_30] : memref<22x22xf32, #tpu.memory_space<vmem>>, vector<16x16xf32>
    tpu.vector_store %arg6[%c3_29, %c3_30], %132 {strides = array<i32>} : memref<22x22xf32, #tpu.memory_space<vmem>>, vector<16x16xf32>,
    %c3_31 = arith.constant 3 : index
    %c3_32 = arith.constant 3 : index
    %137 = vector.load %arg7[%c3_31, %c3_32] : memref<22x22xf32, #tpu.memory_space<vmem>>, vector<16x16xf32>
    tpu.vector_store %arg7[%c3_31, %c3_32], %135 {strides = array<i32>} : memref<22x22xf32, #tpu.memory_space<vmem>>, vector<16x16xf32>,
    %c0_33 = arith.constant 0 : index
    %c0_34 = arith.constant 0 : index
    %138 = vector.load %arg6[%c0_33, %c0_34] : memref<22x22xf32, #tpu.memory_space<vmem>>, vector<22x22xf32>
    %c0_35 = arith.constant 0 : index
    %c0_36 = arith.constant 0 : index
    %139 = vector.load %arg7[%c0_35, %c0_36] : memref<22x22xf32, #tpu.memory_space<vmem>>, vector<22x22xf32>
    %140 = vector.extract_strided_slice %138 {offsets = [0, 0], sizes = [22, 16], strides = [1, 1]} : vector<22x22xf32> to vector<22x16xf32>
    %141 = vector.extract_strided_slice %138 {offsets = [0, 1], sizes = [22, 16], strides = [1, 1]} : vector<22x22xf32> to vector<22x16xf32>
    %142 = vector.extract_strided_slice %138 {offsets = [0, 2], sizes = [22, 16], strides = [1, 1]} : vector<22x22xf32> to vector<22x16xf32>
    %143 = vector.extract_strided_slice %138 {offsets = [0, 3], sizes = [22, 16], strides = [1, 1]} : vector<22x22xf32> to vector<22x16xf32>
    %144 = vector.extract_strided_slice %138 {offsets = [0, 4], sizes = [22, 16], strides = [1, 1]} : vector<22x22xf32> to vector<22x16xf32>
    %145 = vector.extract_strided_slice %138 {offsets = [0, 5], sizes = [22, 16], strides = [1, 1]} : vector<22x22xf32> to vector<22x16xf32>
    %146 = vector.extract_strided_slice %138 {offsets = [0, 6], sizes = [22, 16], strides = [1, 1]} : vector<22x22xf32> to vector<22x16xf32>
    %147 = vector.extract_strided_slice %139 {offsets = [0, 0], sizes = [22, 16], strides = [1, 1]} : vector<22x22xf32> to vector<22x16xf32>
    %148 = vector.extract_strided_slice %139 {offsets = [0, 1], sizes = [22, 16], strides = [1, 1]} : vector<22x22xf32> to vector<22x16xf32>
    %149 = vector.extract_strided_slice %139 {offsets = [0, 2], sizes = [22, 16], strides = [1, 1]} : vector<22x22xf32> to vector<22x16xf32>
    %150 = vector.extract_strided_slice %139 {offsets = [0, 3], sizes = [22, 16], strides = [1, 1]} : vector<22x22xf32> to vector<22x16xf32>
    %151 = vector.extract_strided_slice %139 {offsets = [0, 4], sizes = [22, 16], strides = [1, 1]} : vector<22x22xf32> to vector<22x16xf32>
    %152 = vector.extract_strided_slice %139 {offsets = [0, 5], sizes = [22, 16], strides = [1, 1]} : vector<22x22xf32> to vector<22x16xf32>
    %153 = vector.extract_strided_slice %139 {offsets = [0, 6], sizes = [22, 16], strides = [1, 1]} : vector<22x22xf32> to vector<22x16xf32>
    %cst_37 = arith.constant 0.000000e+00 : f32
    %154 = vector.broadcast %cst_37 : f32 to vector<16x16xf32>
    %155 = vector.extract_strided_slice %140 {offsets = [0, 0], sizes = [16, 16], strides = [1, 1]} : vector<22x16xf32> to vector<16x16xf32>
    %156 = vector.broadcast %4 : f32 to vector<16x16xf32>
    %157 = arith.mulf %156, %155 : vector<16x16xf32>
    %158 = arith.addf %154, %157 : vector<16x16xf32>
    %159 = vector.extract_strided_slice %147 {offsets = [0, 0], sizes = [16, 16], strides = [1, 1]} : vector<22x16xf32> to vector<16x16xf32>
    %160 = vector.broadcast %53 : f32 to vector<16x16xf32>
    %161 = arith.mulf %160, %159 : vector<16x16xf32>
    %162 = arith.addf %158, %161 : vector<16x16xf32>
    %163 = vector.extract_strided_slice %141 {offsets = [0, 0], sizes = [16, 16], strides = [1, 1]} : vector<22x16xf32> to vector<16x16xf32>
    %164 = vector.broadcast %5 : f32 to vector<16x16xf32>
    %165 = arith.mulf %164, %163 : vector<16x16xf32>
    %166 = arith.addf %162, %165 : vector<16x16xf32>
    %167 = vector.extract_strided_slice %148 {offsets = [0, 0], sizes = [16, 16], strides = [1, 1]} : vector<22x16xf32> to vector<16x16xf32>
    %168 = vector.broadcast %54 : f32 to vector<16x16xf32>
    %169 = arith.mulf %168, %167 : vector<16x16xf32>
    %170 = arith.addf %166, %169 : vector<16x16xf32>
    %171 = vector.extract_strided_slice %142 {offsets = [0, 0], sizes = [16, 16], strides = [1, 1]} : vector<22x16xf32> to vector<16x16xf32>
    %172 = vector.broadcast %6 : f32 to vector<16x16xf32>
    %173 = arith.mulf %172, %171 : vector<16x16xf32>
    %174 = arith.addf %170, %173 : vector<16x16xf32>
    %175 = vector.extract_strided_slice %149 {offsets = [0, 0], sizes = [16, 16], strides = [1, 1]} : vector<22x16xf32> to vector<16x16xf32>
    %176 = vector.broadcast %55 : f32 to vector<16x16xf32>
    %177 = arith.mulf %176, %175 : vector<16x16xf32>
    %178 = arith.addf %174, %177 : vector<16x16xf32>
    %179 = vector.extract_strided_slice %143 {offsets = [0, 0], sizes = [16, 16], strides = [1, 1]} : vector<22x16xf32> to vector<16x16xf32>
    %180 = vector.broadcast %7 : f32 to vector<16x16xf32>
    %181 = arith.mulf %180, %179 : vector<16x16xf32>
    %182 = arith.addf %178, %181 : vector<16x16xf32>
    %183 = vector.extract_strided_slice %150 {offsets = [0, 0], sizes = [16, 16], strides = [1, 1]} : vector<22x16xf32> to vector<16x16xf32>
    %184 = vector.broadcast %56 : f32 to vector<16x16xf32>
    %185 = arith.mulf %184, %183 : vector<16x16xf32>
    %186 = arith.addf %182, %185 : vector<16x16xf32>
    %187 = vector.extract_strided_slice %144 {offsets = [0, 0], sizes = [16, 16], strides = [1, 1]} : vector<22x16xf32> to vector<16x16xf32>
    %188 = vector.broadcast %8 : f32 to vector<16x16xf32>
    %189 = arith.mulf %188, %187 : vector<16x16xf32>
    %190 = arith.addf %186, %189 : vector<16x16xf32>
    %191 = vector.extract_strided_slice %151 {offsets = [0, 0], sizes = [16, 16], strides = [1, 1]} : vector<22x16xf32> to vector<16x16xf32>
    %192 = vector.broadcast %57 : f32 to vector<16x16xf32>
    %193 = arith.mulf %192, %191 : vector<16x16xf32>
    %194 = arith.addf %190, %193 : vector<16x16xf32>
    %195 = vector.extract_strided_slice %145 {offsets = [0, 0], sizes = [16, 16], strides = [1, 1]} : vector<22x16xf32> to vector<16x16xf32>
    %196 = vector.broadcast %9 : f32 to vector<16x16xf32>
    %197 = arith.mulf %196, %195 : vector<16x16xf32>
    %198 = arith.addf %194, %197 : vector<16x16xf32>
    %199 = vector.extract_strided_slice %152 {offsets = [0, 0], sizes = [16, 16], strides = [1, 1]} : vector<22x16xf32> to vector<16x16xf32>
    %200 = vector.broadcast %58 : f32 to vector<16x16xf32>
    %201 = arith.mulf %200, %199 : vector<16x16xf32>
    %202 = arith.addf %198, %201 : vector<16x16xf32>
    %203 = vector.extract_strided_slice %146 {offsets = [0, 0], sizes = [16, 16], strides = [1, 1]} : vector<22x16xf32> to vector<16x16xf32>
    %204 = vector.broadcast %10 : f32 to vector<16x16xf32>
    %205 = arith.mulf %204, %203 : vector<16x16xf32>
    %206 = arith.addf %202, %205 : vector<16x16xf32>
    %207 = vector.extract_strided_slice %153 {offsets = [0, 0], sizes = [16, 16], strides = [1, 1]} : vector<22x16xf32> to vector<16x16xf32>
    %208 = vector.broadcast %59 : f32 to vector<16x16xf32>
    %209 = arith.mulf %208, %207 : vector<16x16xf32>
    %210 = arith.addf %206, %209 : vector<16x16xf32>
    %211 = vector.extract_strided_slice %140 {offsets = [1, 0], sizes = [16, 16], strides = [1, 1]} : vector<22x16xf32> to vector<16x16xf32>
    %212 = vector.broadcast %11 : f32 to vector<16x16xf32>
    %213 = arith.mulf %212, %211 : vector<16x16xf32>
    %214 = arith.addf %210, %213 : vector<16x16xf32>
    %215 = vector.extract_strided_slice %147 {offsets = [1, 0], sizes = [16, 16], strides = [1, 1]} : vector<22x16xf32> to vector<16x16xf32>
    %216 = vector.broadcast %60 : f32 to vector<16x16xf32>
    %217 = arith.mulf %216, %215 : vector<16x16xf32>
    %218 = arith.addf %214, %217 : vector<16x16xf32>
    %219 = vector.extract_strided_slice %141 {offsets = [1, 0], sizes = [16, 16], strides = [1, 1]} : vector<22x16xf32> to vector<16x16xf32>
    %220 = vector.broadcast %12 : f32 to vector<16x16xf32>
    %221 = arith.mulf %220, %219 : vector<16x16xf32>
    %222 = arith.addf %218, %221 : vector<16x16xf32>
    %223 = vector.extract_strided_slice %148 {offsets = [1, 0], sizes = [16, 16], strides = [1, 1]} : vector<22x16xf32> to vector<16x16xf32>
    %224 = vector.broadcast %61 : f32 to vector<16x16xf32>
    %225 = arith.mulf %224, %223 : vector<16x16xf32>
    %226 = arith.addf %222, %225 : vector<16x16xf32>
    %227 = vector.extract_strided_slice %142 {offsets = [1, 0], sizes = [16, 16], strides = [1, 1]} : vector<22x16xf32> to vector<16x16xf32>
    %228 = vector.broadcast %13 : f32 to vector<16x16xf32>
    %229 = arith.mulf %228, %227 : vector<16x16xf32>
    %230 = arith.addf %226, %229 : vector<16x16xf32>
    %231 = vector.extract_strided_slice %149 {offsets = [1, 0], sizes = [16, 16], strides = [1, 1]} : vector<22x16xf32> to vector<16x16xf32>
    %232 = vector.broadcast %62 : f32 to vector<16x16xf32>
    %233 = arith.mulf %232, %231 : vector<16x16xf32>
    %234 = arith.addf %230, %233 : vector<16x16xf32>
    %235 = vector.extract_strided_slice %143 {offsets = [1, 0], sizes = [16, 16], strides = [1, 1]} : vector<22x16xf32> to vector<16x16xf32>
    %236 = vector.broadcast %14 : f32 to vector<16x16xf32>
    %237 = arith.mulf %236, %235 : vector<16x16xf32>
    %238 = arith.addf %234, %237 : vector<16x16xf32>
    %239 = vector.extract_strided_slice %150 {offsets = [1, 0], sizes = [16, 16], strides = [1, 1]} : vector<22x16xf32> to vector<16x16xf32>
    %240 = vector.broadcast %63 : f32 to vector<16x16xf32>
    %241 = arith.mulf %240, %239 : vector<16x16xf32>
    %242 = arith.addf %238, %241 : vector<16x16xf32>
    %243 = vector.extract_strided_slice %144 {offsets = [1, 0], sizes = [16, 16], strides = [1, 1]} : vector<22x16xf32> to vector<16x16xf32>
    %244 = vector.broadcast %15 : f32 to vector<16x16xf32>
    %245 = arith.mulf %244, %243 : vector<16x16xf32>
    %246 = arith.addf %242, %245 : vector<16x16xf32>
    %247 = vector.extract_strided_slice %151 {offsets = [1, 0], sizes = [16, 16], strides = [1, 1]} : vector<22x16xf32> to vector<16x16xf32>
    %248 = vector.broadcast %64 : f32 to vector<16x16xf32>
    %249 = arith.mulf %248, %247 : vector<16x16xf32>
    %250 = arith.addf %246, %249 : vector<16x16xf32>
    %251 = vector.extract_strided_slice %145 {offsets = [1, 0], sizes = [16, 16], strides = [1, 1]} : vector<22x16xf32> to vector<16x16xf32>
    %252 = vector.broadcast %16 : f32 to vector<16x16xf32>
    %253 = arith.mulf %252, %251 : vector<16x16xf32>
    %254 = arith.addf %250, %253 : vector<16x16xf32>
    %255 = vector.extract_strided_slice %152 {offsets = [1, 0], sizes = [16, 16], strides = [1, 1]} : vector<22x16xf32> to vector<16x16xf32>
    %256 = vector.broadcast %65 : f32 to vector<16x16xf32>
    %257 = arith.mulf %256, %255 : vector<16x16xf32>
    %258 = arith.addf %254, %257 : vector<16x16xf32>
    %259 = vector.extract_strided_slice %146 {offsets = [1, 0], sizes = [16, 16], strides = [1, 1]} : vector<22x16xf32> to vector<16x16xf32>
    %260 = vector.broadcast %17 : f32 to vector<16x16xf32>
    %261 = arith.mulf %260, %259 : vector<16x16xf32>
    %262 = arith.addf %258, %261 : vector<16x16xf32>
    %263 = vector.extract_strided_slice %153 {offsets = [1, 0], sizes = [16, 16], strides = [1, 1]} : vector<22x16xf32> to vector<16x16xf32>
    %264 = vector.broadcast %66 : f32 to vector<16x16xf32>
    %265 = arith.mulf %264, %263 : vector<16x16xf32>
    %266 = arith.addf %262, %265 : vector<16x16xf32>
    %267 = vector.extract_strided_slice %140 {offsets = [2, 0], sizes = [16, 16], strides = [1, 1]} : vector<22x16xf32> to vector<16x16xf32>
    %268 = vector.broadcast %18 : f32 to vector<16x16xf32>
    %269 = arith.mulf %268, %267 : vector<16x16xf32>
    %270 = arith.addf %266, %269 : vector<16x16xf32>
    %271 = vector.extract_strided_slice %147 {offsets = [2, 0], sizes = [16, 16], strides = [1, 1]} : vector<22x16xf32> to vector<16x16xf32>
    %272 = vector.broadcast %67 : f32 to vector<16x16xf32>
    %273 = arith.mulf %272, %271 : vector<16x16xf32>
    %274 = arith.addf %270, %273 : vector<16x16xf32>
    %275 = vector.extract_strided_slice %141 {offsets = [2, 0], sizes = [16, 16], strides = [1, 1]} : vector<22x16xf32> to vector<16x16xf32>
    %276 = vector.broadcast %19 : f32 to vector<16x16xf32>
    %277 = arith.mulf %276, %275 : vector<16x16xf32>
    %278 = arith.addf %274, %277 : vector<16x16xf32>
    %279 = vector.extract_strided_slice %148 {offsets = [2, 0], sizes = [16, 16], strides = [1, 1]} : vector<22x16xf32> to vector<16x16xf32>
    %280 = vector.broadcast %68 : f32 to vector<16x16xf32>
    %281 = arith.mulf %280, %279 : vector<16x16xf32>
    %282 = arith.addf %278, %281 : vector<16x16xf32>
    %283 = vector.extract_strided_slice %142 {offsets = [2, 0], sizes = [16, 16], strides = [1, 1]} : vector<22x16xf32> to vector<16x16xf32>
    %284 = vector.broadcast %20 : f32 to vector<16x16xf32>
    %285 = arith.mulf %284, %283 : vector<16x16xf32>
    %286 = arith.addf %282, %285 : vector<16x16xf32>
    %287 = vector.extract_strided_slice %149 {offsets = [2, 0], sizes = [16, 16], strides = [1, 1]} : vector<22x16xf32> to vector<16x16xf32>
    %288 = vector.broadcast %69 : f32 to vector<16x16xf32>
    %289 = arith.mulf %288, %287 : vector<16x16xf32>
    %290 = arith.addf %286, %289 : vector<16x16xf32>
    %291 = vector.extract_strided_slice %143 {offsets = [2, 0], sizes = [16, 16], strides = [1, 1]} : vector<22x16xf32> to vector<16x16xf32>
    %292 = vector.broadcast %21 : f32 to vector<16x16xf32>
    %293 = arith.mulf %292, %291 : vector<16x16xf32>
    %294 = arith.addf %290, %293 : vector<16x16xf32>
    %295 = vector.extract_strided_slice %150 {offsets = [2, 0], sizes = [16, 16], strides = [1, 1]} : vector<22x16xf32> to vector<16x16xf32>
    %296 = vector.broadcast %70 : f32 to vector<16x16xf32>
    %297 = arith.mulf %296, %295 : vector<16x16xf32>
    %298 = arith.addf %294, %297 : vector<16x16xf32>
    %299 = vector.extract_strided_slice %144 {offsets = [2, 0], sizes = [16, 16], strides = [1, 1]} : vector<22x16xf32> to vector<16x16xf32>
    %300 = vector.broadcast %22 : f32 to vector<16x16xf32>
    %301 = arith.mulf %300, %299 : vector<16x16xf32>
    %302 = arith.addf %298, %301 : vector<16x16xf32>
    %303 = vector.extract_strided_slice %151 {offsets = [2, 0], sizes = [16, 16], strides = [1, 1]} : vector<22x16xf32> to vector<16x16xf32>
    %304 = vector.broadcast %71 : f32 to vector<16x16xf32>
    %305 = arith.mulf %304, %303 : vector<16x16xf32>
    %306 = arith.addf %302, %305 : vector<16x16xf32>
    %307 = vector.extract_strided_slice %145 {offsets = [2, 0], sizes = [16, 16], strides = [1, 1]} : vector<22x16xf32> to vector<16x16xf32>
    %308 = vector.broadcast %23 : f32 to vector<16x16xf32>
    %309 = arith.mulf %308, %307 : vector<16x16xf32>
    %310 = arith.addf %306, %309 : vector<16x16xf32>
    %311 = vector.extract_strided_slice %152 {offsets = [2, 0], sizes = [16, 16], strides = [1, 1]} : vector<22x16xf32> to vector<16x16xf32>
    %312 = vector.broadcast %72 : f32 to vector<16x16xf32>
    %313 = arith.mulf %312, %311 : vector<16x16xf32>
    %314 = arith.addf %310, %313 : vector<16x16xf32>
    %315 = vector.extract_strided_slice %146 {offsets = [2, 0], sizes = [16, 16], strides = [1, 1]} : vector<22x16xf32> to vector<16x16xf32>
    %316 = vector.broadcast %24 : f32 to vector<16x16xf32>
    %317 = arith.mulf %316, %315 : vector<16x16xf32>
    %318 = arith.addf %314, %317 : vector<16x16xf32>
    %319 = vector.extract_strided_slice %153 {offsets = [2, 0], sizes = [16, 16], strides = [1, 1]} : vector<22x16xf32> to vector<16x16xf32>
    %320 = vector.broadcast %73 : f32 to vector<16x16xf32>
    %321 = arith.mulf %320, %319 : vector<16x16xf32>
    %322 = arith.addf %318, %321 : vector<16x16xf32>
    %323 = vector.extract_strided_slice %140 {offsets = [3, 0], sizes = [16, 16], strides = [1, 1]} : vector<22x16xf32> to vector<16x16xf32>
    %324 = vector.broadcast %25 : f32 to vector<16x16xf32>
    %325 = arith.mulf %324, %323 : vector<16x16xf32>
    %326 = arith.addf %322, %325 : vector<16x16xf32>
    %327 = vector.extract_strided_slice %147 {offsets = [3, 0], sizes = [16, 16], strides = [1, 1]} : vector<22x16xf32> to vector<16x16xf32>
    %328 = vector.broadcast %74 : f32 to vector<16x16xf32>
    %329 = arith.mulf %328, %327 : vector<16x16xf32>
    %330 = arith.addf %326, %329 : vector<16x16xf32>
    %331 = vector.extract_strided_slice %141 {offsets = [3, 0], sizes = [16, 16], strides = [1, 1]} : vector<22x16xf32> to vector<16x16xf32>
    %332 = vector.broadcast %26 : f32 to vector<16x16xf32>
    %333 = arith.mulf %332, %331 : vector<16x16xf32>
    %334 = arith.addf %330, %333 : vector<16x16xf32>
    %335 = vector.extract_strided_slice %148 {offsets = [3, 0], sizes = [16, 16], strides = [1, 1]} : vector<22x16xf32> to vector<16x16xf32>
    %336 = vector.broadcast %75 : f32 to vector<16x16xf32>
    %337 = arith.mulf %336, %335 : vector<16x16xf32>
    %338 = arith.addf %334, %337 : vector<16x16xf32>
    %339 = vector.extract_strided_slice %142 {offsets = [3, 0], sizes = [16, 16], strides = [1, 1]} : vector<22x16xf32> to vector<16x16xf32>
    %340 = vector.broadcast %27 : f32 to vector<16x16xf32>
    %341 = arith.mulf %340, %339 : vector<16x16xf32>
    %342 = arith.addf %338, %341 : vector<16x16xf32>
    %343 = vector.extract_strided_slice %149 {offsets = [3, 0], sizes = [16, 16], strides = [1, 1]} : vector<22x16xf32> to vector<16x16xf32>
    %344 = vector.broadcast %76 : f32 to vector<16x16xf32>
    %345 = arith.mulf %344, %343 : vector<16x16xf32>
    %346 = arith.addf %342, %345 : vector<16x16xf32>
    %347 = vector.extract_strided_slice %143 {offsets = [3, 0], sizes = [16, 16], strides = [1, 1]} : vector<22x16xf32> to vector<16x16xf32>
    %348 = vector.broadcast %28 : f32 to vector<16x16xf32>
    %349 = arith.mulf %348, %347 : vector<16x16xf32>
    %350 = arith.addf %346, %349 : vector<16x16xf32>
    %351 = vector.extract_strided_slice %150 {offsets = [3, 0], sizes = [16, 16], strides = [1, 1]} : vector<22x16xf32> to vector<16x16xf32>
    %352 = vector.broadcast %77 : f32 to vector<16x16xf32>
    %353 = arith.mulf %352, %351 : vector<16x16xf32>
    %354 = arith.addf %350, %353 : vector<16x16xf32>
    %355 = vector.extract_strided_slice %144 {offsets = [3, 0], sizes = [16, 16], strides = [1, 1]} : vector<22x16xf32> to vector<16x16xf32>
    %356 = vector.broadcast %29 : f32 to vector<16x16xf32>
    %357 = arith.mulf %356, %355 : vector<16x16xf32>
    %358 = arith.addf %354, %357 : vector<16x16xf32>
    %359 = vector.extract_strided_slice %151 {offsets = [3, 0], sizes = [16, 16], strides = [1, 1]} : vector<22x16xf32> to vector<16x16xf32>
    %360 = vector.broadcast %78 : f32 to vector<16x16xf32>
    %361 = arith.mulf %360, %359 : vector<16x16xf32>
    %362 = arith.addf %358, %361 : vector<16x16xf32>
    %363 = vector.extract_strided_slice %145 {offsets = [3, 0], sizes = [16, 16], strides = [1, 1]} : vector<22x16xf32> to vector<16x16xf32>
    %364 = vector.broadcast %30 : f32 to vector<16x16xf32>
    %365 = arith.mulf %364, %363 : vector<16x16xf32>
    %366 = arith.addf %362, %365 : vector<16x16xf32>
    %367 = vector.extract_strided_slice %152 {offsets = [3, 0], sizes = [16, 16], strides = [1, 1]} : vector<22x16xf32> to vector<16x16xf32>
    %368 = vector.broadcast %79 : f32 to vector<16x16xf32>
    %369 = arith.mulf %368, %367 : vector<16x16xf32>
    %370 = arith.addf %366, %369 : vector<16x16xf32>
    %371 = vector.extract_strided_slice %146 {offsets = [3, 0], sizes = [16, 16], strides = [1, 1]} : vector<22x16xf32> to vector<16x16xf32>
    %372 = vector.broadcast %31 : f32 to vector<16x16xf32>
    %373 = arith.mulf %372, %371 : vector<16x16xf32>
    %374 = arith.addf %370, %373 : vector<16x16xf32>
    %375 = vector.extract_strided_slice %153 {offsets = [3, 0], sizes = [16, 16], strides = [1, 1]} : vector<22x16xf32> to vector<16x16xf32>
    %376 = vector.broadcast %80 : f32 to vector<16x16xf32>
    %377 = arith.mulf %376, %375 : vector<16x16xf32>
    %378 = arith.addf %374, %377 : vector<16x16xf32>
    %379 = vector.extract_strided_slice %140 {offsets = [4, 0], sizes = [16, 16], strides = [1, 1]} : vector<22x16xf32> to vector<16x16xf32>
    %380 = vector.broadcast %32 : f32 to vector<16x16xf32>
    %381 = arith.mulf %380, %379 : vector<16x16xf32>
    %382 = arith.addf %378, %381 : vector<16x16xf32>
    %383 = vector.extract_strided_slice %147 {offsets = [4, 0], sizes = [16, 16], strides = [1, 1]} : vector<22x16xf32> to vector<16x16xf32>
    %384 = vector.broadcast %81 : f32 to vector<16x16xf32>
    %385 = arith.mulf %384, %383 : vector<16x16xf32>
    %386 = arith.addf %382, %385 : vector<16x16xf32>
    %387 = vector.extract_strided_slice %141 {offsets = [4, 0], sizes = [16, 16], strides = [1, 1]} : vector<22x16xf32> to vector<16x16xf32>
    %388 = vector.broadcast %33 : f32 to vector<16x16xf32>
    %389 = arith.mulf %388, %387 : vector<16x16xf32>
    %390 = arith.addf %386, %389 : vector<16x16xf32>
    %391 = vector.extract_strided_slice %148 {offsets = [4, 0], sizes = [16, 16], strides = [1, 1]} : vector<22x16xf32> to vector<16x16xf32>
    %392 = vector.broadcast %82 : f32 to vector<16x16xf32>
    %393 = arith.mulf %392, %391 : vector<16x16xf32>
    %394 = arith.addf %390, %393 : vector<16x16xf32>
    %395 = vector.extract_strided_slice %142 {offsets = [4, 0], sizes = [16, 16], strides = [1, 1]} : vector<22x16xf32> to vector<16x16xf32>
    %396 = vector.broadcast %34 : f32 to vector<16x16xf32>
    %397 = arith.mulf %396, %395 : vector<16x16xf32>
    %398 = arith.addf %394, %397 : vector<16x16xf32>
    %399 = vector.extract_strided_slice %149 {offsets = [4, 0], sizes = [16, 16], strides = [1, 1]} : vector<22x16xf32> to vector<16x16xf32>
    %400 = vector.broadcast %83 : f32 to vector<16x16xf32>
    %401 = arith.mulf %400, %399 : vector<16x16xf32>
    %402 = arith.addf %398, %401 : vector<16x16xf32>
    %403 = vector.extract_strided_slice %143 {offsets = [4, 0], sizes = [16, 16], strides = [1, 1]} : vector<22x16xf32> to vector<16x16xf32>
    %404 = vector.broadcast %35 : f32 to vector<16x16xf32>
    %405 = arith.mulf %404, %403 : vector<16x16xf32>
    %406 = arith.addf %402, %405 : vector<16x16xf32>
    %407 = vector.extract_strided_slice %150 {offsets = [4, 0], sizes = [16, 16], strides = [1, 1]} : vector<22x16xf32> to vector<16x16xf32>
    %408 = vector.broadcast %84 : f32 to vector<16x16xf32>
    %409 = arith.mulf %408, %407 : vector<16x16xf32>
    %410 = arith.addf %406, %409 : vector<16x16xf32>
    %411 = vector.extract_strided_slice %144 {offsets = [4, 0], sizes = [16, 16], strides = [1, 1]} : vector<22x16xf32> to vector<16x16xf32>
    %412 = vector.broadcast %36 : f32 to vector<16x16xf32>
    %413 = arith.mulf %412, %411 : vector<16x16xf32>
    %414 = arith.addf %410, %413 : vector<16x16xf32>
    %415 = vector.extract_strided_slice %151 {offsets = [4, 0], sizes = [16, 16], strides = [1, 1]} : vector<22x16xf32> to vector<16x16xf32>
    %416 = vector.broadcast %85 : f32 to vector<16x16xf32>
    %417 = arith.mulf %416, %415 : vector<16x16xf32>
    %418 = arith.addf %414, %417 : vector<16x16xf32>
    %419 = vector.extract_strided_slice %145 {offsets = [4, 0], sizes = [16, 16], strides = [1, 1]} : vector<22x16xf32> to vector<16x16xf32>
    %420 = vector.broadcast %37 : f32 to vector<16x16xf32>
    %421 = arith.mulf %420, %419 : vector<16x16xf32>
    %422 = arith.addf %418, %421 : vector<16x16xf32>
    %423 = vector.extract_strided_slice %152 {offsets = [4, 0], sizes = [16, 16], strides = [1, 1]} : vector<22x16xf32> to vector<16x16xf32>
    %424 = vector.broadcast %86 : f32 to vector<16x16xf32>
    %425 = arith.mulf %424, %423 : vector<16x16xf32>
    %426 = arith.addf %422, %425 : vector<16x16xf32>
    %427 = vector.extract_strided_slice %146 {offsets = [4, 0], sizes = [16, 16], strides = [1, 1]} : vector<22x16xf32> to vector<16x16xf32>
    %428 = vector.broadcast %38 : f32 to vector<16x16xf32>
    %429 = arith.mulf %428, %427 : vector<16x16xf32>
    %430 = arith.addf %426, %429 : vector<16x16xf32>
    %431 = vector.extract_strided_slice %153 {offsets = [4, 0], sizes = [16, 16], strides = [1, 1]} : vector<22x16xf32> to vector<16x16xf32>
    %432 = vector.broadcast %87 : f32 to vector<16x16xf32>
    %433 = arith.mulf %432, %431 : vector<16x16xf32>
    %434 = arith.addf %430, %433 : vector<16x16xf32>
    %435 = vector.extract_strided_slice %140 {offsets = [5, 0], sizes = [16, 16], strides = [1, 1]} : vector<22x16xf32> to vector<16x16xf32>
    %436 = vector.broadcast %39 : f32 to vector<16x16xf32>
    %437 = arith.mulf %436, %435 : vector<16x16xf32>
    %438 = arith.addf %434, %437 : vector<16x16xf32>
    %439 = vector.extract_strided_slice %147 {offsets = [5, 0], sizes = [16, 16], strides = [1, 1]} : vector<22x16xf32> to vector<16x16xf32>
    %440 = vector.broadcast %88 : f32 to vector<16x16xf32>
    %441 = arith.mulf %440, %439 : vector<16x16xf32>
    %442 = arith.addf %438, %441 : vector<16x16xf32>
    %443 = vector.extract_strided_slice %141 {offsets = [5, 0], sizes = [16, 16], strides = [1, 1]} : vector<22x16xf32> to vector<16x16xf32>
    %444 = vector.broadcast %40 : f32 to vector<16x16xf32>
    %445 = arith.mulf %444, %443 : vector<16x16xf32>
    %446 = arith.addf %442, %445 : vector<16x16xf32>
    %447 = vector.extract_strided_slice %148 {offsets = [5, 0], sizes = [16, 16], strides = [1, 1]} : vector<22x16xf32> to vector<16x16xf32>
    %448 = vector.broadcast %89 : f32 to vector<16x16xf32>
    %449 = arith.mulf %448, %447 : vector<16x16xf32>
    %450 = arith.addf %446, %449 : vector<16x16xf32>
    %451 = vector.extract_strided_slice %142 {offsets = [5, 0], sizes = [16, 16], strides = [1, 1]} : vector<22x16xf32> to vector<16x16xf32>
    %452 = vector.broadcast %41 : f32 to vector<16x16xf32>
    %453 = arith.mulf %452, %451 : vector<16x16xf32>
    %454 = arith.addf %450, %453 : vector<16x16xf32>
    %455 = vector.extract_strided_slice %149 {offsets = [5, 0], sizes = [16, 16], strides = [1, 1]} : vector<22x16xf32> to vector<16x16xf32>
    %456 = vector.broadcast %90 : f32 to vector<16x16xf32>
    %457 = arith.mulf %456, %455 : vector<16x16xf32>
    %458 = arith.addf %454, %457 : vector<16x16xf32>
    %459 = vector.extract_strided_slice %143 {offsets = [5, 0], sizes = [16, 16], strides = [1, 1]} : vector<22x16xf32> to vector<16x16xf32>
    %460 = vector.broadcast %42 : f32 to vector<16x16xf32>
    %461 = arith.mulf %460, %459 : vector<16x16xf32>
    %462 = arith.addf %458, %461 : vector<16x16xf32>
    %463 = vector.extract_strided_slice %150 {offsets = [5, 0], sizes = [16, 16], strides = [1, 1]} : vector<22x16xf32> to vector<16x16xf32>
    %464 = vector.broadcast %91 : f32 to vector<16x16xf32>
    %465 = arith.mulf %464, %463 : vector<16x16xf32>
    %466 = arith.addf %462, %465 : vector<16x16xf32>
    %467 = vector.extract_strided_slice %144 {offsets = [5, 0], sizes = [16, 16], strides = [1, 1]} : vector<22x16xf32> to vector<16x16xf32>
    %468 = vector.broadcast %43 : f32 to vector<16x16xf32>
    %469 = arith.mulf %468, %467 : vector<16x16xf32>
    %470 = arith.addf %466, %469 : vector<16x16xf32>
    %471 = vector.extract_strided_slice %151 {offsets = [5, 0], sizes = [16, 16], strides = [1, 1]} : vector<22x16xf32> to vector<16x16xf32>
    %472 = vector.broadcast %92 : f32 to vector<16x16xf32>
    %473 = arith.mulf %472, %471 : vector<16x16xf32>
    %474 = arith.addf %470, %473 : vector<16x16xf32>
    %475 = vector.extract_strided_slice %145 {offsets = [5, 0], sizes = [16, 16], strides = [1, 1]} : vector<22x16xf32> to vector<16x16xf32>
    %476 = vector.broadcast %44 : f32 to vector<16x16xf32>
    %477 = arith.mulf %476, %475 : vector<16x16xf32>
    %478 = arith.addf %474, %477 : vector<16x16xf32>
    %479 = vector.extract_strided_slice %152 {offsets = [5, 0], sizes = [16, 16], strides = [1, 1]} : vector<22x16xf32> to vector<16x16xf32>
    %480 = vector.broadcast %93 : f32 to vector<16x16xf32>
    %481 = arith.mulf %480, %479 : vector<16x16xf32>
    %482 = arith.addf %478, %481 : vector<16x16xf32>
    %483 = vector.extract_strided_slice %146 {offsets = [5, 0], sizes = [16, 16], strides = [1, 1]} : vector<22x16xf32> to vector<16x16xf32>
    %484 = vector.broadcast %45 : f32 to vector<16x16xf32>
    %485 = arith.mulf %484, %483 : vector<16x16xf32>
    %486 = arith.addf %482, %485 : vector<16x16xf32>
    %487 = vector.extract_strided_slice %153 {offsets = [5, 0], sizes = [16, 16], strides = [1, 1]} : vector<22x16xf32> to vector<16x16xf32>
    %488 = vector.broadcast %94 : f32 to vector<16x16xf32>
    %489 = arith.mulf %488, %487 : vector<16x16xf32>
    %490 = arith.addf %486, %489 : vector<16x16xf32>
    %491 = vector.extract_strided_slice %140 {offsets = [6, 0], sizes = [16, 16], strides = [1, 1]} : vector<22x16xf32> to vector<16x16xf32>
    %492 = vector.broadcast %46 : f32 to vector<16x16xf32>
    %493 = arith.mulf %492, %491 : vector<16x16xf32>
    %494 = arith.addf %490, %493 : vector<16x16xf32>
    %495 = vector.extract_strided_slice %147 {offsets = [6, 0], sizes = [16, 16], strides = [1, 1]} : vector<22x16xf32> to vector<16x16xf32>
    %496 = vector.broadcast %95 : f32 to vector<16x16xf32>
    %497 = arith.mulf %496, %495 : vector<16x16xf32>
    %498 = arith.addf %494, %497 : vector<16x16xf32>
    %499 = vector.extract_strided_slice %141 {offsets = [6, 0], sizes = [16, 16], strides = [1, 1]} : vector<22x16xf32> to vector<16x16xf32>
    %500 = vector.broadcast %47 : f32 to vector<16x16xf32>
    %501 = arith.mulf %500, %499 : vector<16x16xf32>
    %502 = arith.addf %498, %501 : vector<16x16xf32>
    %503 = vector.extract_strided_slice %148 {offsets = [6, 0], sizes = [16, 16], strides = [1, 1]} : vector<22x16xf32> to vector<16x16xf32>
    %504 = vector.broadcast %96 : f32 to vector<16x16xf32>
    %505 = arith.mulf %504, %503 : vector<16x16xf32>
    %506 = arith.addf %502, %505 : vector<16x16xf32>
    %507 = vector.extract_strided_slice %142 {offsets = [6, 0], sizes = [16, 16], strides = [1, 1]} : vector<22x16xf32> to vector<16x16xf32>
    %508 = vector.broadcast %48 : f32 to vector<16x16xf32>
    %509 = arith.mulf %508, %507 : vector<16x16xf32>
    %510 = arith.addf %506, %509 : vector<16x16xf32>
    %511 = vector.extract_strided_slice %149 {offsets = [6, 0], sizes = [16, 16], strides = [1, 1]} : vector<22x16xf32> to vector<16x16xf32>
    %512 = vector.broadcast %97 : f32 to vector<16x16xf32>
    %513 = arith.mulf %512, %511 : vector<16x16xf32>
    %514 = arith.addf %510, %513 : vector<16x16xf32>
    %515 = vector.extract_strided_slice %143 {offsets = [6, 0], sizes = [16, 16], strides = [1, 1]} : vector<22x16xf32> to vector<16x16xf32>
    %516 = vector.broadcast %49 : f32 to vector<16x16xf32>
    %517 = arith.mulf %516, %515 : vector<16x16xf32>
    %518 = arith.addf %514, %517 : vector<16x16xf32>
    %519 = vector.extract_strided_slice %150 {offsets = [6, 0], sizes = [16, 16], strides = [1, 1]} : vector<22x16xf32> to vector<16x16xf32>
    %520 = vector.broadcast %98 : f32 to vector<16x16xf32>
    %521 = arith.mulf %520, %519 : vector<16x16xf32>
    %522 = arith.addf %518, %521 : vector<16x16xf32>
    %523 = vector.extract_strided_slice %144 {offsets = [6, 0], sizes = [16, 16], strides = [1, 1]} : vector<22x16xf32> to vector<16x16xf32>
    %524 = vector.broadcast %50 : f32 to vector<16x16xf32>
    %525 = arith.mulf %524, %523 : vector<16x16xf32>
    %526 = arith.addf %522, %525 : vector<16x16xf32>
    %527 = vector.extract_strided_slice %151 {offsets = [6, 0], sizes = [16, 16], strides = [1, 1]} : vector<22x16xf32> to vector<16x16xf32>
    %528 = vector.broadcast %99 : f32 to vector<16x16xf32>
    %529 = arith.mulf %528, %527 : vector<16x16xf32>
    %530 = arith.addf %526, %529 : vector<16x16xf32>
    %531 = vector.extract_strided_slice %145 {offsets = [6, 0], sizes = [16, 16], strides = [1, 1]} : vector<22x16xf32> to vector<16x16xf32>
    %532 = vector.broadcast %51 : f32 to vector<16x16xf32>
    %533 = arith.mulf %532, %531 : vector<16x16xf32>
    %534 = arith.addf %530, %533 : vector<16x16xf32>
    %535 = vector.extract_strided_slice %152 {offsets = [6, 0], sizes = [16, 16], strides = [1, 1]} : vector<22x16xf32> to vector<16x16xf32>
    %536 = vector.broadcast %100 : f32 to vector<16x16xf32>
    %537 = arith.mulf %536, %535 : vector<16x16xf32>
    %538 = arith.addf %534, %537 : vector<16x16xf32>
    %539 = vector.extract_strided_slice %146 {offsets = [6, 0], sizes = [16, 16], strides = [1, 1]} : vector<22x16xf32> to vector<16x16xf32>
    %540 = vector.broadcast %52 : f32 to vector<16x16xf32>
    %541 = arith.mulf %540, %539 : vector<16x16xf32>
    %542 = arith.addf %538, %541 : vector<16x16xf32>
    %543 = vector.extract_strided_slice %153 {offsets = [6, 0], sizes = [16, 16], strides = [1, 1]} : vector<22x16xf32> to vector<16x16xf32>
    %544 = vector.broadcast %101 : f32 to vector<16x16xf32>
    %545 = arith.mulf %544, %543 : vector<16x16xf32>
    %546 = arith.addf %542, %545 : vector<16x16xf32>
    %547 = arith.negf %546 : vector<16x16xf32>
    %548 = math.exp %547 : vector<16x16xf32>
    %cst_38 = arith.constant 1.000000e+00 : f32
    %549 = vector.broadcast %cst_38 : f32 to vector<16x16xf32>
    %550 = arith.addf %549, %548 : vector<16x16xf32>
    %551 = arith.divf %549, %550 : vector<16x16xf32>
    %552 = vector.shape_cast %551 : vector<16x16xf32> to vector<16x16x1xf32>
    %553 = vector.broadcast %552 : vector<16x16x1xf32> to vector<16x16x4xf32>
    %554 = arith.mulf %131, %553 : vector<16x16x4xf32>
    %c0_39 = arith.constant 0 : index
    %c0_40 = arith.constant 0 : index
    %c0_41 = arith.constant 0 : index
    %c0_42 = arith.constant 0 : index
    %555 = vector.load %arg5[%c0_39, %c0_40, %c0_41, %c0_42] : memref<1x16x16x4xf32, #tpu.memory_space<vmem>>, vector<1x16x16x4xf32>
    %556 = vector.shape_cast %555 : vector<1x16x16x4xf32> to vector<16x16x4xf32>
    %557 = vector.shape_cast %554 : vector<16x16x4xf32> to vector<1x16x16x4xf32>
    tpu.vector_store %arg5[%c0_39, %c0_40, %c0_41, %c0_42], %557 {strides = array<i32>} : memref<1x16x16x4xf32, #tpu.memory_space<vmem>>, vector<1x16x16x4xf32>,
    return
  }
  func.func @transform_0(%arg0: i32) -> (i32, i32, i32, i32) {
    %c0_i32 = arith.constant 0 : i32
    %c0_i32_0 = arith.constant 0 : i32
    %c0_i32_1 = arith.constant 0 : i32
    %c0_i32_2 = arith.constant 0 : i32
    return %arg0, %c0_i32, %c0_i32_0, %c0_i32_1 : i32, i32, i32, i32
  }
  func.func @transform_1(%arg0: i32) -> (i32, i32) {
    %c0_i32 = arith.constant 0 : i32
    %c0_i32_0 = arith.constant 0 : i32
    %c0_i32_1 = arith.constant 0 : i32
    return %c0_i32, %c0_i32_0 : i32, i32
  }
  func.func @transform_2(%arg0: i32) -> (i32, i32) {
    %c0_i32 = arith.constant 0 : i32
    %c0_i32_0 = arith.constant 0 : i32
    %c0_i32_1 = arith.constant 0 : i32
    return %c0_i32, %c0_i32_0 : i32, i32
  }
  func.func @transform_3(%arg0: i32) -> i32 {
    %c0_i32 = arith.constant 0 : i32
    %c0_i32_0 = arith.constant 0 : i32
    return %c0_i32 : i32
  }
  func.func @transform_4(%arg0: i32) -> (i32, i32, i32, i32) {
    %c0_i32 = arith.constant 0 : i32
    %c0_i32_0 = arith.constant 0 : i32
    %c0_i32_1 = arith.constant 0 : i32
    %c0_i32_2 = arith.constant 0 : i32
    return %arg0, %c0_i32, %c0_i32_0, %c0_i32_1 : i32, i32, i32, i32
  }
}

</mosaic_0001>

<llo_original>
// kernel: tpu_custom_call.1
$region0: #{tpu_custom_call.1}
  #allocation0 [shape = 'u32[]', space=smem, size = 0x4, offset = 0x4, fixed_abs, tag = 'smem constant byte address 0x4 - core index']
  #allocation1 [shape = 'u32[144,128]{1,0:T(1,128)}', space=vmem, size = 0x12000, scoped, tag = 'internal scratch']
  #allocation2 [shape = 'f32[22,22]{1,0:T(8,128)}', space=vmem, size = 0x3000, scoped, tag = 'scratch operand']
  #allocation3 [shape = 'f32[22,22]{1,0:T(8,128)}', space=vmem, size = 0x3000, scoped, tag = 'scratch operand']
  %s0 = inlined_call_operand.vmem [shape: f32[2,16,16,4], index: 0, kind: input, shape index: {}]
  %s1 = inlined_call_operand.vmem [shape: f32[4,4], index: 1, kind: input, shape index: {}]
  %s2 = inlined_call_operand.vmem [shape: f32[4,4], index: 2, kind: input, shape index: {}]
  %s3 = inlined_call_operand.vmem [shape: f32[98], index: 3, kind: input, shape index: {}]
  %s4 = inlined_call_operand.vmem [shape: f32[2,16,16,4], index: 4, kind: output, shape index: {}]
  %s5 = sld [smem:[#allocation0]]
  $region53: #{tpu_custom_call.1} parent=0
    _
  %s7 = ssub.s32 1, %s5
  %s8 = scalar_select 0, %s7, %s5
  $region1: #{tpu_custom_call.1} parent=0
    #allocation4 [shape = 'u8[512]{0}', space=smem, size = 0x200, scoped, tag = 'input window, operand 3, single buffered']
    #allocation5 [shape = 's32[2]{0}', space=sflag, size = 0x8, scoped, tag = 'scoped memory for tpu_custom_call.1']
    %9 = vsyncpa [#allocation5], 0
    loop: start=0, step=1, limit=4
    $region2: #{tpu_custom_call.1} parent=1 // loop_pre_header
      _
    $region3: #{tpu_custom_call.1} parent=1 // loop_header
      %s11 = sphi 0, %s15
      %p12 = scmp.ge.s32.totalorder %s11, 4
      %s21 = sphi 0, %s23
      %s24 = sphi 0, %s21
      %s25 = sphi 0, %s24
      %s41 = sphi 0, %s25
      %s45 = sphi 0, %s45
      %s47 = sphi 0, %s45
      %s48 = sphi 0, %s47
      %s62 = sphi 0, %s48
      %s66 = sphi 0, %s66
      %s68 = sphi 0, %s66
      %s69 = sphi 0, %s68
      %s83 = sphi 0, %s69
      %s87 = sphi 0, %s87
      %s89 = sphi 0, %s87
      %s90 = sphi 0, %s89
      %s104 = sphi 0, %s90
      %s110 = sphi 0, %s112
      %s113 = sphi 0, %s110
      %s114 = sphi 0, %s113
      %s130 = sphi 0, %s114
    $region4: #{tpu_custom_call.1} parent=1 // loop_header_branch
      %14 = sbr.rel (%p12) target = $region8
    $region5: #{tpu_custom_call.1} parent=1 // loop_body
      %s16 = ssub.s32 %s11, 1
      %s17 = ssub.s32 %s11, 2
      %s18 = sadd.s32 %s11, 1
      %s19 = ssub.s32 %s11, %s18
      %p20 = scmp.eq.s32.totalorder %s19, 0
      %s22 = sadd.s32 %s21, 1
      %s23 = scalar_select %p20, %s21, %s22
      %p26 = pneg %p20
      %p27 = scmp.eq.s32.totalorder %s11, 1
      %p28 = por %p26, %p27
      %p29 = scmp.ne.s32.totalorder %s21, %s24
      %p30 = scmp.eq.s32.totalorder %s11, 0
      %p31 = por %p29, %p30
      %p32 = scmp.ne.s32.totalorder %s21, %s24
      %p33 = scmp.eq.s32.totalorder %s16, 1
      %p34 = por %p32, %p33
      %p35 = scmp.ne.s32.totalorder %s24, %s25
      %p36 = scmp.eq.s32.totalorder %s16, 0
      %p37 = por %p35, %p36
      %p38 = scmp.ne.s32.totalorder %s24, %s25
      %p39 = scmp.eq.s32.totalorder %s17, 1
      %p40 = por %p38, %p39
      %p42 = scmp.ne.s32.totalorder %s25, %s41
      %p43 = scmp.eq.s32.totalorder %s17, 0
      %p44 = por %p42, %p43
      %s46 = sadd.s32 %s45, 1
      %p49 = scmp.eq.s32.totalorder %s11, 1
      %p50 = scmp.ne.s32.totalorder %s45, %s47
      %p51 = scmp.eq.s32.totalorder %s11, 0
      %p52 = por %p50, %p51
      %p53 = scmp.ne.s32.totalorder %s45, %s47
      %p54 = scmp.eq.s32.totalorder %s16, 1
      %p55 = por %p53, %p54
      %p56 = scmp.ne.s32.totalorder %s47, %s48
      %p57 = scmp.eq.s32.totalorder %s16, 0
      %p58 = por %p56, %p57
      %p59 = scmp.ne.s32.totalorder %s47, %s48
      %p60 = scmp.eq.s32.totalorder %s17, 1
      %p61 = por %p59, %p60
      %p63 = scmp.ne.s32.totalorder %s48, %s62
      %p64 = scmp.eq.s32.totalorder %s17, 0
      %p65 = por %p63, %p64
      %s67 = sadd.s32 %s66, 1
      %p70 = scmp.eq.s32.totalorder %s11, 1
      %p71 = scmp.ne.s32.totalorder %s66, %s68
      %p72 = scmp.eq.s32.totalorder %s11, 0
      %p73 = por %p71, %p72
      %p74 = scmp.ne.s32.totalorder %s66, %s68
      %p75 = scmp.eq.s32.totalorder %s16, 1
      %p76 = por %p74, %p75
      %p77 = scmp.ne.s32.totalorder %s68, %s69
      %p78 = scmp.eq.s32.totalorder %s16, 0
      %p79 = por %p77, %p78
      %p80 = scmp.ne.s32.totalorder %s68, %s69
      %p81 = scmp.eq.s32.totalorder %s17, 1
      %p82 = por %p80, %p81
      %p84 = scmp.ne.s32.totalorder %s69, %s83
      %p85 = scmp.eq.s32.totalorder %s17, 0
      %p86 = por %p84, %p85
      %s88 = sadd.s32 %s87, 1
      %p91 = scmp.eq.s32.totalorder %s11, 1
      %p92 = scmp.ne.s32.totalorder %s87, %s89
      %p93 = scmp.eq.s32.totalorder %s11, 0
      %p94 = por %p92, %p93
      %p95 = scmp.ne.s32.totalorder %s87, %s89
      %p96 = scmp.eq.s32.totalorder %s16, 1
      %p97 = por %p95, %p96
      %p98 = scmp.ne.s32.totalorder %s89, %s90
      %p99 = scmp.eq.s32.totalorder %s16, 0
      %p100 = por %p98, %p99
      %p101 = scmp.ne.s32.totalorder %s89, %s90
      %p102 = scmp.eq.s32.totalorder %s17, 1
      %p103 = por %p101, %p102
      %p105 = scmp.ne.s32.totalorder %s90, %s104
      %p106 = scmp.eq.s32.totalorder %s17, 0
      %p107 = por %p105, %p106
      %s108 = ssub.s32 %s11, %s18
      %p109 = scmp.eq.s32.totalorder %s108, 0
      %s111 = sadd.s32 %s110, 1
      %s112 = scalar_select %p109, %s110, %s111
      %p115 = pneg %p109
      %p116 = scmp.eq.s32.totalorder %s11, 1
      %p117 = por %p115, %p116
      %p118 = scmp.ne.s32.totalorder %s110, %s113
      %p119 = scmp.eq.s32.totalorder %s11, 0
      %p120 = por %p118, %p119
      %p121 = scmp.ne.s32.totalorder %s110, %s113
      %p122 = scmp.eq.s32.totalorder %s16, 1
      %p123 = por %p121, %p122
      %p124 = scmp.ne.s32.totalorder %s113, %s114
      %p125 = scmp.eq.s32.totalorder %s16, 0
      %p126 = por %p124, %p125
      %p127 = scmp.ne.s32.totalorder %s113, %s114
      %p128 = scmp.eq.s32.totalorder %s17, 1
      %p129 = por %p127, %p128
      %p131 = scmp.ne.s32.totalorder %s114, %s130
      %p132 = scmp.eq.s32.totalorder %s17, 0
      %p133 = por %p131, %p132
      %p134 = scmp.le.s32.totalorder 1, %s11
      %p135 = scmp.lt.s32.totalorder %s11, 3
      %p136 = pnand %p134, %p135
      %p137 = pneg %p136
      // Predicated region
      $region9: #{tpu_custom_call.1} parent=5 // pred_check
        _
      $region10: #{tpu_custom_call.1} parent=5 // pred_check_branch
        %139 = sbr.rel (%p136) target = $region12
      $region11: #{tpu_custom_call.1} parent=5 // pred_region
        %s140 = ssub.s32 %s11, 1
        // Predicated region
        $region13: #{tpu_custom_call.1} parent=11 // pred_check
          %p141 = pneg %p58
        $region14: #{tpu_custom_call.1} parent=11 // pred_check_branch
          %143 = sbr.rel (%p141) target = $region16
        $region15: #{tpu_custom_call.1} parent=11 // pred_region
          _
        $region16: #{tpu_custom_call.1} parent=11 // pred_fallthru
          _
        // Predicated region
        $region17: #{tpu_custom_call.1} parent=11 // pred_check
          %p144 = pneg %p79
        $region18: #{tpu_custom_call.1} parent=11 // pred_check_branch
          %146 = sbr.rel (%p144) target = $region20
        $region19: #{tpu_custom_call.1} parent=11 // pred_region
          _
        $region20: #{tpu_custom_call.1} parent=11 // pred_fallthru
          _
        // Predicated region
        $region21: #{tpu_custom_call.1} parent=11 // pred_check
          %p147 = pneg %p100
        $region22: #{tpu_custom_call.1} parent=11 // pred_check_branch
          %149 = sbr.rel (%p147) target = $region24
        $region23: #{tpu_custom_call.1} parent=11 // pred_region
          %s151 = ssub.s32 16, 16
          %152 = vsyncadd [#allocation5], %s151
          %s154 = sshll.u32 %s3, 4
          %s155 = int_to_ptr.vmem [resolvable:$true] %s154
          %157 = dma.vmem_to_smem %s155, 16, [#allocation4], [#allocation5]
        $region24: #{tpu_custom_call.1} parent=11 // pred_fallthru
          _
      $region12: #{tpu_custom_call.1} parent=5 // pred_fallthru
        _
      %p158 = scmp.lt.s32.totalorder %s11, 2
      // Predicated region
      $region25: #{tpu_custom_call.1} parent=5 // pred_check
        %p159 = pneg %p158
      $region26: #{tpu_custom_call.1} parent=5 // pred_check_branch
        %161 = sbr.rel (%p159) target = $region28
      $region27: #{tpu_custom_call.1} parent=5 // pred_region
        // Predicated region
        $region29: #{tpu_custom_call.1} parent=27 // pred_check
          %p162 = pneg %p31
        $region30: #{tpu_custom_call.1} parent=27 // pred_check_branch
          %164 = sbr.rel (%p162) target = $region32
        $region31: #{tpu_custom_call.1} parent=27 // pred_region
          %p165 = scmp.lt.s32.totalorder %s11, 1
          %s166 = scalar_select %p165, %s11, 1
          %s167 = smul.addr %s166, 32
          %s168 = smul.addr %s167, 8
          %s169 = scalar_lea.vmem %s0, %s168
        $region32: #{tpu_custom_call.1} parent=27 // pred_fallthru
          _
      $region28: #{tpu_custom_call.1} parent=5 // pred_fallthru
        _
      %p170 = scmp.le.s32.totalorder 1, %s11
      %p171 = scmp.lt.s32.totalorder %s11, 3
      %p172 = pnand %p170, %p171
      %p173 = pneg %p172
      // Predicated region
      $region33: #{tpu_custom_call.1} parent=5 // pred_check
        _
      $region34: #{tpu_custom_call.1} parent=5 // pred_check_branch
        %175 = sbr.rel (%p172) target = $region36
      $region35: #{tpu_custom_call.1} parent=5 // pred_region
        %s176 = ssub.s32 %s11, 1
        // Predicated region
        $region37: #{tpu_custom_call.1} parent=35 // pred_check
          %p177 = pneg %p100
        $region38: #{tpu_custom_call.1} parent=35 // pred_check_branch
          %179 = sbr.rel (%p177) target = $region40
        $region39: #{tpu_custom_call.1} parent=35 // pred_region
          %180 = dma.done [#allocation5], 16
        $region40: #{tpu_custom_call.1} parent=35 // pred_fallthru
          _
        %181 = sfence
        %p182 = scmp.lt.s32.totalorder %s16, 1
        %s183 = scalar_select %p182, %s16, 1
        %s184 = smul.addr %s183, 32
        %s185 = smul.addr %s184, 8
        %s186 = scalar_lea.vmem %s0, %s185
        %p187 = pneg %p37
        %p188 = pneg %p34
        %p189 = pneg %p58
        %p190 = pneg %p55
        %p191 = pneg %p79
        %p192 = pneg %p76
        %p193 = pneg %p100
        %p194 = pneg %p97
        %p195 = pneg %p126
        %p196 = pneg %p123
        %p197 = scmp.lt.s32.totalorder %s16, 1
        %s198 = scalar_select %p197, %s16, 1
        %s199 = smul.addr %s198, 32
        %s200 = smul.addr %s199, 8
        %s201 = scalar_lea.vmem %s4, %s200
        %p202 = scmp.lt.s32.totalorder %s16, 1
        %s203 = scalar_select %p202, %s16, 1
        %s204 = smul.addr %s203, 32
        %s205 = smul.addr %s204, 8
        %s206 = scalar_lea.vmem %s0, %s205
        %p207 = scmp.lt.s32.totalorder %s16, 1
        %s208 = scalar_select %p207, %s16, 1
        %s209 = smul.addr %s208, 32
        %s210 = smul.addr %s209, 8
        %s211 = scalar_lea.vmem %s4, %s210
        %vm212 = vcmask 179200
        %213 = vst.msk [vmem:[#allocation2] sm:$0xff] %vm212, 0.0
        %214 = vst.msk [vmem:[#allocation2 + $0x8] sm:$0xff] %vm212, 0.0
        %vm215 = vcmask 177152
        %216 = vst.msk [vmem:[#allocation2 + $0x10] sm:$0x3f] %vm215, 0.0
        %217 = vst.msk [vmem:[#allocation3] sm:$0xff] %vm212, 0.0
        %218 = vst.msk [vmem:[#allocation3 + $0x8] sm:$0xff] %vm212, 0.0
        %219 = vst.msk [vmem:[#allocation3 + $0x10] sm:$0x3f] %vm215, 0.0
        %s220 = sld [smem:[#allocation4]]
        %s221 = sld [smem:[#allocation4 + $0x1]]
        %s222 = sld [smem:[#allocation4 + $0x2]]
        %s223 = sld [smem:[#allocation4 + $0x3]]
        %s224 = sld [smem:[#allocation4 + $0x4]]
        %s225 = sld [smem:[#allocation4 + $0x5]]
        %s226 = sld [smem:[#allocation4 + $0x6]]
        %s227 = sld [smem:[#allocation4 + $0x7]]
        %s228 = sld [smem:[#allocation4 + $0x8]]
        %s229 = sld [smem:[#allocation4 + $0x9]]
        %s230 = sld [smem:[#allocation4 + $0xa]]
        %s231 = sld [smem:[#allocation4 + $0xb]]
        %s232 = sld [smem:[#allocation4 + $0xc]]
        %s233 = sld [smem:[#allocation4 + $0xd]]
        %s234 = sld [smem:[#allocation4 + $0xe]]
        %s235 = sld [smem:[#allocation4 + $0xf]]
        %s236 = sld [smem:[#allocation4 + $0x10]]
        %s237 = sld [smem:[#allocation4 + $0x11]]
        %s238 = sld [smem:[#allocation4 + $0x12]]
        %s239 = sld [smem:[#allocation4 + $0x13]]
        %s240 = sld [smem:[#allocation4 + $0x14]]
        %s241 = sld [smem:[#allocation4 + $0x15]]
        %s242 = sld [smem:[#allocation4 + $0x16]]
        %s243 = sld [smem:[#allocation4 + $0x17]]
        %s244 = sld [smem:[#allocation4 + $0x18]]
        %s245 = sld [smem:[#allocation4 + $0x19]]
        %s246 = sld [smem:[#allocation4 + $0x1a]]
        %s247 = sld [smem:[#allocation4 + $0x1b]]
        %s248 = sld [smem:[#allocation4 + $0x1c]]
        %s249 = sld [smem:[#allocation4 + $0x1d]]
        %s250 = sld [smem:[#allocation4 + $0x1e]]
        %s251 = sld [smem:[#allocation4 + $0x1f]]
        %s252 = sld [smem:[#allocation4 + $0x20]]
        %s253 = sld [smem:[#allocation4 + $0x21]]
        %s254 = sld [smem:[#allocation4 + $0x22]]
        %s255 = sld [smem:[#allocation4 + $0x23]]
        %s256 = sld [smem:[#allocation4 + $0x24]]
        %s257 = sld [smem:[#allocation4 + $0x25]]
        %s258 = sld [smem:[#allocation4 + $0x26]]
        %s259 = sld [smem:[#allocation4 + $0x27]]
        %s260 = sld [smem:[#allocation4 + $0x28]]
        %s261 = sld [smem:[#allocation4 + $0x29]]
        %s262 = sld [smem:[#allocation4 + $0x2a]]
        %s263 = sld [smem:[#allocation4 + $0x2b]]
        %s264 = sld [smem:[#allocation4 + $0x2c]]
        %s265 = sld [smem:[#allocation4 + $0x2d]]
        %s266 = sld [smem:[#allocation4 + $0x2e]]
        %s267 = sld [smem:[#allocation4 + $0x2f]]
        %s268 = sld [smem:[#allocation4 + $0x30]]
        %s269 = sld [smem:[#allocation4 + $0x31]]
        %s270 = sld [smem:[#allocation4 + $0x32]]
        %s271 = sld [smem:[#allocation4 + $0x33]]
        %s272 = sld [smem:[#allocation4 + $0x34]]
        %s273 = sld [smem:[#allocation4 + $0x35]]
        %s274 = sld [smem:[#allocation4 + $0x36]]
        %s275 = sld [smem:[#allocation4 + $0x37]]
        %s276 = sld [smem:[#allocation4 + $0x38]]
        %s277 = sld [smem:[#allocation4 + $0x39]]
        %s278 = sld [smem:[#allocation4 + $0x3a]]
        %s279 = sld [smem:[#allocation4 + $0x3b]]
        %s280 = sld [smem:[#allocation4 + $0x3c]]
        %s281 = sld [smem:[#allocation4 + $0x3d]]
        %s282 = sld [smem:[#allocation4 + $0x3e]]
        %s283 = sld [smem:[#allocation4 + $0x3f]]
        %s284 = sld [smem:[#allocation4 + $0x40]]
        %s285 = sld [smem:[#allocation4 + $0x41]]
        %s286 = sld [smem:[#allocation4 + $0x42]]
        %s287 = sld [smem:[#allocation4 + $0x43]]
        %s288 = sld [smem:[#allocation4 + $0x44]]
        %s289 = sld [smem:[#allocation4 + $0x45]]
        %s290 = sld [smem:[#allocation4 + $0x46]]
        %s291 = sld [smem:[#allocation4 + $0x47]]
        %s292 = sld [smem:[#allocation4 + $0x48]]
        %s293 = sld [smem:[#allocation4 + $0x49]]
        %s294 = sld [smem:[#allocation4 + $0x4a]]
        %s295 = sld [smem:[#allocation4 + $0x4b]]
        %s296 = sld [smem:[#allocation4 + $0x4c]]
        %s297 = sld [smem:[#allocation4 + $0x4d]]
        %s298 = sld [smem:[#allocation4 + $0x4e]]
        %s299 = sld [smem:[#allocation4 + $0x4f]]
        %s300 = sld [smem:[#allocation4 + $0x50]]
        %s301 = sld [smem:[#allocation4 + $0x51]]
        %s302 = sld [smem:[#allocation4 + $0x52]]
        %s303 = sld [smem:[#allocation4 + $0x53]]
        %s304 = sld [smem:[#allocation4 + $0x54]]
        %s305 = sld [smem:[#allocation4 + $0x55]]
        %s306 = sld [smem:[#allocation4 + $0x56]]
        %s307 = sld [smem:[#allocation4 + $0x57]]
        %s308 = sld [smem:[#allocation4 + $0x58]]
        %s309 = sld [smem:[#allocation4 + $0x59]]
        %s310 = sld [smem:[#allocation4 + $0x5a]]
        %s311 = sld [smem:[#allocation4 + $0x5b]]
        %s312 = sld [smem:[#allocation4 + $0x5c]]
        %s313 = sld [smem:[#allocation4 + $0x5d]]
        %s314 = sld [smem:[#allocation4 + $0x5e]]
        %s315 = sld [smem:[#allocation4 + $0x5f]]
        %s316 = sld [smem:[#allocation4 + $0x60]]
        %s317 = sld [smem:[#allocation4 + $0x61]]
        %v318 = vld [vmem:[%s1] sm:$0xf]
        %v319 = vld [vmem:[%s2] sm:$0xf]
        %v320 = vld [vmem:[%s206] sm:$0xff]
        %v321 = vld [vmem:[%s206 + $0x8] sm:$0xff]
        %v322 = vld [vmem:[%s206 + $0x10] sm:$0xff]
        %v323 = vld [vmem:[%s206 + $0x18] sm:$0xff]
        %v324 = vld [vmem:[%s206 + $0x20] sm:$0xff]
        %v325 = vld [vmem:[%s206 + $0x28] sm:$0xff]
        %v326 = vld [vmem:[%s206 + $0x30] sm:$0xff]
        %v327 = vld [vmem:[%s206 + $0x38] sm:$0xff]
        %v328 = vld [vmem:[%s206 + $0x40] sm:$0xff]
        %v329 = vld [vmem:[%s206 + $0x48] sm:$0xff]
        %v330 = vld [vmem:[%s206 + $0x50] sm:$0xff]
        %v331 = vld [vmem:[%s206 + $0x58] sm:$0xff]
        %v332 = vld [vmem:[%s206 + $0x60] sm:$0xff]
        %v333 = vld [vmem:[%s206 + $0x68] sm:$0xff]
        %v334 = vld [vmem:[%s206 + $0x70] sm:$0xff]
        %v335 = vld [vmem:[%s206 + $0x78] sm:$0xff]
        %v336 = vld [vmem:[%s206 + $0x80] sm:$0xff]
        %v337 = vld [vmem:[%s206 + $0x88] sm:$0xff]
        %v338 = vld [vmem:[%s206 + $0x90] sm:$0xff]
        %v339 = vld [vmem:[%s206 + $0x98] sm:$0xff]
        %v340 = vld [vmem:[%s206 + $0xa0] sm:$0xff]
        %v341 = vld [vmem:[%s206 + $0xa8] sm:$0xff]
        %v342 = vld [vmem:[%s206 + $0xb0] sm:$0xff]
        %v343 = vld [vmem:[%s206 + $0xb8] sm:$0xff]
        %v344 = vld [vmem:[%s206 + $0xc0] sm:$0xff]
        %v345 = vld [vmem:[%s206 + $0xc8] sm:$0xff]
        %v346 = vld [vmem:[%s206 + $0xd0] sm:$0xff]
        %v347 = vld [vmem:[%s206 + $0xd8] sm:$0xff]
        %v348 = vld [vmem:[%s206 + $0xe0] sm:$0xff]
        %v349 = vld [vmem:[%s206 + $0xe8] sm:$0xff]
        %v350 = vld [vmem:[%s206 + $0xf0] sm:$0xff]
        %v351 = vld [vmem:[%s206 + $0xf8] sm:$0xff]
        %vm352 = vcmask 31744
        %v353 = vsel %vm352, %v320, 0.0
        %v354 = vsel %vm352, %v322, 0.0
        %v355 = vadd.f32 %v353, %v354
        %v356 = vsel %vm352, %v324, 0.0
        %v357 = vadd.f32 %v355, %v356
        %v358 = vsel %vm352, %v326, 0.0
        %v359 = vadd.f32 %v357, %v358
        %v360 = vsel %vm352, %v328, 0.0
        %v361 = vadd.f32 %v359, %v360
        %v362 = vsel %vm352, %v330, 0.0
        %v363 = vadd.f32 %v361, %v362
        %v364 = vsel %vm352, %v332, 0.0
        %v365 = vadd.f32 %v363, %v364
        %v366 = vsel %vm352, %v334, 0.0
        %v367 = vadd.f32 %v365, %v366
        %v368 = vsel %vm352, %v336, 0.0
        %v369 = vadd.f32 %v367, %v368
        %v370 = vsel %vm352, %v338, 0.0
        %v371 = vadd.f32 %v369, %v370
        %v372 = vsel %vm352, %v340, 0.0
        %v373 = vadd.f32 %v371, %v372
        %v374 = vsel %vm352, %v342, 0.0
        %v375 = vadd.f32 %v373, %v374
        %v376 = vsel %vm352, %v344, 0.0
        %v377 = vadd.f32 %v375, %v376
        %v378 = vsel %vm352, %v346, 0.0
        %v379 = vadd.f32 %v377, %v378
        %v380 = vsel %vm352, %v348, 0.0
        %v381 = vadd.f32 %v379, %v380
        %v382 = vsel %vm352, %v350, 0.0
        %v383 = vadd.f32 %v381, %v382
        %v384 = vsel %vm352, %v321, 0.0
        %v385 = vsel %vm352, %v323, 0.0
        %v386 = vadd.f32 %v384, %v385
        %v387 = vsel %vm352, %v325, 0.0
        %v388 = vadd.f32 %v386, %v387
        %v389 = vsel %vm352, %v327, 0.0
        %v390 = vadd.f32 %v388, %v389
        %v391 = vsel %vm352, %v329, 0.0
        %v392 = vadd.f32 %v390, %v391
        %v393 = vsel %vm352, %v331, 0.0
        %v394 = vadd.f32 %v392, %v393
        %v395 = vsel %vm352, %v333, 0.0
        %v396 = vadd.f32 %v394, %v395
        %v397 = vsel %vm352, %v335, 0.0
        %v398 = vadd.f32 %v396, %v397
        %v399 = vsel %vm352, %v337, 0.0
        %v400 = vadd.f32 %v398, %v399
        %v401 = vsel %vm352, %v339, 0.0
        %v402 = vadd.f32 %v400, %v401
        %v403 = vsel %vm352, %v341, 0.0
        %v404 = vadd.f32 %v402, %v403
        %v405 = vsel %vm352, %v343, 0.0
        %v406 = vadd.f32 %v404, %v405
        %v407 = vsel %vm352, %v345, 0.0
        %v408 = vadd.f32 %v406, %v407
        %v409 = vsel %vm352, %v347, 0.0
        %v410 = vadd.f32 %v408, %v409
        %v411 = vsel %vm352, %v349, 0.0
        %v412 = vadd.f32 %v410, %v411
        %v413 = vsel %vm352, %v351, 0.0
        %v414 = vadd.f32 %v412, %v413
        %v415 = vsel %vm352, %v383, 0.0
        %v416 = vsel %vm352, %v414, 0.0
        %v417 = vadd.f32 %v415, %v416
        %v418 = vrot.slane %v417, 4
        %v419 = vadd.f32 %v417, %v418
        %v420 = vrot.slane %v419, 2
        %v421 = vadd.f32 %v419, %v420
        %v422 = vrot.slane %v421, 1
        %v423 = vadd.f32 %v421, %v422
        %v424 = vmul.f32 %v423, 0.00390625
        %v425 = vsel %vm352, %v320, -inf
        %v426 = vsel %vm352, %v322, -inf
        %v427 = vsel %vm352, %v324, -inf
        %v428 = vmax.f32 %v425, %v427
        %v429 = vsel %vm352, %v326, -inf
        %v430 = vmax.f32 %v426, %v429
        %v431 = vsel %vm352, %v328, -inf
        %v432 = vmax.f32 %v428, %v431
        %v433 = vsel %vm352, %v330, -inf
        %v434 = vmax.f32 %v430, %v433
        %v435 = vsel %vm352, %v332, -inf
        %v436 = vmax.f32 %v432, %v435
        %v437 = vsel %vm352, %v334, -inf
        %v438 = vmax.f32 %v434, %v437
        %v439 = vsel %vm352, %v336, -inf
        %v440 = vmax.f32 %v436, %v439
        %v441 = vsel %vm352, %v338, -inf
        %v442 = vmax.f32 %v438, %v441
        %v443 = vsel %vm352, %v340, -inf
        %v444 = vmax.f32 %v440, %v443
        %v445 = vsel %vm352, %v342, -inf
        %v446 = vmax.f32 %v442, %v445
        %v447 = vsel %vm352, %v344, -inf
        %v448 = vmax.f32 %v444, %v447
        %v449 = vsel %vm352, %v346, -inf
        %v450 = vmax.f32 %v446, %v449
        %v451 = vsel %vm352, %v348, -inf
        %v452 = vmax.f32 %v448, %v451
        %v453 = vsel %vm352, %v350, -inf
        %v454 = vmax.f32 %v450, %v453
        %v455 = vmax.f32 %v452, %v454
        %v456 = vsel %vm352, %v321, -inf
        %v457 = vsel %vm352, %v323, -inf
        %v458 = vsel %vm352, %v325, -inf
        %v459 = vmax.f32 %v456, %v458
        %v460 = vsel %vm352, %v327, -inf
        %v461 = vmax.f32 %v457, %v460
        %v462 = vsel %vm352, %v329, -inf
        %v463 = vmax.f32 %v459, %v462
        %v464 = vsel %vm352, %v331, -inf
        %v465 = vmax.f32 %v461, %v464
        %v466 = vsel %vm352, %v333, -inf
        %v467 = vmax.f32 %v463, %v466
        %v468 = vsel %vm352, %v335, -inf
        %v469 = vmax.f32 %v465, %v468
        %v470 = vsel %vm352, %v337, -inf
        %v471 = vmax.f32 %v467, %v470
        %v472 = vsel %vm352, %v339, -inf
        %v473 = vmax.f32 %v469, %v472
        %v474 = vsel %vm352, %v341, -inf
        %v475 = vmax.f32 %v471, %v474
        %v476 = vsel %vm352, %v343, -inf
        %v477 = vmax.f32 %v473, %v476
        %v478 = vsel %vm352, %v345, -inf
        %v479 = vmax.f32 %v475, %v478
        %v480 = vsel %vm352, %v347, -inf
        %v481 = vmax.f32 %v477, %v480
        %v482 = vsel %vm352, %v349, -inf
        %v483 = vmax.f32 %v479, %v482
        %v484 = vsel %vm352, %v351, -inf
        %v485 = vmax.f32 %v481, %v484
        %v486 = vmax.f32 %v483, %v485
        %v487 = vsel %vm352, %v455, -inf
        %v488 = vsel %vm352, %v486, -inf
        %v489 = vmax.f32 %v487, %v488
        %v490 = vrot.slane %v489, 4
        %v491 = vmax.f32 %v489, %v490
        %v492 = vrot.slane %v491, 2
        %v493 = vmax.f32 %v491, %v492
        %v494 = vrot.slane %v493, 1
        %v495 = vmax.f32 %v493, %v494
        %vm496 = vcmask 1040384
        %v497 = vsel %vm496, %v424, %v495
        %v499 = vsel %vm352, %v497, 0
        %vm501 = vcmask 1043456
        %v503 = vsel %vm501, %v318, 0
        %505 = vmatprep.subr.mxu0 0.0
        %506 = vmatpush1.msra.mxu0 %v503
        %507 = vmatprep.subr.mxu0 0.0
        %508 = vmatpush1.msra.mxu0 0.0
        %509 = vmatprep.subr.mxu0 0.0
        %510 = vmatpush1.msra.mxu0 0.0
        %511 = vmatprep.subr.mxu0 0.0
        %512 = vmatpush1.msra.mxu0 0.0
        %513 = vmatprep.subr.mxu0 0.0
        %514 = vmatpush1.msra.mxu0 0.0
        %515 = vmatprep.subr.mxu0 0.0
        %516 = vmatpush1.msra.mxu0 0.0
        %517 = vmatprep.subr.mxu0 0.0
        %518 = vmatpush1.msra.mxu0 0.0
        %519 = vmatprep.subr.mxu0 0.0
        %520 = vmatpush1.msra.mxu0 0.0
        %521 = vmatprep.subr.mxu0 0.0
        %522 = vmatpush1.msra.mxu0 0.0
        %523 = vmatprep.subr.mxu0 0.0
        %524 = vmatpush1.msra.mxu0 0.0
        %525 = vmatprep.subr.mxu0 0.0
        %526 = vmatpush1.msra.mxu0 0.0
        %527 = vmatprep.subr.mxu0 0.0
        %528 = vmatpush1.msra.mxu0 0.0
        %529 = vmatprep.subr.mxu0 0.0
        %530 = vmatpush1.msra.mxu0 0.0
        %531 = vmatprep.subr.mxu0 0.0
        %532 = vmatpush1.msra.mxu0 0.0
        %533 = vmatprep.subr.mxu0 0.0
        %534 = vmatpush1.msra.mxu0 0.0
        %535 = vmatprep.subr.mxu0 0.0
        %536 = vmatpush1.msra.mxu0 0.0
        %537 = vmatprep.subr.mxu0 0.0
        %538 = vmatpush1.msra.mxu0 0.0
        %539 = vmatprep.subr.mxu0 0.0
        %540 = vmatpush1.msra.mxu0 0.0
        %541 = vmatprep.subr.mxu0 0.0
        %542 = vmatpush1.msra.mxu0 0.0
        %543 = vmatprep.subr.mxu0 0.0
        %544 = vmatpush1.msra.mxu0 0.0
        %545 = vmatprep.subr.mxu0 0.0
        %546 = vmatpush1.msra.mxu0 0.0
        %547 = vmatprep.subr.mxu0 0.0
        %548 = vmatpush1.msra.mxu0 0.0
        %549 = vmatprep.subr.mxu0 0.0
        %550 = vmatpush1.msra.mxu0 0.0
        %551 = vmatprep.subr.mxu0 0.0
        %552 = vmatpush1.msra.mxu0 0.0
        %553 = vmatprep.subr.mxu0 0.0
        %554 = vmatpush1.msra.mxu0 0.0
        %555 = vmatprep.subr.mxu0 0.0
        %556 = vmatpush1.msra.mxu0 0.0
        %557 = vmatprep.subr.mxu0 0.0
        %558 = vmatpush1.msra.mxu0 0.0
        %559 = vmatprep.subr.mxu0 0.0
        %560 = vmatpush1.msra.mxu0 0.0
        %561 = vmatprep.subr.mxu0 0.0
        %562 = vmatpush1.msra.mxu0 0.0
        %563 = vmatprep.subr.mxu0 0.0
        %564 = vmatpush1.msra.mxu0 0.0
        %565 = vmatprep.subr.mxu0 0.0
        %566 = vmatpush1.msra.mxu0 0.0
        %567 = vmatprep.subr.mxu0 0.0
        %568 = vmatpush1.msra.mxu0 0.0
        %569 = vmatprep.mubr.f32.mxu0 0.0
        %570 = vmatmul.mubr.f32.gmra.mrb[0].mxu0 %v499
        %v571 = vpop.f32.mrb[0].mxu0
        %v572 = vadd.f32 0.0, %v571
        %v573 = vpop.f32.mrb[0].mxu0
        %574 = vdwg.mxu0
        %v575 = vmax.f32 %v572, 0.0
        %v577 = vsel %vm352, %v575, 0
        %v580 = vsel %vm501, %v319, 0
        %582 = vmatprep.subr.mxu0 0.0
        %583 = vmatpush1.msra.mxu0 %v580
        %584 = vmatprep.subr.mxu0 0.0
        %585 = vmatpush1.msra.mxu0 0.0
        %586 = vmatprep.subr.mxu0 0.0
        %587 = vmatpush1.msra.mxu0 0.0
        %588 = vmatprep.subr.mxu0 0.0
        %589 = vmatpush1.msra.mxu0 0.0
        %590 = vmatprep.subr.mxu0 0.0
        %591 = vmatpush1.msra.mxu0 0.0
        %592 = vmatprep.subr.mxu0 0.0
        %593 = vmatpush1.msra.mxu0 0.0
        %594 = vmatprep.subr.mxu0 0.0
        %595 = vmatpush1.msra.mxu0 0.0
        %596 = vmatprep.subr.mxu0 0.0
        %597 = vmatpush1.msra.mxu0 0.0
        %598 = vmatprep.subr.mxu0 0.0
        %599 = vmatpush1.msra.mxu0 0.0
        %600 = vmatprep.subr.mxu0 0.0
        %601 = vmatpush1.msra.mxu0 0.0
        %602 = vmatprep.subr.mxu0 0.0
        %603 = vmatpush1.msra.mxu0 0.0
        %604 = vmatprep.subr.mxu0 0.0
        %605 = vmatpush1.msra.mxu0 0.0
        %606 = vmatprep.subr.mxu0 0.0
        %607 = vmatpush1.msra.mxu0 0.0
        %608 = vmatprep.subr.mxu0 0.0
        %609 = vmatpush1.msra.mxu0 0.0
        %610 = vmatprep.subr.mxu0 0.0
        %611 = vmatpush1.msra.mxu0 0.0
        %612 = vmatprep.subr.mxu0 0.0
        %613 = vmatpush1.msra.mxu0 0.0
        %614 = vmatprep.subr.mxu0 0.0
        %615 = vmatpush1.msra.mxu0 0.0
        %616 = vmatprep.subr.mxu0 0.0
        %617 = vmatpush1.msra.mxu0 0.0
        %618 = vmatprep.subr.mxu0 0.0
        %619 = vmatpush1.msra.mxu0 0.0
        %620 = vmatprep.subr.mxu0 0.0
        %621 = vmatpush1.msra.mxu0 0.0
        %622 = vmatprep.subr.mxu0 0.0
        %623 = vmatpush1.msra.mxu0 0.0
        %624 = vmatprep.subr.mxu0 0.0
        %625 = vmatpush1.msra.mxu0 0.0
        %626 = vmatprep.subr.mxu0 0.0
        %627 = vmatpush1.msra.mxu0 0.0
        %628 = vmatprep.subr.mxu0 0.0
        %629 = vmatpush1.msra.mxu0 0.0
        %630 = vmatprep.subr.mxu0 0.0
        %631 = vmatpush1.msra.mxu0 0.0
        %632 = vmatprep.subr.mxu0 0.0
        %633 = vmatpush1.msra.mxu0 0.0
        %634 = vmatprep.subr.mxu0 0.0
        %635 = vmatpush1.msra.mxu0 0.0
        %636 = vmatprep.subr.mxu0 0.0
        %637 = vmatpush1.msra.mxu0 0.0
        %638 = vmatprep.subr.mxu0 0.0
        %639 = vmatpush1.msra.mxu0 0.0
        %640 = vmatprep.subr.mxu0 0.0
        %641 = vmatpush1.msra.mxu0 0.0
        %642 = vmatprep.subr.mxu0 0.0
        %643 = vmatpush1.msra.mxu0 0.0
        %644 = vmatprep.subr.mxu0 0.0
        %645 = vmatpush1.msra.mxu0 0.0
        %646 = vmatprep.mubr.f32.mxu0 0.0
        %647 = vmatmul.mubr.f32.gmra.mrb[0].mxu0 %v577
        %v648 = vpop.f32.mrb[0].mxu0
        %v649 = vadd.f32 0.0, %v648
        %v650 = vpop.f32.mrb[0].mxu0
        %651 = vdwg.mxu0
        %v653 = vrot.slane %v649, 1
        %v655 = vadd.f32 %v649, %v653
        %v656 = vxor.u32 %v655, 2147483648
        %v657 = vmul.f32 %v656, 1.442695
        %v658 = vpow.pop %v657
        %v659 = vadd.f32 %v658, 1.0
        %v660 = vrcp.pop %v659
        %v661 = vmul.f32 1.0, %v660
        %v662 = vlaneseq
        %v663 = vshrl.u32 %v662, 7
        %v664 = vsub.s32 0, %v663
        %v665 = vrot.slane %v661, %v664
        %v666 = vmul.f32 %v320, %v665
        %v667 = vmul.f32 %v321, %v665
        %v668 = vmul.f32 %v322, %v665
        %v669 = vmul.f32 %v323, %v665
        %v670 = vmul.f32 %v324, %v665
        %v671 = vmul.f32 %v325, %v665
        %v672 = vmul.f32 %v326, %v665
        %v673 = vmul.f32 %v327, %v665
        %v674 = vmul.f32 %v328, %v665
        %v675 = vmul.f32 %v329, %v665
        %v676 = vmul.f32 %v330, %v665
        %v677 = vmul.f32 %v331, %v665
        %v678 = vmul.f32 %v332, %v665
        %v679 = vmul.f32 %v333, %v665
        %v680 = vmul.f32 %v334, %v665
        %v681 = vmul.f32 %v335, %v665
        %v682 = vmul.f32 %v336, %v665
        %v683 = vmul.f32 %v337, %v665
        %v684 = vmul.f32 %v338, %v665
        %v685 = vmul.f32 %v339, %v665
        %v686 = vmul.f32 %v340, %v665
        %v687 = vmul.f32 %v341, %v665
        %v688 = vmul.f32 %v342, %v665
        %v689 = vmul.f32 %v343, %v665
        %v690 = vmul.f32 %v344, %v665
        %v691 = vmul.f32 %v345, %v665
        %v692 = vmul.f32 %v346, %v665
        %v693 = vmul.f32 %v347, %v665
        %v694 = vmul.f32 %v348, %v665
        %v695 = vmul.f32 %v349, %v665
        %v696 = vmul.f32 %v350, %v665
        %v697 = vmul.f32 %v351, %v665
        %v698 = vsel %vm352, %v666, -inf
        %699 = vmax.xlane.f32.xlu0 %v698
        %v700 = vpop.xlane.xlu0 %699
        %v701 = vsel %vm352, %v667, -inf
        %702 = vmax.xlane.f32.xlu0 %v701
        %v703 = vpop.xlane.xlu0 %702
        %v704 = vsel %vm352, %v668, -inf
        %705 = vmax.xlane.f32.xlu0 %v704
        %v706 = vpop.xlane.xlu0 %705
        %v707 = vsel %vm352, %v669, -inf
        %708 = vmax.xlane.f32.xlu0 %v707
        %v709 = vpop.xlane.xlu0 %708
        %v710 = vsel %vm352, %v670, -inf
        %711 = vmax.xlane.f32.xlu0 %v710
        %v712 = vpop.xlane.xlu0 %711
        %v713 = vsel %vm352, %v671, -inf
        %714 = vmax.xlane.f32.xlu0 %v713
        %v715 = vpop.xlane.xlu0 %714
        %v716 = vsel %vm352, %v672, -inf
        %717 = vmax.xlane.f32.xlu0 %v716
        %v718 = vpop.xlane.xlu0 %717
        %v719 = vsel %vm352, %v673, -inf
        %720 = vmax.xlane.f32.xlu0 %v719
        %v721 = vpop.xlane.xlu0 %720
        %v722 = vsel %vm352, %v674, -inf
        %723 = vmax.xlane.f32.xlu0 %v722
        %v724 = vpop.xlane.xlu0 %723
        %v725 = vsel %vm352, %v675, -inf
        %726 = vmax.xlane.f32.xlu0 %v725
        %v727 = vpop.xlane.xlu0 %726
        %v728 = vsel %vm352, %v676, -inf
        %729 = vmax.xlane.f32.xlu0 %v728
        %v730 = vpop.xlane.xlu0 %729
        %v731 = vsel %vm352, %v677, -inf
        %732 = vmax.xlane.f32.xlu0 %v731
        %v733 = vpop.xlane.xlu0 %732
        %v734 = vsel %vm352, %v678, -inf
        %735 = vmax.xlane.f32.xlu0 %v734
        %v736 = vpop.xlane.xlu0 %735
        %v737 = vsel %vm352, %v679, -inf
        %738 = vmax.xlane.f32.xlu0 %v737
        %v739 = vpop.xlane.xlu0 %738
        %v740 = vsel %vm352, %v680, -inf
        %741 = vmax.xlane.f32.xlu0 %v740
        %v742 = vpop.xlane.xlu0 %741
        %v743 = vsel %vm352, %v681, -inf
        %744 = vmax.xlane.f32.xlu0 %v743
        %v745 = vpop.xlane.xlu0 %744
        %v746 = vsel %vm352, %v682, -inf
        %747 = vmax.xlane.f32.xlu0 %v746
        %v748 = vpop.xlane.xlu0 %747
        %v749 = vsel %vm352, %v683, -inf
        %750 = vmax.xlane.f32.xlu0 %v749
        %v751 = vpop.xlane.xlu0 %750
        %v752 = vsel %vm352, %v684, -inf
        %753 = vmax.xlane.f32.xlu0 %v752
        %v754 = vpop.xlane.xlu0 %753
        %v755 = vsel %vm352, %v685, -inf
        %756 = vmax.xlane.f32.xlu0 %v755
        %v757 = vpop.xlane.xlu0 %756
        %v758 = vsel %vm352, %v686, -inf
        %759 = vmax.xlane.f32.xlu0 %v758
        %v760 = vpop.xlane.xlu0 %759
        %v761 = vsel %vm352, %v687, -inf
        %762 = vmax.xlane.f32.xlu0 %v761
        %v763 = vpop.xlane.xlu0 %762
        %v764 = vsel %vm352, %v688, -inf
        %765 = vmax.xlane.f32.xlu0 %v764
        %v766 = vpop.xlane.xlu0 %765
        %v767 = vsel %vm352, %v689, -inf
        %768 = vmax.xlane.f32.xlu0 %v767
        %v769 = vpop.xlane.xlu0 %768
        %v770 = vsel %vm352, %v690, -inf
        %771 = vmax.xlane.f32.xlu0 %v770
        %v772 = vpop.xlane.xlu0 %771
        %v773 = vsel %vm352, %v691, -inf
        %774 = vmax.xlane.f32.xlu0 %v773
        %v775 = vpop.xlane.xlu0 %774
        %v776 = vsel %vm352, %v692, -inf
        %777 = vmax.xlane.f32.xlu0 %v776
        %v778 = vpop.xlane.xlu0 %777
        %v779 = vsel %vm352, %v693, -inf
        %780 = vmax.xlane.f32.xlu0 %v779
        %v781 = vpop.xlane.xlu0 %780
        %v782 = vsel %vm352, %v694, -inf
        %783 = vmax.xlane.f32.xlu0 %v782
        %v784 = vpop.xlane.xlu0 %783
        %v785 = vsel %vm352, %v695, -inf
        %786 = vmax.xlane.f32.xlu0 %v785
        %v787 = vpop.xlane.xlu0 %786
        %v788 = vsel %vm352, %v696, -inf
        %789 = vmax.xlane.f32.xlu0 %v788
        %v790 = vpop.xlane.xlu0 %789
        %v791 = vsel %vm352, %v697, -inf
        %792 = vmax.xlane.f32.xlu0 %v791
        %v793 = vpop.xlane.xlu0 %792
        %v794 = vsel %vm352, %v666, 0.0
        %795 = vadd.xlane.f32.xlu0 %v794
        %v796 = vpop.xlane.xlu0 %795
        %v797 = vsel %vm352, %v667, 0.0
        %798 = vadd.xlane.f32.xlu0 %v797
        %v799 = vpop.xlane.xlu0 %798
        %v800 = vsel %vm352, %v668, 0.0
        %801 = vadd.xlane.f32.xlu0 %v800
        %v802 = vpop.xlane.xlu0 %801
        %v803 = vsel %vm352, %v669, 0.0
        %804 = vadd.xlane.f32.xlu0 %v803
        %v805 = vpop.xlane.xlu0 %804
        %v806 = vsel %vm352, %v670, 0.0
        %807 = vadd.xlane.f32.xlu0 %v806
        %v808 = vpop.xlane.xlu0 %807
        %v809 = vsel %vm352, %v671, 0.0
        %810 = vadd.xlane.f32.xlu0 %v809
        %v811 = vpop.xlane.xlu0 %810
        %v812 = vsel %vm352, %v672, 0.0
        %813 = vadd.xlane.f32.xlu0 %v812
        %v814 = vpop.xlane.xlu0 %813
        %v815 = vsel %vm352, %v673, 0.0
        %816 = vadd.xlane.f32.xlu0 %v815
        %v817 = vpop.xlane.xlu0 %816
        %v818 = vsel %vm352, %v674, 0.0
        %819 = vadd.xlane.f32.xlu0 %v818
        %v820 = vpop.xlane.xlu0 %819
        %v821 = vsel %vm352, %v675, 0.0
        %822 = vadd.xlane.f32.xlu0 %v821
        %v823 = vpop.xlane.xlu0 %822
        %v824 = vsel %vm352, %v676, 0.0
        %825 = vadd.xlane.f32.xlu0 %v824
        %v826 = vpop.xlane.xlu0 %825
        %v827 = vsel %vm352, %v677, 0.0
        %828 = vadd.xlane.f32.xlu0 %v827
        %v829 = vpop.xlane.xlu0 %828
        %v830 = vsel %vm352, %v678, 0.0
        %831 = vadd.xlane.f32.xlu0 %v830
        %v832 = vpop.xlane.xlu0 %831
        %v833 = vsel %vm352, %v679, 0.0
        %834 = vadd.xlane.f32.xlu0 %v833
        %v835 = vpop.xlane.xlu0 %834
        %v836 = vsel %vm352, %v680, 0.0
        %837 = vadd.xlane.f32.xlu0 %v836
        %v838 = vpop.xlane.xlu0 %837
        %v839 = vsel %vm352, %v681, 0.0
        %840 = vadd.xlane.f32.xlu0 %v839
        %v841 = vpop.xlane.xlu0 %840
        %v842 = vsel %vm352, %v682, 0.0
        %843 = vadd.xlane.f32.xlu0 %v842
        %v844 = vpop.xlane.xlu0 %843
        %v845 = vsel %vm352, %v683, 0.0
        %846 = vadd.xlane.f32.xlu0 %v845
        %v847 = vpop.xlane.xlu0 %846
        %v848 = vsel %vm352, %v684, 0.0
        %849 = vadd.xlane.f32.xlu0 %v848
        %v850 = vpop.xlane.xlu0 %849
        %v851 = vsel %vm352, %v685, 0.0
        %852 = vadd.xlane.f32.xlu0 %v851
        %v853 = vpop.xlane.xlu0 %852
        %v854 = vsel %vm352, %v686, 0.0
        %855 = vadd.xlane.f32.xlu0 %v854
        %v856 = vpop.xlane.xlu0 %855
        %v857 = vsel %vm352, %v687, 0.0
        %858 = vadd.xlane.f32.xlu0 %v857
        %v859 = vpop.xlane.xlu0 %858
        %v860 = vsel %vm352, %v688, 0.0
        %861 = vadd.xlane.f32.xlu0 %v860
        %v862 = vpop.xlane.xlu0 %861
        %v863 = vsel %vm352, %v689, 0.0
        %864 = vadd.xlane.f32.xlu0 %v863
        %v865 = vpop.xlane.xlu0 %864
        %v866 = vsel %vm352, %v690, 0.0
        %867 = vadd.xlane.f32.xlu0 %v866
        %v868 = vpop.xlane.xlu0 %867
        %v869 = vsel %vm352, %v691, 0.0
        %870 = vadd.xlane.f32.xlu0 %v869
        %v871 = vpop.xlane.xlu0 %870
        %v872 = vsel %vm352, %v692, 0.0
        %873 = vadd.xlane.f32.xlu0 %v872
        %v874 = vpop.xlane.xlu0 %873
        %v875 = vsel %vm352, %v693, 0.0
        %876 = vadd.xlane.f32.xlu0 %v875
        %v877 = vpop.xlane.xlu0 %876
        %v878 = vsel %vm352, %v694, 0.0
        %879 = vadd.xlane.f32.xlu0 %v878
        %v880 = vpop.xlane.xlu0 %879
        %v881 = vsel %vm352, %v695, 0.0
        %882 = vadd.xlane.f32.xlu0 %v881
        %v883 = vpop.xlane.xlu0 %882
        %v884 = vsel %vm352, %v696, 0.0
        %885 = vadd.xlane.f32.xlu0 %v884
        %v886 = vpop.xlane.xlu0 %885
        %v887 = vsel %vm352, %v697, 0.0
        %888 = vadd.xlane.f32.xlu0 %v887
        %v889 = vpop.xlane.xlu0 %888
        %v890 = vmul.f32 %v796, 0.25
        %v891 = vmul.f32 %v799, 0.25
        %v892 = vmul.f32 %v802, 0.25
        %v893 = vmul.f32 %v805, 0.25
        %v894 = vmul.f32 %v808, 0.25
        %v895 = vmul.f32 %v811, 0.25
        %v896 = vmul.f32 %v814, 0.25
        %v897 = vmul.f32 %v817, 0.25
        %v898 = vmul.f32 %v820, 0.25
        %v899 = vmul.f32 %v823, 0.25
        %v900 = vmul.f32 %v826, 0.25
        %v901 = vmul.f32 %v829, 0.25
        %v902 = vmul.f32 %v832, 0.25
        %v903 = vmul.f32 %v835, 0.25
        %v904 = vmul.f32 %v838, 0.25
        %v905 = vmul.f32 %v841, 0.25
        %v906 = vmul.f32 %v844, 0.25
        %v907 = vmul.f32 %v847, 0.25
        %v908 = vmul.f32 %v850, 0.25
        %v909 = vmul.f32 %v853, 0.25
        %v910 = vmul.f32 %v856, 0.25
        %v911 = vmul.f32 %v859, 0.25
        %v912 = vmul.f32 %v862, 0.25
        %v913 = vmul.f32 %v865, 0.25
        %v914 = vmul.f32 %v868, 0.25
        %v915 = vmul.f32 %v871, 0.25
        %v916 = vmul.f32 %v874, 0.25
        %v917 = vmul.f32 %v877, 0.25
        %v918 = vmul.f32 %v880, 0.25
        %v919 = vmul.f32 %v883, 0.25
        %v920 = vmul.f32 %v886, 0.25
        %v921 = vmul.f32 %v889, 0.25
        %v954 = vlaneseq
        %v955 = vand.u32 %v954, 127
        %v956 = vadd.s32 %v955, 4294967293
        %v957 = vlaneseq
        %v958 = vshrl.u32 %v957, 7
        %v959 = vsub.s32 %v956, %v958
        %v960 = vrot.slane %v700, %v959
        %v961 = vadd.s32 %v955, 4294967285
        %v962 = vlaneseq
        %v963 = vshrl.u32 %v962, 7
        %v964 = vsub.s32 %v961, %v963
        %v965 = vrot.slane %v703, %v964
        %vm966 = vcmask 154712
        %v967 = vsel %vm966, %v965, %v960
        %v968 = vlaneseq
        %v969 = vshrl.u32 %v968, 7
        %v970 = vsub.s32 %v956, %v969
        %v971 = vrot.slane %v706, %v970
        %v972 = vlaneseq
        %v973 = vshrl.u32 %v972, 7
        %v974 = vsub.s32 %v961, %v973
        %v975 = vrot.slane %v709, %v974
        %v976 = vsel %vm966, %v975, %v971
        %v977 = vlaneseq
        %v978 = vshrl.u32 %v977, 7
        %v979 = vsub.s32 %v956, %v978
        %v980 = vrot.slane %v712, %v979
        %v981 = vlaneseq
        %v982 = vshrl.u32 %v981, 7
        %v983 = vsub.s32 %v961, %v982
        %v984 = vrot.slane %v715, %v983
        %v985 = vsel %vm966, %v984, %v980
        %v986 = vlaneseq
        %v987 = vshrl.u32 %v986, 7
        %v988 = vsub.s32 %v956, %v987
        %v989 = vrot.slane %v718, %v988
        %v990 = vlaneseq
        %v991 = vshrl.u32 %v990, 7
        %v992 = vsub.s32 %v961, %v991
        %v993 = vrot.slane %v721, %v992
        %v994 = vsel %vm966, %v993, %v989
        %v995 = vlaneseq
        %v996 = vshrl.u32 %v995, 7
        %v997 = vsub.s32 %v956, %v996
        %v998 = vrot.slane %v724, %v997
        %v999 = vlaneseq
        %v1000 = vshrl.u32 %v999, 7
        %v1001 = vsub.s32 %v961, %v1000
        %v1002 = vrot.slane %v727, %v1001
        %v1003 = vsel %vm966, %v1002, %v998
        %v1004 = vlaneseq
        %v1005 = vshrl.u32 %v1004, 7
        %v1006 = vsub.s32 %v956, %v1005
        %v1007 = vrot.slane %v730, %v1006
        %v1008 = vlaneseq
        %v1009 = vshrl.u32 %v1008, 7
        %v1010 = vsub.s32 %v961, %v1009
        %v1011 = vrot.slane %v733, %v1010
        %v1012 = vsel %vm966, %v1011, %v1007
        %v1013 = vlaneseq
        %v1014 = vshrl.u32 %v1013, 7
        %v1015 = vsub.s32 %v956, %v1014
        %v1016 = vrot.slane %v736, %v1015
        %v1017 = vlaneseq
        %v1018 = vshrl.u32 %v1017, 7
        %v1019 = vsub.s32 %v961, %v1018
        %v1020 = vrot.slane %v739, %v1019
        %v1021 = vsel %vm966, %v1020, %v1016
        %v1022 = vlaneseq
        %v1023 = vshrl.u32 %v1022, 7
        %v1024 = vsub.s32 %v956, %v1023
        %v1025 = vrot.slane %v742, %v1024
        %v1026 = vlaneseq
        %v1027 = vshrl.u32 %v1026, 7
        %v1028 = vsub.s32 %v961, %v1027
        %v1029 = vrot.slane %v745, %v1028
        %v1030 = vsel %vm966, %v1029, %v1025
        %v1031 = vlaneseq
        %v1032 = vshrl.u32 %v1031, 7
        %v1033 = vsub.s32 %v956, %v1032
        %v1034 = vrot.slane %v748, %v1033
        %v1035 = vlaneseq
        %v1036 = vshrl.u32 %v1035, 7
        %v1037 = vsub.s32 %v961, %v1036
        %v1038 = vrot.slane %v751, %v1037
        %v1039 = vsel %vm966, %v1038, %v1034
        %v1040 = vlaneseq
        %v1041 = vshrl.u32 %v1040, 7
        %v1042 = vsub.s32 %v956, %v1041
        %v1043 = vrot.slane %v754, %v1042
        %v1044 = vlaneseq
        %v1045 = vshrl.u32 %v1044, 7
        %v1046 = vsub.s32 %v961, %v1045
        %v1047 = vrot.slane %v757, %v1046
        %v1048 = vsel %vm966, %v1047, %v1043
        %v1049 = vlaneseq
        %v1050 = vshrl.u32 %v1049, 7
        %v1051 = vsub.s32 %v956, %v1050
        %v1052 = vrot.slane %v760, %v1051
        %v1053 = vlaneseq
        %v1054 = vshrl.u32 %v1053, 7
        %v1055 = vsub.s32 %v961, %v1054
        %v1056 = vrot.slane %v763, %v1055
        %v1057 = vsel %vm966, %v1056, %v1052
        %v1058 = vlaneseq
        %v1059 = vshrl.u32 %v1058, 7
        %v1060 = vsub.s32 %v956, %v1059
        %v1061 = vrot.slane %v766, %v1060
        %v1062 = vlaneseq
        %v1063 = vshrl.u32 %v1062, 7
        %v1064 = vsub.s32 %v961, %v1063
        %v1065 = vrot.slane %v769, %v1064
        %v1066 = vsel %vm966, %v1065, %v1061
        %v1067 = vlaneseq
        %v1068 = vshrl.u32 %v1067, 7
        %v1069 = vsub.s32 %v956, %v1068
        %v1070 = vrot.slane %v772, %v1069
        %v1071 = vlaneseq
        %v1072 = vshrl.u32 %v1071, 7
        %v1073 = vsub.s32 %v961, %v1072
        %v1074 = vrot.slane %v775, %v1073
        %v1075 = vsel %vm966, %v1074, %v1070
        %v1076 = vlaneseq
        %v1077 = vshrl.u32 %v1076, 7
        %v1078 = vsub.s32 %v956, %v1077
        %v1079 = vrot.slane %v778, %v1078
        %v1080 = vlaneseq
        %v1081 = vshrl.u32 %v1080, 7
        %v1082 = vsub.s32 %v961, %v1081
        %v1083 = vrot.slane %v781, %v1082
        %v1084 = vsel %vm966, %v1083, %v1079
        %v1085 = vlaneseq
        %v1086 = vshrl.u32 %v1085, 7
        %v1087 = vsub.s32 %v956, %v1086
        %v1088 = vrot.slane %v784, %v1087
        %v1089 = vlaneseq
        %v1090 = vshrl.u32 %v1089, 7
        %v1091 = vsub.s32 %v961, %v1090
        %v1092 = vrot.slane %v787, %v1091
        %v1093 = vsel %vm966, %v1092, %v1088
        %v1094 = vlaneseq
        %v1095 = vshrl.u32 %v1094, 7
        %v1096 = vsub.s32 %v956, %v1095
        %v1097 = vrot.slane %v790, %v1096
        %v1098 = vlaneseq
        %v1099 = vshrl.u32 %v1098, 7
        %v1100 = vsub.s32 %v961, %v1099
        %v1101 = vrot.slane %v793, %v1100
        %v1102 = vsel %vm966, %v1101, %v1097
        %vm1103 = vcmask 1041409
        %v1104 = vsel %vm1103, %v976, %v967
        %vm1105 = vcmask 1042434
        %v1106 = vsel %vm1105, %v985, %v1104
        %vm1107 = vcmask 1043459
        %v1108 = vsel %vm1107, %v994, %v1106
        %vm1109 = vcmask 1044484
        %v1110 = vsel %vm1109, %v1003, %v1108
        %vm1111 = vcmask 1045509
        %v1112 = vsel %vm1111, %v1012, %v1110
        %vm1113 = vcmask 1046534
        %v1114 = vsel %vm1113, %v1021, %v1112
        %vm1115 = vcmask 1047559
        %v1116 = vsel %vm1115, %v1030, %v1114
        %v1117 = vsel %vm1103, %v1048, %v1039
        %v1118 = vsel %vm1105, %v1057, %v1117
        %v1119 = vsel %vm1107, %v1066, %v1118
        %v1120 = vsel %vm1109, %v1075, %v1119
        %v1121 = vsel %vm1111, %v1084, %v1120
        %v1122 = vsel %vm1113, %v1093, %v1121
        %v1123 = vsel %vm1115, %v1102, %v1122
        %vm1126 = vcmask 154648
        %1127 = vst.msk [vmem:[#allocation2 + $0x3] sm:$0xff] %vm1126, %v1116
        %1128 = vst.msk [vmem:[#allocation2 + $0xb] sm:$0xff] %vm1126, %v1123
        %v1161 = vlaneseq
        %v1162 = vshrl.u32 %v1161, 7
        %v1163 = vsub.s32 %v956, %v1162
        %v1164 = vrot.slane %v890, %v1163
        %v1165 = vlaneseq
        %v1166 = vshrl.u32 %v1165, 7
        %v1167 = vsub.s32 %v961, %v1166
        %v1168 = vrot.slane %v891, %v1167
        %v1169 = vsel %vm966, %v1168, %v1164
        %v1170 = vlaneseq
        %v1171 = vshrl.u32 %v1170, 7
        %v1172 = vsub.s32 %v956, %v1171
        %v1173 = vrot.slane %v892, %v1172
        %v1174 = vlaneseq
        %v1175 = vshrl.u32 %v1174, 7
        %v1176 = vsub.s32 %v961, %v1175
        %v1177 = vrot.slane %v893, %v1176
        %v1178 = vsel %vm966, %v1177, %v1173
        %v1179 = vlaneseq
        %v1180 = vshrl.u32 %v1179, 7
        %v1181 = vsub.s32 %v956, %v1180
        %v1182 = vrot.slane %v894, %v1181
        %v1183 = vlaneseq
        %v1184 = vshrl.u32 %v1183, 7
        %v1185 = vsub.s32 %v961, %v1184
        %v1186 = vrot.slane %v895, %v1185
        %v1187 = vsel %vm966, %v1186, %v1182
        %v1188 = vlaneseq
        %v1189 = vshrl.u32 %v1188, 7
        %v1190 = vsub.s32 %v956, %v1189
        %v1191 = vrot.slane %v896, %v1190
        %v1192 = vlaneseq
        %v1193 = vshrl.u32 %v1192, 7
        %v1194 = vsub.s32 %v961, %v1193
        %v1195 = vrot.slane %v897, %v1194
        %v1196 = vsel %vm966, %v1195, %v1191
        %v1197 = vlaneseq
        %v1198 = vshrl.u32 %v1197, 7
        %v1199 = vsub.s32 %v956, %v1198
        %v1200 = vrot.slane %v898, %v1199
        %v1201 = vlaneseq
        %v1202 = vshrl.u32 %v1201, 7
        %v1203 = vsub.s32 %v961, %v1202
        %v1204 = vrot.slane %v899, %v1203
        %v1205 = vsel %vm966, %v1204, %v1200
        %v1206 = vlaneseq
        %v1207 = vshrl.u32 %v1206, 7
        %v1208 = vsub.s32 %v956, %v1207
        %v1209 = vrot.slane %v900, %v1208
        %v1210 = vlaneseq
        %v1211 = vshrl.u32 %v1210, 7
        %v1212 = vsub.s32 %v961, %v1211
        %v1213 = vrot.slane %v901, %v1212
        %v1214 = vsel %vm966, %v1213, %v1209
        %v1215 = vlaneseq
        %v1216 = vshrl.u32 %v1215, 7
        %v1217 = vsub.s32 %v956, %v1216
        %v1218 = vrot.slane %v902, %v1217
        %v1219 = vlaneseq
        %v1220 = vshrl.u32 %v1219, 7
        %v1221 = vsub.s32 %v961, %v1220
        %v1222 = vrot.slane %v903, %v1221
        %v1223 = vsel %vm966, %v1222, %v1218
        %v1224 = vlaneseq
        %v1225 = vshrl.u32 %v1224, 7
        %v1226 = vsub.s32 %v956, %v1225
        %v1227 = vrot.slane %v904, %v1226
        %v1228 = vlaneseq
        %v1229 = vshrl.u32 %v1228, 7
        %v1230 = vsub.s32 %v961, %v1229
        %v1231 = vrot.slane %v905, %v1230
        %v1232 = vsel %vm966, %v1231, %v1227
        %v1233 = vlaneseq
        %v1234 = vshrl.u32 %v1233, 7
        %v1235 = vsub.s32 %v956, %v1234
        %v1236 = vrot.slane %v906, %v1235
        %v1237 = vlaneseq
        %v1238 = vshrl.u32 %v1237, 7
        %v1239 = vsub.s32 %v961, %v1238
        %v1240 = vrot.slane %v907, %v1239
        %v1241 = vsel %vm966, %v1240, %v1236
        %v1242 = vlaneseq
        %v1243 = vshrl.u32 %v1242, 7
        %v1244 = vsub.s32 %v956, %v1243
        %v1245 = vrot.slane %v908, %v1244
        %v1246 = vlaneseq
        %v1247 = vshrl.u32 %v1246, 7
        %v1248 = vsub.s32 %v961, %v1247
        %v1249 = vrot.slane %v909, %v1248
        %v1250 = vsel %vm966, %v1249, %v1245
        %v1251 = vlaneseq
        %v1252 = vshrl.u32 %v1251, 7
        %v1253 = vsub.s32 %v956, %v1252
        %v1254 = vrot.slane %v910, %v1253
        %v1255 = vlaneseq
        %v1256 = vshrl.u32 %v1255, 7
        %v1257 = vsub.s32 %v961, %v1256
        %v1258 = vrot.slane %v911, %v1257
        %v1259 = vsel %vm966, %v1258, %v1254
        %v1260 = vlaneseq
        %v1261 = vshrl.u32 %v1260, 7
        %v1262 = vsub.s32 %v956, %v1261
        %v1263 = vrot.slane %v912, %v1262
        %v1264 = vlaneseq
        %v1265 = vshrl.u32 %v1264, 7
        %v1266 = vsub.s32 %v961, %v1265
        %v1267 = vrot.slane %v913, %v1266
        %v1268 = vsel %vm966, %v1267, %v1263
        %v1269 = vlaneseq
        %v1270 = vshrl.u32 %v1269, 7
        %v1271 = vsub.s32 %v956, %v1270
        %v1272 = vrot.slane %v914, %v1271
        %v1273 = vlaneseq
        %v1274 = vshrl.u32 %v1273, 7
        %v1275 = vsub.s32 %v961, %v1274
        %v1276 = vrot.slane %v915, %v1275
        %v1277 = vsel %vm966, %v1276, %v1272
        %v1278 = vlaneseq
        %v1279 = vshrl.u32 %v1278, 7
        %v1280 = vsub.s32 %v956, %v1279
        %v1281 = vrot.slane %v916, %v1280
        %v1282 = vlaneseq
        %v1283 = vshrl.u32 %v1282, 7
        %v1284 = vsub.s32 %v961, %v1283
        %v1285 = vrot.slane %v917, %v1284
        %v1286 = vsel %vm966, %v1285, %v1281
        %v1287 = vlaneseq
        %v1288 = vshrl.u32 %v1287, 7
        %v1289 = vsub.s32 %v956, %v1288
        %v1290 = vrot.slane %v918, %v1289
        %v1291 = vlaneseq
        %v1292 = vshrl.u32 %v1291, 7
        %v1293 = vsub.s32 %v961, %v1292
        %v1294 = vrot.slane %v919, %v1293
        %v1295 = vsel %vm966, %v1294, %v1290
        %v1296 = vlaneseq
        %v1297 = vshrl.u32 %v1296, 7
        %v1298 = vsub.s32 %v956, %v1297
        %v1299 = vrot.slane %v920, %v1298
        %v1300 = vlaneseq
        %v1301 = vshrl.u32 %v1300, 7
        %v1302 = vsub.s32 %v961, %v1301
        %v1303 = vrot.slane %v921, %v1302
        %v1304 = vsel %vm966, %v1303, %v1299
        %v1305 = vsel %vm1103, %v1178, %v1169
        %v1306 = vsel %vm1105, %v1187, %v1305
        %v1307 = vsel %vm1107, %v1196, %v1306
        %v1308 = vsel %vm1109, %v1205, %v1307
        %v1309 = vsel %vm1111, %v1214, %v1308
        %v1310 = vsel %vm1113, %v1223, %v1309
        %v1311 = vsel %vm1115, %v1232, %v1310
        %v1312 = vsel %vm1103, %v1250, %v1241
        %v1313 = vsel %vm1105, %v1259, %v1312
        %v1314 = vsel %vm1107, %v1268, %v1313
        %v1315 = vsel %vm1109, %v1277, %v1314
        %v1316 = vsel %vm1111, %v1286, %v1315
        %v1317 = vsel %vm1113, %v1295, %v1316
        %v1318 = vsel %vm1115, %v1304, %v1317
        %1321 = vst.msk [vmem:[#allocation3 + $0x3] sm:$0xff] %vm1126, %v1311
        %1322 = vst.msk [vmem:[#allocation3 + $0xb] sm:$0xff] %vm1126, %v1318
        %v1323 = vld [vmem:[#allocation2] sm:$0xff]
        %v1324 = vld [vmem:[#allocation2 + $0x8] sm:$0xff]
        %v1325 = vld [vmem:[#allocation2 + $0x10] sm:$0x3f]
        %v1326 = vld [vmem:[#allocation3] sm:$0xff]
        %v1327 = vld [vmem:[#allocation3 + $0x8] sm:$0xff]
        %v1328 = vld [vmem:[#allocation3 + $0x10] sm:$0x3f]
        %v1329 = vstv %s220
        %v1330 = vmul.f32 %v1329, %v1323
        %v1331 = vmul.f32 %v1329, %v1324
        %v1332 = vadd.f32 %v1330, 0.0
        %v1333 = vadd.f32 %v1331, 0.0
        %v1334 = vstv %s269
        %v1335 = vmul.f32 %v1334, %v1326
        %v1336 = vmul.f32 %v1334, %v1327
        %v1337 = vadd.f32 %v1332, %v1335
        %v1338 = vadd.f32 %v1333, %v1336
        %v1339 = vstv %s221
        %v1340 = vmul.f32 %v1339, %v1323
        %v1341 = vmul.f32 %v1339, %v1324
        %1344 = vrot.lane.b32.xlu0 %v1340, 127
        %v1345 = vpop.permute.xlu0 %1344
        %1346 = vrot.lane.b32.xlu0 %v1341, 127
        %v1347 = vpop.permute.xlu0 %1346
        %v1350 = vadd.f32 %v1337, %v1345
        %v1351 = vadd.f32 %v1338, %v1347
        %v1352 = vstv %s270
        %v1353 = vmul.f32 %v1352, %v1326
        %v1354 = vmul.f32 %v1352, %v1327
        %1357 = vrot.lane.b32.xlu0 %v1353, 127
        %v1358 = vpop.permute.xlu0 %1357
        %1359 = vrot.lane.b32.xlu0 %v1354, 127
        %v1360 = vpop.permute.xlu0 %1359
        %v1363 = vadd.f32 %v1350, %v1358
        %v1364 = vadd.f32 %v1351, %v1360
        %v1365 = vstv %s222
        %v1366 = vmul.f32 %v1365, %v1323
        %v1367 = vmul.f32 %v1365, %v1324
        %1370 = vrot.lane.b32.xlu0 %v1366, 126
        %v1371 = vpop.permute.xlu0 %1370
        %1372 = vrot.lane.b32.xlu0 %v1367, 126
        %v1373 = vpop.permute.xlu0 %1372
        %v1376 = vadd.f32 %v1363, %v1371
        %v1377 = vadd.f32 %v1364, %v1373
        %v1378 = vstv %s271
        %v1379 = vmul.f32 %v1378, %v1326
        %v1380 = vmul.f32 %v1378, %v1327
        %1383 = vrot.lane.b32.xlu0 %v1379, 126
        %v1384 = vpop.permute.xlu0 %1383
        %1385 = vrot.lane.b32.xlu0 %v1380, 126
        %v1386 = vpop.permute.xlu0 %1385
        %v1389 = vadd.f32 %v1376, %v1384
        %v1390 = vadd.f32 %v1377, %v1386
        %v1391 = vstv %s223
        %v1392 = vmul.f32 %v1391, %v1323
        %v1393 = vmul.f32 %v1391, %v1324
        %1396 = vrot.lane.b32.xlu0 %v1392, 125
        %v1397 = vpop.permute.xlu0 %1396
        %1398 = vrot.lane.b32.xlu0 %v1393, 125
        %v1399 = vpop.permute.xlu0 %1398
        %v1402 = vadd.f32 %v1389, %v1397
        %v1403 = vadd.f32 %v1390, %v1399
        %v1404 = vstv %s272
        %v1405 = vmul.f32 %v1404, %v1326
        %v1406 = vmul.f32 %v1404, %v1327
        %1409 = vrot.lane.b32.xlu0 %v1405, 125
        %v1410 = vpop.permute.xlu0 %1409
        %1411 = vrot.lane.b32.xlu0 %v1406, 125
        %v1412 = vpop.permute.xlu0 %1411
        %v1415 = vadd.f32 %v1402, %v1410
        %v1416 = vadd.f32 %v1403, %v1412
        %v1417 = vstv %s224
        %v1418 = vmul.f32 %v1417, %v1323
        %v1419 = vmul.f32 %v1417, %v1324
        %1422 = vrot.lane.b32.xlu0 %v1418, 124
        %v1423 = vpop.permute.xlu0 %1422
        %1424 = vrot.lane.b32.xlu0 %v1419, 124
        %v1425 = vpop.permute.xlu0 %1424
        %v1428 = vadd.f32 %v1415, %v1423
        %v1429 = vadd.f32 %v1416, %v1425
        %v1430 = vstv %s273
        %v1431 = vmul.f32 %v1430, %v1326
        %v1432 = vmul.f32 %v1430, %v1327
        %1435 = vrot.lane.b32.xlu0 %v1431, 124
        %v1436 = vpop.permute.xlu0 %1435
        %1437 = vrot.lane.b32.xlu0 %v1432, 124
        %v1438 = vpop.permute.xlu0 %1437
        %v1441 = vadd.f32 %v1428, %v1436
        %v1442 = vadd.f32 %v1429, %v1438
        %v1443 = vstv %s225
        %v1444 = vmul.f32 %v1443, %v1323
        %v1445 = vmul.f32 %v1443, %v1324
        %1448 = vrot.lane.b32.xlu0 %v1444, 123
        %v1449 = vpop.permute.xlu0 %1448
        %1450 = vrot.lane.b32.xlu0 %v1445, 123
        %v1451 = vpop.permute.xlu0 %1450
        %v1454 = vadd.f32 %v1441, %v1449
        %v1455 = vadd.f32 %v1442, %v1451
        %v1456 = vstv %s274
        %v1457 = vmul.f32 %v1456, %v1326
        %v1458 = vmul.f32 %v1456, %v1327
        %1461 = vrot.lane.b32.xlu0 %v1457, 123
        %v1462 = vpop.permute.xlu0 %1461
        %1463 = vrot.lane.b32.xlu0 %v1458, 123
        %v1464 = vpop.permute.xlu0 %1463
        %v1467 = vadd.f32 %v1454, %v1462
        %v1468 = vadd.f32 %v1455, %v1464
        %v1469 = vstv %s226
        %v1470 = vmul.f32 %v1469, %v1323
        %v1471 = vmul.f32 %v1469, %v1324
        %1474 = vrot.lane.b32.xlu0 %v1470, 122
        %v1475 = vpop.permute.xlu0 %1474
        %1476 = vrot.lane.b32.xlu0 %v1471, 122
        %v1477 = vpop.permute.xlu0 %1476
        %v1480 = vadd.f32 %v1467, %v1475
        %v1481 = vadd.f32 %v1468, %v1477
        %v1482 = vstv %s275
        %v1483 = vmul.f32 %v1482, %v1326
        %v1484 = vmul.f32 %v1482, %v1327
        %1487 = vrot.lane.b32.xlu0 %v1483, 122
        %v1488 = vpop.permute.xlu0 %1487
        %1489 = vrot.lane.b32.xlu0 %v1484, 122
        %v1490 = vpop.permute.xlu0 %1489
        %v1493 = vadd.f32 %v1480, %v1488
        %v1494 = vadd.f32 %v1481, %v1490
        %v1495 = vstv %s227
        %v1496 = vmul.f32 %v1495, %v1323
        %v1497 = vmul.f32 %v1495, %v1324
        %v1498 = vmul.f32 %v1495, %v1325
        %vm1502 = vcmask 1046528
        %v1503 = vrot.slane %v1496, 1
        %v1504 = vrot.slane %v1497, 1
        %v1505 = vsel %vm1502, %v1503, %v1504
        %v1506 = vrot.slane %v1498, 1
        %v1507 = vsel %vm1502, %v1504, %v1506
        %v1510 = vadd.f32 %v1493, %v1505
        %v1511 = vadd.f32 %v1494, %v1507
        %v1512 = vstv %s276
        %v1513 = vmul.f32 %v1512, %v1326
        %v1514 = vmul.f32 %v1512, %v1327
        %v1515 = vmul.f32 %v1512, %v1328
        %v1519 = vrot.slane %v1513, 1
        %v1520 = vrot.slane %v1514, 1
        %v1521 = vsel %vm1502, %v1519, %v1520
        %v1522 = vrot.slane %v1515, 1
        %v1523 = vsel %vm1502, %v1520, %v1522
        %v1526 = vadd.f32 %v1510, %v1521
        %v1527 = vadd.f32 %v1511, %v1523
        %v1528 = vstv %s228
        %v1529 = vmul.f32 %v1528, %v1323
        %v1530 = vmul.f32 %v1528, %v1324
        %v1531 = vmul.f32 %v1528, %v1325
        %v1535 = vrot.slane %v1529, 1
        %v1536 = vrot.slane %v1530, 1
        %v1537 = vsel %vm1502, %v1535, %v1536
        %v1538 = vrot.slane %v1531, 1
        %v1539 = vsel %vm1502, %v1536, %v1538
        %1540 = vrot.lane.b32.xlu0 %v1537, 127
        %v1541 = vpop.permute.xlu0 %1540
        %1542 = vrot.lane.b32.xlu0 %v1539, 127
        %v1543 = vpop.permute.xlu0 %1542
        %v1546 = vadd.f32 %v1526, %v1541
        %v1547 = vadd.f32 %v1527, %v1543
        %v1548 = vstv %s277
        %v1549 = vmul.f32 %v1548, %v1326
        %v1550 = vmul.f32 %v1548, %v1327
        %v1551 = vmul.f32 %v1548, %v1328
        %v1555 = vrot.slane %v1549, 1
        %v1556 = vrot.slane %v1550, 1
        %v1557 = vsel %vm1502, %v1555, %v1556
        %v1558 = vrot.slane %v1551, 1
        %v1559 = vsel %vm1502, %v1556, %v1558
        %1560 = vrot.lane.b32.xlu0 %v1557, 127
        %v1561 = vpop.permute.xlu0 %1560
        %1562 = vrot.lane.b32.xlu0 %v1559, 127
        %v1563 = vpop.permute.xlu0 %1562
        %v1566 = vadd.f32 %v1546, %v1561
        %v1567 = vadd.f32 %v1547, %v1563
        %v1568 = vstv %s229
        %v1569 = vmul.f32 %v1568, %v1323
        %v1570 = vmul.f32 %v1568, %v1324
        %v1571 = vmul.f32 %v1568, %v1325
        %v1575 = vrot.slane %v1569, 1
        %v1576 = vrot.slane %v1570, 1
        %v1577 = vsel %vm1502, %v1575, %v1576
        %v1578 = vrot.slane %v1571, 1
        %v1579 = vsel %vm1502, %v1576, %v1578
        %1580 = vrot.lane.b32.xlu0 %v1577, 126
        %v1581 = vpop.permute.xlu0 %1580
        %1582 = vrot.lane.b32.xlu0 %v1579, 126
        %v1583 = vpop.permute.xlu0 %1582
        %v1586 = vadd.f32 %v1566, %v1581
        %v1587 = vadd.f32 %v1567, %v1583
        %v1588 = vstv %s278
        %v1589 = vmul.f32 %v1588, %v1326
        %v1590 = vmul.f32 %v1588, %v1327
        %v1591 = vmul.f32 %v1588, %v1328
        %v1595 = vrot.slane %v1589, 1
        %v1596 = vrot.slane %v1590, 1
        %v1597 = vsel %vm1502, %v1595, %v1596
        %v1598 = vrot.slane %v1591, 1
        %v1599 = vsel %vm1502, %v1596, %v1598
        %1600 = vrot.lane.b32.xlu0 %v1597, 126
        %v1601 = vpop.permute.xlu0 %1600
        %1602 = vrot.lane.b32.xlu0 %v1599, 126
        %v1603 = vpop.permute.xlu0 %1602
        %v1606 = vadd.f32 %v1586, %v1601
        %v1607 = vadd.f32 %v1587, %v1603
        %v1608 = vstv %s230
        %v1609 = vmul.f32 %v1608, %v1323
        %v1610 = vmul.f32 %v1608, %v1324
        %v1611 = vmul.f32 %v1608, %v1325
        %v1615 = vrot.slane %v1609, 1
        %v1616 = vrot.slane %v1610, 1
        %v1617 = vsel %vm1502, %v1615, %v1616
        %v1618 = vrot.slane %v1611, 1
        %v1619 = vsel %vm1502, %v1616, %v1618
        %1620 = vrot.lane.b32.xlu0 %v1617, 125
        %v1621 = vpop.permute.xlu0 %1620
        %1622 = vrot.lane.b32.xlu0 %v1619, 125
        %v1623 = vpop.permute.xlu0 %1622
        %v1626 = vadd.f32 %v1606, %v1621
        %v1627 = vadd.f32 %v1607, %v1623
        %v1628 = vstv %s279
        %v1629 = vmul.f32 %v1628, %v1326
        %v1630 = vmul.f32 %v1628, %v1327
        %v1631 = vmul.f32 %v1628, %v1328
        %v1635 = vrot.slane %v1629, 1
        %v1636 = vrot.slane %v1630, 1
        %v1637 = vsel %vm1502, %v1635, %v1636
        %v1638 = vrot.slane %v1631, 1
        %v1639 = vsel %vm1502, %v1636, %v1638
        %1640 = vrot.lane.b32.xlu0 %v1637, 125
        %v1641 = vpop.permute.xlu0 %1640
        %1642 = vrot.lane.b32.xlu0 %v1639, 125
        %v1643 = vpop.permute.xlu0 %1642
        %v1646 = vadd.f32 %v1626, %v1641
        %v1647 = vadd.f32 %v1627, %v1643
        %v1648 = vstv %s231
        %v1649 = vmul.f32 %v1648, %v1323
        %v1650 = vmul.f32 %v1648, %v1324
        %v1651 = vmul.f32 %v1648, %v1325
        %v1655 = vrot.slane %v1649, 1
        %v1656 = vrot.slane %v1650, 1
        %v1657 = vsel %vm1502, %v1655, %v1656
        %v1658 = vrot.slane %v1651, 1
        %v1659 = vsel %vm1502, %v1656, %v1658
        %1660 = vrot.lane.b32.xlu0 %v1657, 124
        %v1661 = vpop.permute.xlu0 %1660
        %1662 = vrot.lane.b32.xlu0 %v1659, 124
        %v1663 = vpop.permute.xlu0 %1662
        %v1666 = vadd.f32 %v1646, %v1661
        %v1667 = vadd.f32 %v1647, %v1663
        %v1668 = vstv %s280
        %v1669 = vmul.f32 %v1668, %v1326
        %v1670 = vmul.f32 %v1668, %v1327
        %v1671 = vmul.f32 %v1668, %v1328
        %v1675 = vrot.slane %v1669, 1
        %v1676 = vrot.slane %v1670, 1
        %v1677 = vsel %vm1502, %v1675, %v1676
        %v1678 = vrot.slane %v1671, 1
        %v1679 = vsel %vm1502, %v1676, %v1678
        %1680 = vrot.lane.b32.xlu0 %v1677, 124
        %v1681 = vpop.permute.xlu0 %1680
        %1682 = vrot.lane.b32.xlu0 %v1679, 124
        %v1683 = vpop.permute.xlu0 %1682
        %v1686 = vadd.f32 %v1666, %v1681
        %v1687 = vadd.f32 %v1667, %v1683
        %v1688 = vstv %s232
        %v1689 = vmul.f32 %v1688, %v1323
        %v1690 = vmul.f32 %v1688, %v1324
        %v1691 = vmul.f32 %v1688, %v1325
        %v1695 = vrot.slane %v1689, 1
        %v1696 = vrot.slane %v1690, 1
        %v1697 = vsel %vm1502, %v1695, %v1696
        %v1698 = vrot.slane %v1691, 1
        %v1699 = vsel %vm1502, %v1696, %v1698
        %1700 = vrot.lane.b32.xlu0 %v1697, 123
        %v1701 = vpop.permute.xlu0 %1700
        %1702 = vrot.lane.b32.xlu0 %v1699, 123
        %v1703 = vpop.permute.xlu0 %1702
        %v1706 = vadd.f32 %v1686, %v1701
        %v1707 = vadd.f32 %v1687, %v1703
        %v1708 = vstv %s281
        %v1709 = vmul.f32 %v1708, %v1326
        %v1710 = vmul.f32 %v1708, %v1327
        %v1711 = vmul.f32 %v1708, %v1328
        %v1715 = vrot.slane %v1709, 1
        %v1716 = vrot.slane %v1710, 1
        %v1717 = vsel %vm1502, %v1715, %v1716
        %v1718 = vrot.slane %v1711, 1
        %v1719 = vsel %vm1502, %v1716, %v1718
        %1720 = vrot.lane.b32.xlu0 %v1717, 123
        %v1721 = vpop.permute.xlu0 %1720
        %1722 = vrot.lane.b32.xlu0 %v1719, 123
        %v1723 = vpop.permute.xlu0 %1722
        %v1726 = vadd.f32 %v1706, %v1721
        %v1727 = vadd.f32 %v1707, %v1723
        %v1728 = vstv %s233
        %v1729 = vmul.f32 %v1728, %v1323
        %v1730 = vmul.f32 %v1728, %v1324
        %v1731 = vmul.f32 %v1728, %v1325
        %v1735 = vrot.slane %v1729, 1
        %v1736 = vrot.slane %v1730, 1
        %v1737 = vsel %vm1502, %v1735, %v1736
        %v1738 = vrot.slane %v1731, 1
        %v1739 = vsel %vm1502, %v1736, %v1738
        %1740 = vrot.lane.b32.xlu0 %v1737, 122
        %v1741 = vpop.permute.xlu0 %1740
        %1742 = vrot.lane.b32.xlu0 %v1739, 122
        %v1743 = vpop.permute.xlu0 %1742
        %v1746 = vadd.f32 %v1726, %v1741
        %v1747 = vadd.f32 %v1727, %v1743
        %v1748 = vstv %s282
        %v1749 = vmul.f32 %v1748, %v1326
        %v1750 = vmul.f32 %v1748, %v1327
        %v1751 = vmul.f32 %v1748, %v1328
        %v1755 = vrot.slane %v1749, 1
        %v1756 = vrot.slane %v1750, 1
        %v1757 = vsel %vm1502, %v1755, %v1756
        %v1758 = vrot.slane %v1751, 1
        %v1759 = vsel %vm1502, %v1756, %v1758
        %1760 = vrot.lane.b32.xlu0 %v1757, 122
        %v1761 = vpop.permute.xlu0 %1760
        %1762 = vrot.lane.b32.xlu0 %v1759, 122
        %v1763 = vpop.permute.xlu0 %1762
        %v1766 = vadd.f32 %v1746, %v1761
        %v1767 = vadd.f32 %v1747, %v1763
        %v1768 = vstv %s234
        %v1769 = vmul.f32 %v1768, %v1323
        %v1770 = vmul.f32 %v1768, %v1324
        %v1771 = vmul.f32 %v1768, %v1325
        %vm1775 = vcmask 1045504
        %v1776 = vrot.slane %v1769, 2
        %v1777 = vrot.slane %v1770, 2
        %v1778 = vsel %vm1775, %v1776, %v1777
        %v1779 = vrot.slane %v1771, 2
        %v1780 = vsel %vm1775, %v1777, %v1779
        %v1783 = vadd.f32 %v1766, %v1778
        %v1784 = vadd.f32 %v1767, %v1780
        %v1785 = vstv %s283
        %v1786 = vmul.f32 %v1785, %v1326
        %v1787 = vmul.f32 %v1785, %v1327
        %v1788 = vmul.f32 %v1785, %v1328
        %v1792 = vrot.slane %v1786, 2
        %v1793 = vrot.slane %v1787, 2
        %v1794 = vsel %vm1775, %v1792, %v1793
        %v1795 = vrot.slane %v1788, 2
        %v1796 = vsel %vm1775, %v1793, %v1795
        %v1799 = vadd.f32 %v1783, %v1794
        %v1800 = vadd.f32 %v1784, %v1796
        %v1801 = vstv %s235
        %v1802 = vmul.f32 %v1801, %v1323
        %v1803 = vmul.f32 %v1801, %v1324
        %v1804 = vmul.f32 %v1801, %v1325
        %v1808 = vrot.slane %v1802, 2
        %v1809 = vrot.slane %v1803, 2
        %v1810 = vsel %vm1775, %v1808, %v1809
        %v1811 = vrot.slane %v1804, 2
        %v1812 = vsel %vm1775, %v1809, %v1811
        %1813 = vrot.lane.b32.xlu0 %v1810, 127
        %v1814 = vpop.permute.xlu0 %1813
        %1815 = vrot.lane.b32.xlu0 %v1812, 127
        %v1816 = vpop.permute.xlu0 %1815
        %v1819 = vadd.f32 %v1799, %v1814
        %v1820 = vadd.f32 %v1800, %v1816
        %v1821 = vstv %s284
        %v1822 = vmul.f32 %v1821, %v1326
        %v1823 = vmul.f32 %v1821, %v1327
        %v1824 = vmul.f32 %v1821, %v1328
        %v1828 = vrot.slane %v1822, 2
        %v1829 = vrot.slane %v1823, 2
        %v1830 = vsel %vm1775, %v1828, %v1829
        %v1831 = vrot.slane %v1824, 2
        %v1832 = vsel %vm1775, %v1829, %v1831
        %1833 = vrot.lane.b32.xlu0 %v1830, 127
        %v1834 = vpop.permute.xlu0 %1833
        %1835 = vrot.lane.b32.xlu0 %v1832, 127
        %v1836 = vpop.permute.xlu0 %1835
        %v1839 = vadd.f32 %v1819, %v1834
        %v1840 = vadd.f32 %v1820, %v1836
        %v1841 = vstv %s236
        %v1842 = vmul.f32 %v1841, %v1323
        %v1843 = vmul.f32 %v1841, %v1324
        %v1844 = vmul.f32 %v1841, %v1325
        %v1848 = vrot.slane %v1842, 2
        %v1849 = vrot.slane %v1843, 2
        %v1850 = vsel %vm1775, %v1848, %v1849
        %v1851 = vrot.slane %v1844, 2
        %v1852 = vsel %vm1775, %v1849, %v1851
        %1853 = vrot.lane.b32.xlu0 %v1850, 126
        %v1854 = vpop.permute.xlu0 %1853
        %1855 = vrot.lane.b32.xlu0 %v1852, 126
        %v1856 = vpop.permute.xlu0 %1855
        %v1859 = vadd.f32 %v1839, %v1854
        %v1860 = vadd.f32 %v1840, %v1856
        %v1861 = vstv %s285
        %v1862 = vmul.f32 %v1861, %v1326
        %v1863 = vmul.f32 %v1861, %v1327
        %v1864 = vmul.f32 %v1861, %v1328
        %v1868 = vrot.slane %v1862, 2
        %v1869 = vrot.slane %v1863, 2
        %v1870 = vsel %vm1775, %v1868, %v1869
        %v1871 = vrot.slane %v1864, 2
        %v1872 = vsel %vm1775, %v1869, %v1871
        %1873 = vrot.lane.b32.xlu0 %v1870, 126
        %v1874 = vpop.permute.xlu0 %1873
        %1875 = vrot.lane.b32.xlu0 %v1872, 126
        %v1876 = vpop.permute.xlu0 %1875
        %v1879 = vadd.f32 %v1859, %v1874
        %v1880 = vadd.f32 %v1860, %v1876
        %v1881 = vstv %s237
        %v1882 = vmul.f32 %v1881, %v1323
        %v1883 = vmul.f32 %v1881, %v1324
        %v1884 = vmul.f32 %v1881, %v1325
        %v1888 = vrot.slane %v1882, 2
        %v1889 = vrot.slane %v1883, 2
        %v1890 = vsel %vm1775, %v1888, %v1889
        %v1891 = vrot.slane %v1884, 2
        %v1892 = vsel %vm1775, %v1889, %v1891
        %1893 = vrot.lane.b32.xlu0 %v1890, 125
        %v1894 = vpop.permute.xlu0 %1893
        %1895 = vrot.lane.b32.xlu0 %v1892, 125
        %v1896 = vpop.permute.xlu0 %1895
        %v1899 = vadd.f32 %v1879, %v1894
        %v1900 = vadd.f32 %v1880, %v1896
        %v1901 = vstv %s286
        %v1902 = vmul.f32 %v1901, %v1326
        %v1903 = vmul.f32 %v1901, %v1327
        %v1904 = vmul.f32 %v1901, %v1328
        %v1908 = vrot.slane %v1902, 2
        %v1909 = vrot.slane %v1903, 2
        %v1910 = vsel %vm1775, %v1908, %v1909
        %v1911 = vrot.slane %v1904, 2
        %v1912 = vsel %vm1775, %v1909, %v1911
        %1913 = vrot.lane.b32.xlu0 %v1910, 125
        %v1914 = vpop.permute.xlu0 %1913
        %1915 = vrot.lane.b32.xlu0 %v1912, 125
        %v1916 = vpop.permute.xlu0 %1915
        %v1919 = vadd.f32 %v1899, %v1914
        %v1920 = vadd.f32 %v1900, %v1916
        %v1921 = vstv %s238
        %v1922 = vmul.f32 %v1921, %v1323
        %v1923 = vmul.f32 %v1921, %v1324
        %v1924 = vmul.f32 %v1921, %v1325
        %v1928 = vrot.slane %v1922, 2
        %v1929 = vrot.slane %v1923, 2
        %v1930 = vsel %vm1775, %v1928, %v1929
        %v1931 = vrot.slane %v1924, 2
        %v1932 = vsel %vm1775, %v1929, %v1931
        %1933 = vrot.lane.b32.xlu0 %v1930, 124
        %v1934 = vpop.permute.xlu0 %1933
        %1935 = vrot.lane.b32.xlu0 %v1932, 124
        %v1936 = vpop.permute.xlu0 %1935
        %v1939 = vadd.f32 %v1919, %v1934
        %v1940 = vadd.f32 %v1920, %v1936
        %v1941 = vstv %s287
        %v1942 = vmul.f32 %v1941, %v1326
        %v1943 = vmul.f32 %v1941, %v1327
        %v1944 = vmul.f32 %v1941, %v1328
        %v1948 = vrot.slane %v1942, 2
        %v1949 = vrot.slane %v1943, 2
        %v1950 = vsel %vm1775, %v1948, %v1949
        %v1951 = vrot.slane %v1944, 2
        %v1952 = vsel %vm1775, %v1949, %v1951
        %1953 = vrot.lane.b32.xlu0 %v1950, 124
        %v1954 = vpop.permute.xlu0 %1953
        %1955 = vrot.lane.b32.xlu0 %v1952, 124
        %v1956 = vpop.permute.xlu0 %1955
        %v1959 = vadd.f32 %v1939, %v1954
        %v1960 = vadd.f32 %v1940, %v1956
        %v1961 = vstv %s239
        %v1962 = vmul.f32 %v1961, %v1323
        %v1963 = vmul.f32 %v1961, %v1324
        %v1964 = vmul.f32 %v1961, %v1325
        %v1968 = vrot.slane %v1962, 2
        %v1969 = vrot.slane %v1963, 2
        %v1970 = vsel %vm1775, %v1968, %v1969
        %v1971 = vrot.slane %v1964, 2
        %v1972 = vsel %vm1775, %v1969, %v1971
        %1973 = vrot.lane.b32.xlu0 %v1970, 123
        %v1974 = vpop.permute.xlu0 %1973
        %1975 = vrot.lane.b32.xlu0 %v1972, 123
        %v1976 = vpop.permute.xlu0 %1975
        %v1979 = vadd.f32 %v1959, %v1974
        %v1980 = vadd.f32 %v1960, %v1976
        %v1981 = vstv %s288
        %v1982 = vmul.f32 %v1981, %v1326
        %v1983 = vmul.f32 %v1981, %v1327
        %v1984 = vmul.f32 %v1981, %v1328
        %v1988 = vrot.slane %v1982, 2
        %v1989 = vrot.slane %v1983, 2
        %v1990 = vsel %vm1775, %v1988, %v1989
        %v1991 = vrot.slane %v1984, 2
        %v1992 = vsel %vm1775, %v1989, %v1991
        %1993 = vrot.lane.b32.xlu0 %v1990, 123
        %v1994 = vpop.permute.xlu0 %1993
        %1995 = vrot.lane.b32.xlu0 %v1992, 123
        %v1996 = vpop.permute.xlu0 %1995
        %v1999 = vadd.f32 %v1979, %v1994
        %v2000 = vadd.f32 %v1980, %v1996
        %v2001 = vstv %s240
        %v2002 = vmul.f32 %v2001, %v1323
        %v2003 = vmul.f32 %v2001, %v1324
        %v2004 = vmul.f32 %v2001, %v1325
        %v2008 = vrot.slane %v2002, 2
        %v2009 = vrot.slane %v2003, 2
        %v2010 = vsel %vm1775, %v2008, %v2009
        %v2011 = vrot.slane %v2004, 2
        %v2012 = vsel %vm1775, %v2009, %v2011
        %2013 = vrot.lane.b32.xlu0 %v2010, 122
        %v2014 = vpop.permute.xlu0 %2013
        %2015 = vrot.lane.b32.xlu0 %v2012, 122
        %v2016 = vpop.permute.xlu0 %2015
        %v2019 = vadd.f32 %v1999, %v2014
        %v2020 = vadd.f32 %v2000, %v2016
        %v2021 = vstv %s289
        %v2022 = vmul.f32 %v2021, %v1326
        %v2023 = vmul.f32 %v2021, %v1327
        %v2024 = vmul.f32 %v2021, %v1328
        %v2028 = vrot.slane %v2022, 2
        %v2029 = vrot.slane %v2023, 2
        %v2030 = vsel %vm1775, %v2028, %v2029
        %v2031 = vrot.slane %v2024, 2
        %v2032 = vsel %vm1775, %v2029, %v2031
        %2033 = vrot.lane.b32.xlu0 %v2030, 122
        %v2034 = vpop.permute.xlu0 %2033
        %2035 = vrot.lane.b32.xlu0 %v2032, 122
        %v2036 = vpop.permute.xlu0 %2035
        %v2039 = vadd.f32 %v2019, %v2034
        %v2040 = vadd.f32 %v2020, %v2036
        %v2041 = vstv %s241
        %v2042 = vmul.f32 %v2041, %v1323
        %v2043 = vmul.f32 %v2041, %v1324
        %v2044 = vmul.f32 %v2041, %v1325
        %vm2048 = vcmask 1044480
        %v2049 = vrot.slane %v2042, 3
        %v2050 = vrot.slane %v2043, 3
        %v2051 = vsel %vm2048, %v2049, %v2050
        %v2052 = vrot.slane %v2044, 3
        %v2053 = vsel %vm2048, %v2050, %v2052
        %v2056 = vadd.f32 %v2039, %v2051
        %v2057 = vadd.f32 %v2040, %v2053
        %v2058 = vstv %s290
        %v2059 = vmul.f32 %v2058, %v1326
        %v2060 = vmul.f32 %v2058, %v1327
        %v2061 = vmul.f32 %v2058, %v1328
        %v2065 = vrot.slane %v2059, 3
        %v2066 = vrot.slane %v2060, 3
        %v2067 = vsel %vm2048, %v2065, %v2066
        %v2068 = vrot.slane %v2061, 3
        %v2069 = vsel %vm2048, %v2066, %v2068
        %v2072 = vadd.f32 %v2056, %v2067
        %v2073 = vadd.f32 %v2057, %v2069
        %v2074 = vstv %s242
        %v2075 = vmul.f32 %v2074, %v1323
        %v2076 = vmul.f32 %v2074, %v1324
        %v2077 = vmul.f32 %v2074, %v1325
        %v2081 = vrot.slane %v2075, 3
        %v2082 = vrot.slane %v2076, 3
        %v2083 = vsel %vm2048, %v2081, %v2082
        %v2084 = vrot.slane %v2077, 3
        %v2085 = vsel %vm2048, %v2082, %v2084
        %2086 = vrot.lane.b32.xlu0 %v2083, 127
        %v2087 = vpop.permute.xlu0 %2086
        %2088 = vrot.lane.b32.xlu0 %v2085, 127
        %v2089 = vpop.permute.xlu0 %2088
        %v2092 = vadd.f32 %v2072, %v2087
        %v2093 = vadd.f32 %v2073, %v2089
        %v2094 = vstv %s291
        %v2095 = vmul.f32 %v2094, %v1326
        %v2096 = vmul.f32 %v2094, %v1327
        %v2097 = vmul.f32 %v2094, %v1328
        %v2101 = vrot.slane %v2095, 3
        %v2102 = vrot.slane %v2096, 3
        %v2103 = vsel %vm2048, %v2101, %v2102
        %v2104 = vrot.slane %v2097, 3
        %v2105 = vsel %vm2048, %v2102, %v2104
        %2106 = vrot.lane.b32.xlu0 %v2103, 127
        %v2107 = vpop.permute.xlu0 %2106
        %2108 = vrot.lane.b32.xlu0 %v2105, 127
        %v2109 = vpop.permute.xlu0 %2108
        %v2112 = vadd.f32 %v2092, %v2107
        %v2113 = vadd.f32 %v2093, %v2109
        %v2114 = vstv %s243
        %v2115 = vmul.f32 %v2114, %v1323
        %v2116 = vmul.f32 %v2114, %v1324
        %v2117 = vmul.f32 %v2114, %v1325
        %v2121 = vrot.slane %v2115, 3
        %v2122 = vrot.slane %v2116, 3
        %v2123 = vsel %vm2048, %v2121, %v2122
        %v2124 = vrot.slane %v2117, 3
        %v2125 = vsel %vm2048, %v2122, %v2124
        %2126 = vrot.lane.b32.xlu0 %v2123, 126
        %v2127 = vpop.permute.xlu0 %2126
        %2128 = vrot.lane.b32.xlu0 %v2125, 126
        %v2129 = vpop.permute.xlu0 %2128
        %v2132 = vadd.f32 %v2112, %v2127
        %v2133 = vadd.f32 %v2113, %v2129
        %v2134 = vstv %s292
        %v2135 = vmul.f32 %v2134, %v1326
        %v2136 = vmul.f32 %v2134, %v1327
        %v2137 = vmul.f32 %v2134, %v1328
        %v2141 = vrot.slane %v2135, 3
        %v2142 = vrot.slane %v2136, 3
        %v2143 = vsel %vm2048, %v2141, %v2142
        %v2144 = vrot.slane %v2137, 3
        %v2145 = vsel %vm2048, %v2142, %v2144
        %2146 = vrot.lane.b32.xlu0 %v2143, 126
        %v2147 = vpop.permute.xlu0 %2146
        %2148 = vrot.lane.b32.xlu0 %v2145, 126
        %v2149 = vpop.permute.xlu0 %2148
        %v2152 = vadd.f32 %v2132, %v2147
        %v2153 = vadd.f32 %v2133, %v2149
        %v2154 = vstv %s244
        %v2155 = vmul.f32 %v2154, %v1323
        %v2156 = vmul.f32 %v2154, %v1324
        %v2157 = vmul.f32 %v2154, %v1325
        %v2161 = vrot.slane %v2155, 3
        %v2162 = vrot.slane %v2156, 3
        %v2163 = vsel %vm2048, %v2161, %v2162
        %v2164 = vrot.slane %v2157, 3
        %v2165 = vsel %vm2048, %v2162, %v2164
        %2166 = vrot.lane.b32.xlu0 %v2163, 125
        %v2167 = vpop.permute.xlu0 %2166
        %2168 = vrot.lane.b32.xlu0 %v2165, 125
        %v2169 = vpop.permute.xlu0 %2168
        %v2172 = vadd.f32 %v2152, %v2167
        %v2173 = vadd.f32 %v2153, %v2169
        %v2174 = vstv %s293
        %v2175 = vmul.f32 %v2174, %v1326
        %v2176 = vmul.f32 %v2174, %v1327
        %v2177 = vmul.f32 %v2174, %v1328
        %v2181 = vrot.slane %v2175, 3
        %v2182 = vrot.slane %v2176, 3
        %v2183 = vsel %vm2048, %v2181, %v2182
        %v2184 = vrot.slane %v2177, 3
        %v2185 = vsel %vm2048, %v2182, %v2184
        %2186 = vrot.lane.b32.xlu0 %v2183, 125
        %v2187 = vpop.permute.xlu0 %2186
        %2188 = vrot.lane.b32.xlu0 %v2185, 125
        %v2189 = vpop.permute.xlu0 %2188
        %v2192 = vadd.f32 %v2172, %v2187
        %v2193 = vadd.f32 %v2173, %v2189
        %v2194 = vstv %s245
        %v2195 = vmul.f32 %v2194, %v1323
        %v2196 = vmul.f32 %v2194, %v1324
        %v2197 = vmul.f32 %v2194, %v1325
        %v2201 = vrot.slane %v2195, 3
        %v2202 = vrot.slane %v2196, 3
        %v2203 = vsel %vm2048, %v2201, %v2202
        %v2204 = vrot.slane %v2197, 3
        %v2205 = vsel %vm2048, %v2202, %v2204
        %2206 = vrot.lane.b32.xlu0 %v2203, 124
        %v2207 = vpop.permute.xlu0 %2206
        %2208 = vrot.lane.b32.xlu0 %v2205, 124
        %v2209 = vpop.permute.xlu0 %2208
        %v2212 = vadd.f32 %v2192, %v2207
        %v2213 = vadd.f32 %v2193, %v2209
        %v2214 = vstv %s294
        %v2215 = vmul.f32 %v2214, %v1326
        %v2216 = vmul.f32 %v2214, %v1327
        %v2217 = vmul.f32 %v2214, %v1328
        %v2221 = vrot.slane %v2215, 3
        %v2222 = vrot.slane %v2216, 3
        %v2223 = vsel %vm2048, %v2221, %v2222
        %v2224 = vrot.slane %v2217, 3
        %v2225 = vsel %vm2048, %v2222, %v2224
        %2226 = vrot.lane.b32.xlu0 %v2223, 124
        %v2227 = vpop.permute.xlu0 %2226
        %2228 = vrot.lane.b32.xlu0 %v2225, 124
        %v2229 = vpop.permute.xlu0 %2228
        %v2232 = vadd.f32 %v2212, %v2227
        %v2233 = vadd.f32 %v2213, %v2229
        %v2234 = vstv %s246
        %v2235 = vmul.f32 %v2234, %v1323
        %v2236 = vmul.f32 %v2234, %v1324
        %v2237 = vmul.f32 %v2234, %v1325
        %v2241 = vrot.slane %v2235, 3
        %v2242 = vrot.slane %v2236, 3
        %v2243 = vsel %vm2048, %v2241, %v2242
        %v2244 = vrot.slane %v2237, 3
        %v2245 = vsel %vm2048, %v2242, %v2244
        %2246 = vrot.lane.b32.xlu0 %v2243, 123
        %v2247 = vpop.permute.xlu0 %2246
        %2248 = vrot.lane.b32.xlu0 %v2245, 123
        %v2249 = vpop.permute.xlu0 %2248
        %v2252 = vadd.f32 %v2232, %v2247
        %v2253 = vadd.f32 %v2233, %v2249
        %v2254 = vstv %s295
        %v2255 = vmul.f32 %v2254, %v1326
        %v2256 = vmul.f32 %v2254, %v1327
        %v2257 = vmul.f32 %v2254, %v1328
        %v2261 = vrot.slane %v2255, 3
        %v2262 = vrot.slane %v2256, 3
        %v2263 = vsel %vm2048, %v2261, %v2262
        %v2264 = vrot.slane %v2257, 3
        %v2265 = vsel %vm2048, %v2262, %v2264
        %2266 = vrot.lane.b32.xlu0 %v2263, 123
        %v2267 = vpop.permute.xlu0 %2266
        %2268 = vrot.lane.b32.xlu0 %v2265, 123
        %v2269 = vpop.permute.xlu0 %2268
        %v2272 = vadd.f32 %v2252, %v2267
        %v2273 = vadd.f32 %v2253, %v2269
        %v2274 = vstv %s247
        %v2275 = vmul.f32 %v2274, %v1323
        %v2276 = vmul.f32 %v2274, %v1324
        %v2277 = vmul.f32 %v2274, %v1325
        %v2281 = vrot.slane %v2275, 3
        %v2282 = vrot.slane %v2276, 3
        %v2283 = vsel %vm2048, %v2281, %v2282
        %v2284 = vrot.slane %v2277, 3
        %v2285 = vsel %vm2048, %v2282, %v2284
        %2286 = vrot.lane.b32.xlu0 %v2283, 122
        %v2287 = vpop.permute.xlu0 %2286
        %2288 = vrot.lane.b32.xlu0 %v2285, 122
        %v2289 = vpop.permute.xlu0 %2288
        %v2292 = vadd.f32 %v2272, %v2287
        %v2293 = vadd.f32 %v2273, %v2289
        %v2294 = vstv %s296
        %v2295 = vmul.f32 %v2294, %v1326
        %v2296 = vmul.f32 %v2294, %v1327
        %v2297 = vmul.f32 %v2294, %v1328
        %v2301 = vrot.slane %v2295, 3
        %v2302 = vrot.slane %v2296, 3
        %v2303 = vsel %vm2048, %v2301, %v2302
        %v2304 = vrot.slane %v2297, 3
        %v2305 = vsel %vm2048, %v2302, %v2304
        %2306 = vrot.lane.b32.xlu0 %v2303, 122
        %v2307 = vpop.permute.xlu0 %2306
        %2308 = vrot.lane.b32.xlu0 %v2305, 122
        %v2309 = vpop.permute.xlu0 %2308
        %v2312 = vadd.f32 %v2292, %v2307
        %v2313 = vadd.f32 %v2293, %v2309
        %v2314 = vstv %s248
        %v2315 = vmul.f32 %v2314, %v1323
        %v2316 = vmul.f32 %v2314, %v1324
        %v2317 = vmul.f32 %v2314, %v1325
        %v2321 = vrot.slane %v2315, 4
        %v2322 = vrot.slane %v2316, 4
        %v2323 = vsel %vm501, %v2321, %v2322
        %v2324 = vrot.slane %v2317, 4
        %v2325 = vsel %vm501, %v2322, %v2324
        %v2328 = vadd.f32 %v2312, %v2323
        %v2329 = vadd.f32 %v2313, %v2325
        %v2330 = vstv %s297
        %v2331 = vmul.f32 %v2330, %v1326
        %v2332 = vmul.f32 %v2330, %v1327
        %v2333 = vmul.f32 %v2330, %v1328
        %v2337 = vrot.slane %v2331, 4
        %v2338 = vrot.slane %v2332, 4
        %v2339 = vsel %vm501, %v2337, %v2338
        %v2340 = vrot.slane %v2333, 4
        %v2341 = vsel %vm501, %v2338, %v2340
        %v2344 = vadd.f32 %v2328, %v2339
        %v2345 = vadd.f32 %v2329, %v2341
        %v2346 = vstv %s249
        %v2347 = vmul.f32 %v2346, %v1323
        %v2348 = vmul.f32 %v2346, %v1324
        %v2349 = vmul.f32 %v2346, %v1325
        %v2353 = vrot.slane %v2347, 4
        %v2354 = vrot.slane %v2348, 4
        %v2355 = vsel %vm501, %v2353, %v2354
        %v2356 = vrot.slane %v2349, 4
        %v2357 = vsel %vm501, %v2354, %v2356
        %2358 = vrot.lane.b32.xlu0 %v2355, 127
        %v2359 = vpop.permute.xlu0 %2358
        %2360 = vrot.lane.b32.xlu0 %v2357, 127
        %v2361 = vpop.permute.xlu0 %2360
        %v2364 = vadd.f32 %v2344, %v2359
        %v2365 = vadd.f32 %v2345, %v2361
        %v2366 = vstv %s298
        %v2367 = vmul.f32 %v2366, %v1326
        %v2368 = vmul.f32 %v2366, %v1327
        %v2369 = vmul.f32 %v2366, %v1328
        %v2373 = vrot.slane %v2367, 4
        %v2374 = vrot.slane %v2368, 4
        %v2375 = vsel %vm501, %v2373, %v2374
        %v2376 = vrot.slane %v2369, 4
        %v2377 = vsel %vm501, %v2374, %v2376
        %2378 = vrot.lane.b32.xlu0 %v2375, 127
        %v2379 = vpop.permute.xlu0 %2378
        %2380 = vrot.lane.b32.xlu0 %v2377, 127
        %v2381 = vpop.permute.xlu0 %2380
        %v2384 = vadd.f32 %v2364, %v2379
        %v2385 = vadd.f32 %v2365, %v2381
        %v2386 = vstv %s250
        %v2387 = vmul.f32 %v2386, %v1323
        %v2388 = vmul.f32 %v2386, %v1324
        %v2389 = vmul.f32 %v2386, %v1325
        %v2393 = vrot.slane %v2387, 4
        %v2394 = vrot.slane %v2388, 4
        %v2395 = vsel %vm501, %v2393, %v2394
        %v2396 = vrot.slane %v2389, 4
        %v2397 = vsel %vm501, %v2394, %v2396
        %2398 = vrot.lane.b32.xlu0 %v2395, 126
        %v2399 = vpop.permute.xlu0 %2398
        %2400 = vrot.lane.b32.xlu0 %v2397, 126
        %v2401 = vpop.permute.xlu0 %2400
        %v2404 = vadd.f32 %v2384, %v2399
        %v2405 = vadd.f32 %v2385, %v2401
        %v2406 = vstv %s299
        %v2407 = vmul.f32 %v2406, %v1326
        %v2408 = vmul.f32 %v2406, %v1327
        %v2409 = vmul.f32 %v2406, %v1328
        %v2413 = vrot.slane %v2407, 4
        %v2414 = vrot.slane %v2408, 4
        %v2415 = vsel %vm501, %v2413, %v2414
        %v2416 = vrot.slane %v2409, 4
        %v2417 = vsel %vm501, %v2414, %v2416
        %2418 = vrot.lane.b32.xlu0 %v2415, 126
        %v2419 = vpop.permute.xlu0 %2418
        %2420 = vrot.lane.b32.xlu0 %v2417, 126
        %v2421 = vpop.permute.xlu0 %2420
        %v2424 = vadd.f32 %v2404, %v2419
        %v2425 = vadd.f32 %v2405, %v2421
        %v2426 = vstv %s251
        %v2427 = vmul.f32 %v2426, %v1323
        %v2428 = vmul.f32 %v2426, %v1324
        %v2429 = vmul.f32 %v2426, %v1325
        %v2433 = vrot.slane %v2427, 4
        %v2434 = vrot.slane %v2428, 4
        %v2435 = vsel %vm501, %v2433, %v2434
        %v2436 = vrot.slane %v2429, 4
        %v2437 = vsel %vm501, %v2434, %v2436
        %2438 = vrot.lane.b32.xlu0 %v2435, 125
        %v2439 = vpop.permute.xlu0 %2438
        %2440 = vrot.lane.b32.xlu0 %v2437, 125
        %v2441 = vpop.permute.xlu0 %2440
        %v2444 = vadd.f32 %v2424, %v2439
        %v2445 = vadd.f32 %v2425, %v2441
        %v2446 = vstv %s300
        %v2447 = vmul.f32 %v2446, %v1326
        %v2448 = vmul.f32 %v2446, %v1327
        %v2449 = vmul.f32 %v2446, %v1328
        %v2453 = vrot.slane %v2447, 4
        %v2454 = vrot.slane %v2448, 4
        %v2455 = vsel %vm501, %v2453, %v2454
        %v2456 = vrot.slane %v2449, 4
        %v2457 = vsel %vm501, %v2454, %v2456
        %2458 = vrot.lane.b32.xlu0 %v2455, 125
        %v2459 = vpop.permute.xlu0 %2458
        %2460 = vrot.lane.b32.xlu0 %v2457, 125
        %v2461 = vpop.permute.xlu0 %2460
        %v2464 = vadd.f32 %v2444, %v2459
        %v2465 = vadd.f32 %v2445, %v2461
        %v2466 = vstv %s252
        %v2467 = vmul.f32 %v2466, %v1323
        %v2468 = vmul.f32 %v2466, %v1324
        %v2469 = vmul.f32 %v2466, %v1325
        %v2473 = vrot.slane %v2467, 4
        %v2474 = vrot.slane %v2468, 4
        %v2475 = vsel %vm501, %v2473, %v2474
        %v2476 = vrot.slane %v2469, 4
        %v2477 = vsel %vm501, %v2474, %v2476
        %2478 = vrot.lane.b32.xlu0 %v2475, 124
        %v2479 = vpop.permute.xlu0 %2478
        %2480 = vrot.lane.b32.xlu0 %v2477, 124
        %v2481 = vpop.permute.xlu0 %2480
        %v2484 = vadd.f32 %v2464, %v2479
        %v2485 = vadd.f32 %v2465, %v2481
        %v2486 = vstv %s301
        %v2487 = vmul.f32 %v2486, %v1326
        %v2488 = vmul.f32 %v2486, %v1327
        %v2489 = vmul.f32 %v2486, %v1328
        %v2493 = vrot.slane %v2487, 4
        %v2494 = vrot.slane %v2488, 4
        %v2495 = vsel %vm501, %v2493, %v2494
        %v2496 = vrot.slane %v2489, 4
        %v2497 = vsel %vm501, %v2494, %v2496
        %2498 = vrot.lane.b32.xlu0 %v2495, 124
        %v2499 = vpop.permute.xlu0 %2498
        %2500 = vrot.lane.b32.xlu0 %v2497, 124
        %v2501 = vpop.permute.xlu0 %2500
        %v2504 = vadd.f32 %v2484, %v2499
        %v2505 = vadd.f32 %v2485, %v2501
        %v2506 = vstv %s253
        %v2507 = vmul.f32 %v2506, %v1323
        %v2508 = vmul.f32 %v2506, %v1324
        %v2509 = vmul.f32 %v2506, %v1325
        %v2513 = vrot.slane %v2507, 4
        %v2514 = vrot.slane %v2508, 4
        %v2515 = vsel %vm501, %v2513, %v2514
        %v2516 = vrot.slane %v2509, 4
        %v2517 = vsel %vm501, %v2514, %v2516
        %2518 = vrot.lane.b32.xlu0 %v2515, 123
        %v2519 = vpop.permute.xlu0 %2518
        %2520 = vrot.lane.b32.xlu0 %v2517, 123
        %v2521 = vpop.permute.xlu0 %2520
        %v2524 = vadd.f32 %v2504, %v2519
        %v2525 = vadd.f32 %v2505, %v2521
        %v2526 = vstv %s302
        %v2527 = vmul.f32 %v2526, %v1326
        %v2528 = vmul.f32 %v2526, %v1327
        %v2529 = vmul.f32 %v2526, %v1328
        %v2533 = vrot.slane %v2527, 4
        %v2534 = vrot.slane %v2528, 4
        %v2535 = vsel %vm501, %v2533, %v2534
        %v2536 = vrot.slane %v2529, 4
        %v2537 = vsel %vm501, %v2534, %v2536
        %2538 = vrot.lane.b32.xlu0 %v2535, 123
        %v2539 = vpop.permute.xlu0 %2538
        %2540 = vrot.lane.b32.xlu0 %v2537, 123
        %v2541 = vpop.permute.xlu0 %2540
        %v2544 = vadd.f32 %v2524, %v2539
        %v2545 = vadd.f32 %v2525, %v2541
        %v2546 = vstv %s254
        %v2547 = vmul.f32 %v2546, %v1323
        %v2548 = vmul.f32 %v2546, %v1324
        %v2549 = vmul.f32 %v2546, %v1325
        %v2553 = vrot.slane %v2547, 4
        %v2554 = vrot.slane %v2548, 4
        %v2555 = vsel %vm501, %v2553, %v2554
        %v2556 = vrot.slane %v2549, 4
        %v2557 = vsel %vm501, %v2554, %v2556
        %2558 = vrot.lane.b32.xlu0 %v2555, 122
        %v2559 = vpop.permute.xlu0 %2558
        %2560 = vrot.lane.b32.xlu0 %v2557, 122
        %v2561 = vpop.permute.xlu0 %2560
        %v2564 = vadd.f32 %v2544, %v2559
        %v2565 = vadd.f32 %v2545, %v2561
        %v2566 = vstv %s303
        %v2567 = vmul.f32 %v2566, %v1326
        %v2568 = vmul.f32 %v2566, %v1327
        %v2569 = vmul.f32 %v2566, %v1328
        %v2573 = vrot.slane %v2567, 4
        %v2574 = vrot.slane %v2568, 4
        %v2575 = vsel %vm501, %v2573, %v2574
        %v2576 = vrot.slane %v2569, 4
        %v2577 = vsel %vm501, %v2574, %v2576
        %2578 = vrot.lane.b32.xlu0 %v2575, 122
        %v2579 = vpop.permute.xlu0 %2578
        %2580 = vrot.lane.b32.xlu0 %v2577, 122
        %v2581 = vpop.permute.xlu0 %2580
        %v2584 = vadd.f32 %v2564, %v2579
        %v2585 = vadd.f32 %v2565, %v2581
        %v2586 = vstv %s255
        %v2587 = vmul.f32 %v2586, %v1323
        %v2588 = vmul.f32 %v2586, %v1324
        %v2589 = vmul.f32 %v2586, %v1325
        %vm2593 = vcmask 1042432
        %v2594 = vrot.slane %v2587, 5
        %v2595 = vrot.slane %v2588, 5
        %v2596 = vsel %vm2593, %v2594, %v2595
        %v2597 = vrot.slane %v2589, 5
        %v2598 = vsel %vm2593, %v2595, %v2597
        %v2601 = vadd.f32 %v2584, %v2596
        %v2602 = vadd.f32 %v2585, %v2598
        %v2603 = vstv %s304
        %v2604 = vmul.f32 %v2603, %v1326
        %v2605 = vmul.f32 %v2603, %v1327
        %v2606 = vmul.f32 %v2603, %v1328
        %v2610 = vrot.slane %v2604, 5
        %v2611 = vrot.slane %v2605, 5
        %v2612 = vsel %vm2593, %v2610, %v2611
        %v2613 = vrot.slane %v2606, 5
        %v2614 = vsel %vm2593, %v2611, %v2613
        %v2617 = vadd.f32 %v2601, %v2612
        %v2618 = vadd.f32 %v2602, %v2614
        %v2619 = vstv %s256
        %v2620 = vmul.f32 %v2619, %v1323
        %v2621 = vmul.f32 %v2619, %v1324
        %v2622 = vmul.f32 %v2619, %v1325
        %v2626 = vrot.slane %v2620, 5
        %v2627 = vrot.slane %v2621, 5
        %v2628 = vsel %vm2593, %v2626, %v2627
        %v2629 = vrot.slane %v2622, 5
        %v2630 = vsel %vm2593, %v2627, %v2629
        %2631 = vrot.lane.b32.xlu0 %v2628, 127
        %v2632 = vpop.permute.xlu0 %2631
        %2633 = vrot.lane.b32.xlu0 %v2630, 127
        %v2634 = vpop.permute.xlu0 %2633
        %v2637 = vadd.f32 %v2617, %v2632
        %v2638 = vadd.f32 %v2618, %v2634
        %v2639 = vstv %s305
        %v2640 = vmul.f32 %v2639, %v1326
        %v2641 = vmul.f32 %v2639, %v1327
        %v2642 = vmul.f32 %v2639, %v1328
        %v2646 = vrot.slane %v2640, 5
        %v2647 = vrot.slane %v2641, 5
        %v2648 = vsel %vm2593, %v2646, %v2647
        %v2649 = vrot.slane %v2642, 5
        %v2650 = vsel %vm2593, %v2647, %v2649
        %2651 = vrot.lane.b32.xlu0 %v2648, 127
        %v2652 = vpop.permute.xlu0 %2651
        %2653 = vrot.lane.b32.xlu0 %v2650, 127
        %v2654 = vpop.permute.xlu0 %2653
        %v2657 = vadd.f32 %v2637, %v2652
        %v2658 = vadd.f32 %v2638, %v2654
        %v2659 = vstv %s257
        %v2660 = vmul.f32 %v2659, %v1323
        %v2661 = vmul.f32 %v2659, %v1324
        %v2662 = vmul.f32 %v2659, %v1325
        %v2666 = vrot.slane %v2660, 5
        %v2667 = vrot.slane %v2661, 5
        %v2668 = vsel %vm2593, %v2666, %v2667
        %v2669 = vrot.slane %v2662, 5
        %v2670 = vsel %vm2593, %v2667, %v2669
        %2671 = vrot.lane.b32.xlu0 %v2668, 126
        %v2672 = vpop.permute.xlu0 %2671
        %2673 = vrot.lane.b32.xlu0 %v2670, 126
        %v2674 = vpop.permute.xlu0 %2673
        %v2677 = vadd.f32 %v2657, %v2672
        %v2678 = vadd.f32 %v2658, %v2674
        %v2679 = vstv %s306
        %v2680 = vmul.f32 %v2679, %v1326
        %v2681 = vmul.f32 %v2679, %v1327
        %v2682 = vmul.f32 %v2679, %v1328
        %v2686 = vrot.slane %v2680, 5
        %v2687 = vrot.slane %v2681, 5
        %v2688 = vsel %vm2593, %v2686, %v2687
        %v2689 = vrot.slane %v2682, 5
        %v2690 = vsel %vm2593, %v2687, %v2689
        %2691 = vrot.lane.b32.xlu0 %v2688, 126
        %v2692 = vpop.permute.xlu0 %2691
        %2693 = vrot.lane.b32.xlu0 %v2690, 126
        %v2694 = vpop.permute.xlu0 %2693
        %v2697 = vadd.f32 %v2677, %v2692
        %v2698 = vadd.f32 %v2678, %v2694
        %v2699 = vstv %s258
        %v2700 = vmul.f32 %v2699, %v1323
        %v2701 = vmul.f32 %v2699, %v1324
        %v2702 = vmul.f32 %v2699, %v1325
        %v2706 = vrot.slane %v2700, 5
        %v2707 = vrot.slane %v2701, 5
        %v2708 = vsel %vm2593, %v2706, %v2707
        %v2709 = vrot.slane %v2702, 5
        %v2710 = vsel %vm2593, %v2707, %v2709
        %2711 = vrot.lane.b32.xlu0 %v2708, 125
        %v2712 = vpop.permute.xlu0 %2711
        %2713 = vrot.lane.b32.xlu0 %v2710, 125
        %v2714 = vpop.permute.xlu0 %2713
        %v2717 = vadd.f32 %v2697, %v2712
        %v2718 = vadd.f32 %v2698, %v2714
        %v2719 = vstv %s307
        %v2720 = vmul.f32 %v2719, %v1326
        %v2721 = vmul.f32 %v2719, %v1327
        %v2722 = vmul.f32 %v2719, %v1328
        %v2726 = vrot.slane %v2720, 5
        %v2727 = vrot.slane %v2721, 5
        %v2728 = vsel %vm2593, %v2726, %v2727
        %v2729 = vrot.slane %v2722, 5
        %v2730 = vsel %vm2593, %v2727, %v2729
        %2731 = vrot.lane.b32.xlu0 %v2728, 125
        %v2732 = vpop.permute.xlu0 %2731
        %2733 = vrot.lane.b32.xlu0 %v2730, 125
        %v2734 = vpop.permute.xlu0 %2733
        %v2737 = vadd.f32 %v2717, %v2732
        %v2738 = vadd.f32 %v2718, %v2734
        %v2739 = vstv %s259
        %v2740 = vmul.f32 %v2739, %v1323
        %v2741 = vmul.f32 %v2739, %v1324
        %v2742 = vmul.f32 %v2739, %v1325
        %v2746 = vrot.slane %v2740, 5
        %v2747 = vrot.slane %v2741, 5
        %v2748 = vsel %vm2593, %v2746, %v2747
        %v2749 = vrot.slane %v2742, 5
        %v2750 = vsel %vm2593, %v2747, %v2749
        %2751 = vrot.lane.b32.xlu0 %v2748, 124
        %v2752 = vpop.permute.xlu0 %2751
        %2753 = vrot.lane.b32.xlu0 %v2750, 124
        %v2754 = vpop.permute.xlu0 %2753
        %v2757 = vadd.f32 %v2737, %v2752
        %v2758 = vadd.f32 %v2738, %v2754
        %v2759 = vstv %s308
        %v2760 = vmul.f32 %v2759, %v1326
        %v2761 = vmul.f32 %v2759, %v1327
        %v2762 = vmul.f32 %v2759, %v1328
        %v2766 = vrot.slane %v2760, 5
        %v2767 = vrot.slane %v2761, 5
        %v2768 = vsel %vm2593, %v2766, %v2767
        %v2769 = vrot.slane %v2762, 5
        %v2770 = vsel %vm2593, %v2767, %v2769
        %2771 = vrot.lane.b32.xlu0 %v2768, 124
        %v2772 = vpop.permute.xlu0 %2771
        %2773 = vrot.lane.b32.xlu0 %v2770, 124
        %v2774 = vpop.permute.xlu0 %2773
        %v2777 = vadd.f32 %v2757, %v2772
        %v2778 = vadd.f32 %v2758, %v2774
        %v2779 = vstv %s260
        %v2780 = vmul.f32 %v2779, %v1323
        %v2781 = vmul.f32 %v2779, %v1324
        %v2782 = vmul.f32 %v2779, %v1325
        %v2786 = vrot.slane %v2780, 5
        %v2787 = vrot.slane %v2781, 5
        %v2788 = vsel %vm2593, %v2786, %v2787
        %v2789 = vrot.slane %v2782, 5
        %v2790 = vsel %vm2593, %v2787, %v2789
        %2791 = vrot.lane.b32.xlu0 %v2788, 123
        %v2792 = vpop.permute.xlu0 %2791
        %2793 = vrot.lane.b32.xlu0 %v2790, 123
        %v2794 = vpop.permute.xlu0 %2793
        %v2797 = vadd.f32 %v2777, %v2792
        %v2798 = vadd.f32 %v2778, %v2794
        %v2799 = vstv %s309
        %v2800 = vmul.f32 %v2799, %v1326
        %v2801 = vmul.f32 %v2799, %v1327
        %v2802 = vmul.f32 %v2799, %v1328
        %v2806 = vrot.slane %v2800, 5
        %v2807 = vrot.slane %v2801, 5
        %v2808 = vsel %vm2593, %v2806, %v2807
        %v2809 = vrot.slane %v2802, 5
        %v2810 = vsel %vm2593, %v2807, %v2809
        %2811 = vrot.lane.b32.xlu0 %v2808, 123
        %v2812 = vpop.permute.xlu0 %2811
        %2813 = vrot.lane.b32.xlu0 %v2810, 123
        %v2814 = vpop.permute.xlu0 %2813
        %v2817 = vadd.f32 %v2797, %v2812
        %v2818 = vadd.f32 %v2798, %v2814
        %v2819 = vstv %s261
        %v2820 = vmul.f32 %v2819, %v1323
        %v2821 = vmul.f32 %v2819, %v1324
        %v2822 = vmul.f32 %v2819, %v1325
        %v2826 = vrot.slane %v2820, 5
        %v2827 = vrot.slane %v2821, 5
        %v2828 = vsel %vm2593, %v2826, %v2827
        %v2829 = vrot.slane %v2822, 5
        %v2830 = vsel %vm2593, %v2827, %v2829
        %2831 = vrot.lane.b32.xlu0 %v2828, 122
        %v2832 = vpop.permute.xlu0 %2831
        %2833 = vrot.lane.b32.xlu0 %v2830, 122
        %v2834 = vpop.permute.xlu0 %2833
        %v2837 = vadd.f32 %v2817, %v2832
        %v2838 = vadd.f32 %v2818, %v2834
        %v2839 = vstv %s310
        %v2840 = vmul.f32 %v2839, %v1326
        %v2841 = vmul.f32 %v2839, %v1327
        %v2842 = vmul.f32 %v2839, %v1328
        %v2846 = vrot.slane %v2840, 5
        %v2847 = vrot.slane %v2841, 5
        %v2848 = vsel %vm2593, %v2846, %v2847
        %v2849 = vrot.slane %v2842, 5
        %v2850 = vsel %vm2593, %v2847, %v2849
        %2851 = vrot.lane.b32.xlu0 %v2848, 122
        %v2852 = vpop.permute.xlu0 %2851
        %2853 = vrot.lane.b32.xlu0 %v2850, 122
        %v2854 = vpop.permute.xlu0 %2853
        %v2857 = vadd.f32 %v2837, %v2852
        %v2858 = vadd.f32 %v2838, %v2854
        %v2859 = vstv %s262
        %v2860 = vmul.f32 %v2859, %v1323
        %v2861 = vmul.f32 %v2859, %v1324
        %v2862 = vmul.f32 %v2859, %v1325
        %vm2866 = vcmask 1041408
        %v2867 = vrot.slane %v2860, 6
        %v2868 = vrot.slane %v2861, 6
        %v2869 = vsel %vm2866, %v2867, %v2868
        %v2870 = vrot.slane %v2862, 6
        %v2871 = vsel %vm2866, %v2868, %v2870
        %v2874 = vadd.f32 %v2857, %v2869
        %v2875 = vadd.f32 %v2858, %v2871
        %v2876 = vstv %s311
        %v2877 = vmul.f32 %v2876, %v1326
        %v2878 = vmul.f32 %v2876, %v1327
        %v2879 = vmul.f32 %v2876, %v1328
        %v2883 = vrot.slane %v2877, 6
        %v2884 = vrot.slane %v2878, 6
        %v2885 = vsel %vm2866, %v2883, %v2884
        %v2886 = vrot.slane %v2879, 6
        %v2887 = vsel %vm2866, %v2884, %v2886
        %v2890 = vadd.f32 %v2874, %v2885
        %v2891 = vadd.f32 %v2875, %v2887
        %v2892 = vstv %s263
        %v2893 = vmul.f32 %v2892, %v1323
        %v2894 = vmul.f32 %v2892, %v1324
        %v2895 = vmul.f32 %v2892, %v1325
        %v2899 = vrot.slane %v2893, 6
        %v2900 = vrot.slane %v2894, 6
        %v2901 = vsel %vm2866, %v2899, %v2900
        %v2902 = vrot.slane %v2895, 6
        %v2903 = vsel %vm2866, %v2900, %v2902
        %2904 = vrot.lane.b32.xlu0 %v2901, 127
        %v2905 = vpop.permute.xlu0 %2904
        %2906 = vrot.lane.b32.xlu0 %v2903, 127
        %v2907 = vpop.permute.xlu0 %2906
        %v2910 = vadd.f32 %v2890, %v2905
        %v2911 = vadd.f32 %v2891, %v2907
        %v2912 = vstv %s312
        %v2913 = vmul.f32 %v2912, %v1326
        %v2914 = vmul.f32 %v2912, %v1327
        %v2915 = vmul.f32 %v2912, %v1328
        %v2919 = vrot.slane %v2913, 6
        %v2920 = vrot.slane %v2914, 6
        %v2921 = vsel %vm2866, %v2919, %v2920
        %v2922 = vrot.slane %v2915, 6
        %v2923 = vsel %vm2866, %v2920, %v2922
        %2924 = vrot.lane.b32.xlu0 %v2921, 127
        %v2925 = vpop.permute.xlu0 %2924
        %2926 = vrot.lane.b32.xlu0 %v2923, 127
        %v2927 = vpop.permute.xlu0 %2926
        %v2930 = vadd.f32 %v2910, %v2925
        %v2931 = vadd.f32 %v2911, %v2927
        %v2932 = vstv %s264
        %v2933 = vmul.f32 %v2932, %v1323
        %v2934 = vmul.f32 %v2932, %v1324
        %v2935 = vmul.f32 %v2932, %v1325
        %v2939 = vrot.slane %v2933, 6
        %v2940 = vrot.slane %v2934, 6
        %v2941 = vsel %vm2866, %v2939, %v2940
        %v2942 = vrot.slane %v2935, 6
        %v2943 = vsel %vm2866, %v2940, %v2942
        %2944 = vrot.lane.b32.xlu0 %v2941, 126
        %v2945 = vpop.permute.xlu0 %2944
        %2946 = vrot.lane.b32.xlu0 %v2943, 126
        %v2947 = vpop.permute.xlu0 %2946
        %v2950 = vadd.f32 %v2930, %v2945
        %v2951 = vadd.f32 %v2931, %v2947
        %v2952 = vstv %s313
        %v2953 = vmul.f32 %v2952, %v1326
        %v2954 = vmul.f32 %v2952, %v1327
        %v2955 = vmul.f32 %v2952, %v1328
        %v2959 = vrot.slane %v2953, 6
        %v2960 = vrot.slane %v2954, 6
        %v2961 = vsel %vm2866, %v2959, %v2960
        %v2962 = vrot.slane %v2955, 6
        %v2963 = vsel %vm2866, %v2960, %v2962
        %2964 = vrot.lane.b32.xlu0 %v2961, 126
        %v2965 = vpop.permute.xlu0 %2964
        %2966 = vrot.lane.b32.xlu0 %v2963, 126
        %v2967 = vpop.permute.xlu0 %2966
        %v2970 = vadd.f32 %v2950, %v2965
        %v2971 = vadd.f32 %v2951, %v2967
        %v2972 = vstv %s265
        %v2973 = vmul.f32 %v2972, %v1323
        %v2974 = vmul.f32 %v2972, %v1324
        %v2975 = vmul.f32 %v2972, %v1325
        %v2979 = vrot.slane %v2973, 6
        %v2980 = vrot.slane %v2974, 6
        %v2981 = vsel %vm2866, %v2979, %v2980
        %v2982 = vrot.slane %v2975, 6
        %v2983 = vsel %vm2866, %v2980, %v2982
        %2984 = vrot.lane.b32.xlu0 %v2981, 125
        %v2985 = vpop.permute.xlu0 %2984
        %2986 = vrot.lane.b32.xlu0 %v2983, 125
        %v2987 = vpop.permute.xlu0 %2986
        %v2990 = vadd.f32 %v2970, %v2985
        %v2991 = vadd.f32 %v2971, %v2987
        %v2992 = vstv %s314
        %v2993 = vmul.f32 %v2992, %v1326
        %v2994 = vmul.f32 %v2992, %v1327
        %v2995 = vmul.f32 %v2992, %v1328
        %v2999 = vrot.slane %v2993, 6
        %v3000 = vrot.slane %v2994, 6
        %v3001 = vsel %vm2866, %v2999, %v3000
        %v3002 = vrot.slane %v2995, 6
        %v3003 = vsel %vm2866, %v3000, %v3002
        %3004 = vrot.lane.b32.xlu0 %v3001, 125
        %v3005 = vpop.permute.xlu0 %3004
        %3006 = vrot.lane.b32.xlu0 %v3003, 125
        %v3007 = vpop.permute.xlu0 %3006
        %v3010 = vadd.f32 %v2990, %v3005
        %v3011 = vadd.f32 %v2991, %v3007
        %v3012 = vstv %s266
        %v3013 = vmul.f32 %v3012, %v1323
        %v3014 = vmul.f32 %v3012, %v1324
        %v3015 = vmul.f32 %v3012, %v1325
        %v3019 = vrot.slane %v3013, 6
        %v3020 = vrot.slane %v3014, 6
        %v3021 = vsel %vm2866, %v3019, %v3020
        %v3022 = vrot.slane %v3015, 6
        %v3023 = vsel %vm2866, %v3020, %v3022
        %3024 = vrot.lane.b32.xlu0 %v3021, 124
        %v3025 = vpop.permute.xlu0 %3024
        %3026 = vrot.lane.b32.xlu0 %v3023, 124
        %v3027 = vpop.permute.xlu0 %3026
        %v3030 = vadd.f32 %v3010, %v3025
        %v3031 = vadd.f32 %v3011, %v3027
        %v3032 = vstv %s315
        %v3033 = vmul.f32 %v3032, %v1326
        %v3034 = vmul.f32 %v3032, %v1327
        %v3035 = vmul.f32 %v3032, %v1328
        %v3039 = vrot.slane %v3033, 6
        %v3040 = vrot.slane %v3034, 6
        %v3041 = vsel %vm2866, %v3039, %v3040
        %v3042 = vrot.slane %v3035, 6
        %v3043 = vsel %vm2866, %v3040, %v3042
        %3044 = vrot.lane.b32.xlu0 %v3041, 124
        %v3045 = vpop.permute.xlu0 %3044
        %3046 = vrot.lane.b32.xlu0 %v3043, 124
        %v3047 = vpop.permute.xlu0 %3046
        %v3050 = vadd.f32 %v3030, %v3045
        %v3051 = vadd.f32 %v3031, %v3047
        %v3052 = vstv %s267
        %v3053 = vmul.f32 %v3052, %v1323
        %v3054 = vmul.f32 %v3052, %v1324
        %v3055 = vmul.f32 %v3052, %v1325
        %v3059 = vrot.slane %v3053, 6
        %v3060 = vrot.slane %v3054, 6
        %v3061 = vsel %vm2866, %v3059, %v3060
        %v3062 = vrot.slane %v3055, 6
        %v3063 = vsel %vm2866, %v3060, %v3062
        %3064 = vrot.lane.b32.xlu0 %v3061, 123
        %v3065 = vpop.permute.xlu0 %3064
        %3066 = vrot.lane.b32.xlu0 %v3063, 123
        %v3067 = vpop.permute.xlu0 %3066
        %v3070 = vadd.f32 %v3050, %v3065
        %v3071 = vadd.f32 %v3051, %v3067
        %v3072 = vstv %s316
        %v3073 = vmul.f32 %v3072, %v1326
        %v3074 = vmul.f32 %v3072, %v1327
        %v3075 = vmul.f32 %v3072, %v1328
        %v3079 = vrot.slane %v3073, 6
        %v3080 = vrot.slane %v3074, 6
        %v3081 = vsel %vm2866, %v3079, %v3080
        %v3082 = vrot.slane %v3075, 6
        %v3083 = vsel %vm2866, %v3080, %v3082
        %3084 = vrot.lane.b32.xlu0 %v3081, 123
        %v3085 = vpop.permute.xlu0 %3084
        %3086 = vrot.lane.b32.xlu0 %v3083, 123
        %v3087 = vpop.permute.xlu0 %3086
        %v3090 = vadd.f32 %v3070, %v3085
        %v3091 = vadd.f32 %v3071, %v3087
        %v3092 = vstv %s268
        %v3093 = vmul.f32 %v3092, %v1323
        %v3094 = vmul.f32 %v3092, %v1324
        %v3095 = vmul.f32 %v3092, %v1325
        %v3099 = vrot.slane %v3093, 6
        %v3100 = vrot.slane %v3094, 6
        %v3101 = vsel %vm2866, %v3099, %v3100
        %v3102 = vrot.slane %v3095, 6
        %v3103 = vsel %vm2866, %v3100, %v3102
        %3104 = vrot.lane.b32.xlu0 %v3101, 122
        %v3105 = vpop.permute.xlu0 %3104
        %3106 = vrot.lane.b32.xlu0 %v3103, 122
        %v3107 = vpop.permute.xlu0 %3106
        %v3110 = vadd.f32 %v3090, %v3105
        %v3111 = vadd.f32 %v3091, %v3107
        %v3112 = vstv %s317
        %v3113 = vmul.f32 %v3112, %v1326
        %v3114 = vmul.f32 %v3112, %v1327
        %v3115 = vmul.f32 %v3112, %v1328
        %v3119 = vrot.slane %v3113, 6
        %v3120 = vrot.slane %v3114, 6
        %v3121 = vsel %vm2866, %v3119, %v3120
        %v3122 = vrot.slane %v3115, 6
        %v3123 = vsel %vm2866, %v3120, %v3122
        %3124 = vrot.lane.b32.xlu0 %v3121, 122
        %v3125 = vpop.permute.xlu0 %3124
        %3126 = vrot.lane.b32.xlu0 %v3123, 122
        %v3127 = vpop.permute.xlu0 %3126
        %v3130 = vadd.f32 %v3110, %v3125
        %v3131 = vadd.f32 %v3111, %v3127
        %v3132 = vxor.u32 %v3130, 2147483648
        %v3133 = vxor.u32 %v3131, 2147483648
        %v3134 = vmul.f32 %v3132, 1.442695
        %v3135 = vpow.pop %v3134
        %v3136 = vmul.f32 %v3133, 1.442695
        %v3137 = vpow.pop %v3136
        %v3138 = vadd.f32 %v3135, 1.0
        %v3139 = vadd.f32 %v3137, 1.0
        %v3140 = vrcp.pop %v3138
        %v3141 = vmul.f32 1.0, %v3140
        %v3142 = vrcp.pop %v3139
        %v3143 = vmul.f32 1.0, %v3142
        %v3144 = vlaneseq
        %v3145 = vshrl.u32 %v3144, 7
        %v3146 = vsub.s32 0, %v3145
        %v3147 = vrot.slane %v3141, %v3146
        %3149 = vbcast.lane.b32.xlu0 %v3147, 256
        %v3150 = vpop.permute.xlu0 %3149
        %s3152 = sor.u32 256, 8
        %3153 = vbcast.lane.b32.xlu0 %v3147, %s3152
        %v3154 = vpop.permute.xlu0 %3153
        %v3155 = vlaneseq
        %v3156 = vshrl.u32 %v3155, 7
        %v3157 = vsub.s32 1, %v3156
        %v3158 = vrot.slane %v3141, %v3157
        %3160 = vbcast.lane.b32.xlu0 %v3158, 256
        %v3161 = vpop.permute.xlu0 %3160
        %s3163 = sor.u32 256, 8
        %3164 = vbcast.lane.b32.xlu0 %v3158, %s3163
        %v3165 = vpop.permute.xlu0 %3164
        %v3166 = vlaneseq
        %v3167 = vshrl.u32 %v3166, 7
        %v3168 = vsub.s32 2, %v3167
        %v3169 = vrot.slane %v3141, %v3168
        %3171 = vbcast.lane.b32.xlu0 %v3169, 256
        %v3172 = vpop.permute.xlu0 %3171
        %s3174 = sor.u32 256, 8
        %3175 = vbcast.lane.b32.xlu0 %v3169, %s3174
        %v3176 = vpop.permute.xlu0 %3175
        %v3177 = vlaneseq
        %v3178 = vshrl.u32 %v3177, 7
        %v3179 = vsub.s32 3, %v3178
        %v3180 = vrot.slane %v3141, %v3179
        %3182 = vbcast.lane.b32.xlu0 %v3180, 256
        %v3183 = vpop.permute.xlu0 %3182
        %s3185 = sor.u32 256, 8
        %3186 = vbcast.lane.b32.xlu0 %v3180, %s3185
        %v3187 = vpop.permute.xlu0 %3186
        %v3188 = vlaneseq
        %v3189 = vshrl.u32 %v3188, 7
        %v3190 = vsub.s32 4, %v3189
        %v3191 = vrot.slane %v3141, %v3190
        %3193 = vbcast.lane.b32.xlu0 %v3191, 256
        %v3194 = vpop.permute.xlu0 %3193
        %s3196 = sor.u32 256, 8
        %3197 = vbcast.lane.b32.xlu0 %v3191, %s3196
        %v3198 = vpop.permute.xlu0 %3197
        %v3199 = vlaneseq
        %v3200 = vshrl.u32 %v3199, 7
        %v3201 = vsub.s32 5, %v3200
        %v3202 = vrot.slane %v3141, %v3201
        %3204 = vbcast.lane.b32.xlu0 %v3202, 256
        %v3205 = vpop.permute.xlu0 %3204
        %s3207 = sor.u32 256, 8
        %3208 = vbcast.lane.b32.xlu0 %v3202, %s3207
        %v3209 = vpop.permute.xlu0 %3208
        %v3210 = vlaneseq
        %v3211 = vshrl.u32 %v3210, 7
        %v3212 = vsub.s32 6, %v3211
        %v3213 = vrot.slane %v3141, %v3212
        %3215 = vbcast.lane.b32.xlu0 %v3213, 256
        %v3216 = vpop.permute.xlu0 %3215
        %s3218 = sor.u32 256, 8
        %3219 = vbcast.lane.b32.xlu0 %v3213, %s3218
        %v3220 = vpop.permute.xlu0 %3219
        %v3221 = vlaneseq
        %v3222 = vshrl.u32 %v3221, 7
        %v3223 = vsub.s32 7, %v3222
        %v3224 = vrot.slane %v3141, %v3223
        %3226 = vbcast.lane.b32.xlu0 %v3224, 256
        %v3227 = vpop.permute.xlu0 %3226
        %s3229 = sor.u32 256, 8
        %3230 = vbcast.lane.b32.xlu0 %v3224, %s3229
        %v3231 = vpop.permute.xlu0 %3230
        %v3232 = vlaneseq
        %v3233 = vshrl.u32 %v3232, 7
        %v3234 = vsub.s32 0, %v3233
        %v3235 = vrot.slane %v3143, %v3234
        %3237 = vbcast.lane.b32.xlu0 %v3235, 256
        %v3238 = vpop.permute.xlu0 %3237
        %s3240 = sor.u32 256, 8
        %3241 = vbcast.lane.b32.xlu0 %v3235, %s3240
        %v3242 = vpop.permute.xlu0 %3241
        %v3243 = vlaneseq
        %v3244 = vshrl.u32 %v3243, 7
        %v3245 = vsub.s32 1, %v3244
        %v3246 = vrot.slane %v3143, %v3245
        %3248 = vbcast.lane.b32.xlu0 %v3246, 256
        %v3249 = vpop.permute.xlu0 %3248
        %s3251 = sor.u32 256, 8
        %3252 = vbcast.lane.b32.xlu0 %v3246, %s3251
        %v3253 = vpop.permute.xlu0 %3252
        %v3254 = vlaneseq
        %v3255 = vshrl.u32 %v3254, 7
        %v3256 = vsub.s32 2, %v3255
        %v3257 = vrot.slane %v3143, %v3256
        %3259 = vbcast.lane.b32.xlu0 %v3257, 256
        %v3260 = vpop.permute.xlu0 %3259
        %s3262 = sor.u32 256, 8
        %3263 = vbcast.lane.b32.xlu0 %v3257, %s3262
        %v3264 = vpop.permute.xlu0 %3263
        %v3265 = vlaneseq
        %v3266 = vshrl.u32 %v3265, 7
        %v3267 = vsub.s32 3, %v3266
        %v3268 = vrot.slane %v3143, %v3267
        %3270 = vbcast.lane.b32.xlu0 %v3268, 256
        %v3271 = vpop.permute.xlu0 %3270
        %s3273 = sor.u32 256, 8
        %3274 = vbcast.lane.b32.xlu0 %v3268, %s3273
        %v3275 = vpop.permute.xlu0 %3274
        %v3276 = vlaneseq
        %v3277 = vshrl.u32 %v3276, 7
        %v3278 = vsub.s32 4, %v3277
        %v3279 = vrot.slane %v3143, %v3278
        %3281 = vbcast.lane.b32.xlu0 %v3279, 256
        %v3282 = vpop.permute.xlu0 %3281
        %s3284 = sor.u32 256, 8
        %3285 = vbcast.lane.b32.xlu0 %v3279, %s3284
        %v3286 = vpop.permute.xlu0 %3285
        %v3287 = vlaneseq
        %v3288 = vshrl.u32 %v3287, 7
        %v3289 = vsub.s32 5, %v3288
        %v3290 = vrot.slane %v3143, %v3289
        %3292 = vbcast.lane.b32.xlu0 %v3290, 256
        %v3293 = vpop.permute.xlu0 %3292
        %s3295 = sor.u32 256, 8
        %3296 = vbcast.lane.b32.xlu0 %v3290, %s3295
        %v3297 = vpop.permute.xlu0 %3296
        %v3298 = vlaneseq
        %v3299 = vshrl.u32 %v3298, 7
        %v3300 = vsub.s32 6, %v3299
        %v3301 = vrot.slane %v3143, %v3300
        %3303 = vbcast.lane.b32.xlu0 %v3301, 256
        %v3304 = vpop.permute.xlu0 %3303
        %s3306 = sor.u32 256, 8
        %3307 = vbcast.lane.b32.xlu0 %v3301, %s3306
        %v3308 = vpop.permute.xlu0 %3307
        %v3309 = vlaneseq
        %v3310 = vshrl.u32 %v3309, 7
        %v3311 = vsub.s32 7, %v3310
        %v3312 = vrot.slane %v3143, %v3311
        %3314 = vbcast.lane.b32.xlu0 %v3312, 256
        %v3315 = vpop.permute.xlu0 %3314
        %s3317 = sor.u32 256, 8
        %3318 = vbcast.lane.b32.xlu0 %v3312, %s3317
        %v3319 = vpop.permute.xlu0 %3318
        %v3320 = vmul.f32 %v666, %v3150
        %v3321 = vmul.f32 %v667, %v3154
        %v3322 = vmul.f32 %v668, %v3161
        %v3323 = vmul.f32 %v669, %v3165
        %v3324 = vmul.f32 %v670, %v3172
        %v3325 = vmul.f32 %v671, %v3176
        %v3326 = vmul.f32 %v672, %v3183
        %v3327 = vmul.f32 %v673, %v3187
        %v3328 = vmul.f32 %v674, %v3194
        %v3329 = vmul.f32 %v675, %v3198
        %v3330 = vmul.f32 %v676, %v3205
        %v3331 = vmul.f32 %v677, %v3209
        %v3332 = vmul.f32 %v678, %v3216
        %v3333 = vmul.f32 %v679, %v3220
        %v3334 = vmul.f32 %v680, %v3227
        %v3335 = vmul.f32 %v681, %v3231
        %v3336 = vmul.f32 %v682, %v3238
        %v3337 = vmul.f32 %v683, %v3242
        %v3338 = vmul.f32 %v684, %v3249
        %v3339 = vmul.f32 %v685, %v3253
        %v3340 = vmul.f32 %v686, %v3260
        %v3341 = vmul.f32 %v687, %v3264
        %v3342 = vmul.f32 %v688, %v3271
        %v3343 = vmul.f32 %v689, %v3275
        %v3344 = vmul.f32 %v690, %v3282
        %v3345 = vmul.f32 %v691, %v3286
        %v3346 = vmul.f32 %v692, %v3293
        %v3347 = vmul.f32 %v693, %v3297
        %v3348 = vmul.f32 %v694, %v3304
        %v3349 = vmul.f32 %v695, %v3308
        %v3350 = vmul.f32 %v696, %v3315
        %v3351 = vmul.f32 %v697, %v3319
        %3352 = vst.msk [vmem:[%s211] sm:$0xff] %vm352, %v3320
        %3353 = vst.msk [vmem:[%s211 + $0x8] sm:$0xff] %vm352, %v3321
        %3354 = vst.msk [vmem:[%s211 + $0x10] sm:$0xff] %vm352, %v3322
        %3355 = vst.msk [vmem:[%s211 + $0x18] sm:$0xff] %vm352, %v3323
        %3356 = vst.msk [vmem:[%s211 + $0x20] sm:$0xff] %vm352, %v3324
        %3357 = vst.msk [vmem:[%s211 + $0x28] sm:$0xff] %vm352, %v3325
        %3358 = vst.msk [vmem:[%s211 + $0x30] sm:$0xff] %vm352, %v3326
        %3359 = vst.msk [vmem:[%s211 + $0x38] sm:$0xff] %vm352, %v3327
        %3360 = vst.msk [vmem:[%s211 + $0x40] sm:$0xff] %vm352, %v3328
        %3361 = vst.msk [vmem:[%s211 + $0x48] sm:$0xff] %vm352, %v3329
        %3362 = vst.msk [vmem:[%s211 + $0x50] sm:$0xff] %vm352, %v3330
        %3363 = vst.msk [vmem:[%s211 + $0x58] sm:$0xff] %vm352, %v3331
        %3364 = vst.msk [vmem:[%s211 + $0x60] sm:$0xff] %vm352, %v3332
        %3365 = vst.msk [vmem:[%s211 + $0x68] sm:$0xff] %vm352, %v3333
        %3366 = vst.msk [vmem:[%s211 + $0x70] sm:$0xff] %vm352, %v3334
        %3367 = vst.msk [vmem:[%s211 + $0x78] sm:$0xff] %vm352, %v3335
        %3368 = vst.msk [vmem:[%s211 + $0x80] sm:$0xff] %vm352, %v3336
        %3369 = vst.msk [vmem:[%s211 + $0x88] sm:$0xff] %vm352, %v3337
        %3370 = vst.msk [vmem:[%s211 + $0x90] sm:$0xff] %vm352, %v3338
        %3371 = vst.msk [vmem:[%s211 + $0x98] sm:$0xff] %vm352, %v3339
        %3372 = vst.msk [vmem:[%s211 + $0xa0] sm:$0xff] %vm352, %v3340
        %3373 = vst.msk [vmem:[%s211 + $0xa8] sm:$0xff] %vm352, %v3341
        %3374 = vst.msk [vmem:[%s211 + $0xb0] sm:$0xff] %vm352, %v3342
        %3375 = vst.msk [vmem:[%s211 + $0xb8] sm:$0xff] %vm352, %v3343
        %3376 = vst.msk [vmem:[%s211 + $0xc0] sm:$0xff] %vm352, %v3344
        %3377 = vst.msk [vmem:[%s211 + $0xc8] sm:$0xff] %vm352, %v3345
        %3378 = vst.msk [vmem:[%s211 + $0xd0] sm:$0xff] %vm352, %v3346
        %3379 = vst.msk [vmem:[%s211 + $0xd8] sm:$0xff] %vm352, %v3347
        %3380 = vst.msk [vmem:[%s211 + $0xe0] sm:$0xff] %vm352, %v3348
        %3381 = vst.msk [vmem:[%s211 + $0xe8] sm:$0xff] %vm352, %v3349
        %3382 = vst.msk [vmem:[%s211 + $0xf0] sm:$0xff] %vm352, %v3350
        %3383 = vst.msk [vmem:[%s211 + $0xf8] sm:$0xff] %vm352, %v3351
        %p3384 = scmp.lt.s32.totalorder %s16, 1
        %s3385 = scalar_select %p3384, %s16, 1
        %s3386 = smul.addr %s3385, 32
        %s3387 = smul.addr %s3386, 8
        %s3388 = scalar_lea.vmem %s4, %s3387
        // Predicated region
        $region41: #{tpu_custom_call.1} parent=35 // pred_check
          %p3389 = pneg %p123
        $region42: #{tpu_custom_call.1} parent=35 // pred_check_branch
          %3391 = sbr.rel (%p3389) target = $region44
        $region43: #{tpu_custom_call.1} parent=35 // pred_region
          _
        $region44: #{tpu_custom_call.1} parent=35 // pred_fallthru
          _
      $region36: #{tpu_custom_call.1} parent=5 // pred_fallthru
        _
      %p3392 = scmp.le.s32.totalorder 2, %s11
      // Predicated region
      $region45: #{tpu_custom_call.1} parent=5 // pred_check
        %p3393 = pneg %p3392
      $region46: #{tpu_custom_call.1} parent=5 // pred_check_branch
        %3395 = sbr.rel (%p3393) target = $region48
      $region47: #{tpu_custom_call.1} parent=5 // pred_region
        %s3396 = ssub.s32 %s11, 2
        // Predicated region
        $region49: #{tpu_custom_call.1} parent=47 // pred_check
          %p3397 = pneg %p129
        $region50: #{tpu_custom_call.1} parent=47 // pred_check_branch
          %3399 = sbr.rel (%p3397) target = $region52
        $region51: #{tpu_custom_call.1} parent=47 // pred_region
          %p3400 = scmp.lt.s32.totalorder %s17, 1
          %s3401 = scalar_select %p3400, %s17, 1
          %s3402 = smul.addr %s3401, 32
          %s3403 = smul.addr %s3402, 8
          %s3404 = scalar_lea.vmem %s4, %s3403
        $region52: #{tpu_custom_call.1} parent=47 // pred_fallthru
          _
      $region48: #{tpu_custom_call.1} parent=5 // pred_fallthru
        _
    $region6: #{tpu_custom_call.1} parent=1 // loop_footer
      %s15 = sadd.s32 1, %s11
    $region7: #{tpu_custom_call.1} parent=1 // loop_footer_branch
      %10 = sbr.rel target = $region3
    $region8: #{tpu_custom_call.1} parent=1 // loop_exit
      _
    %3405 = vsyncpa [#allocation5], 1
    %s3406 = scalar_lea.sflag [#allocation5], 1
    %3407 = vsyncpa %s3406, 1

</llo_original>
